<compile_context>
chip_gen: v5e
topology: v5e:2x2
jax: 0.10.0
libtpu: 0.0.40
codegen_flags: <defaults>
</compile_context>

<pallas_src>
import functools

import jax
import jax.numpy as jnp
from jax.experimental import pallas as pl
from jax.experimental.pallas import tpu as pltpu


# ----------------------------------------------------------------------------
# Fused kernel: channel mean/max -> pad(3) -> 7x7 conv (2->1) -> sigmoid
# ----------------------------------------------------------------------------
def _sa_kernel(wb_ref, x_ref, o_ref, sum_ref, max_ref, pad_ref,
               *, C, CC, H, W):
    """
    wb_ref : SMEM f32[99]        conv weight (1,2,7,7) flattened (avg half
                                 pre-scaled by 1/C) + bias at [98]
    x_ref  : VMEM [CC,H,W]       one channel chunk of one sample (native dtype)
    o_ref  : VMEM f32[H,W]       spatial-attention gate for this sample
    sum_ref: VMEM f32[H,W]       aligned running channel sum
    max_ref: VMEM f32[H,W]       aligned running channel max
    pad_ref: VMEM f32[2,H+6,W+6] finalize-only zero-padded {sum, max}
    """
    c_idx = pl.program_id(1)
    n_chunks = pl.num_programs(1)

    # ---- init aligned accumulators ------------------------------------------
    @pl.when(c_idx == 0)
    def _():
        sum_ref[...] = jnp.zeros_like(sum_ref)
        max_ref[...] = jnp.full_like(max_ref, -jnp.inf)

    # ---- accumulate channel sum / running max (pure aligned VPU work) -------
    def _accum(v):
        vf = v.astype(jnp.float32)
        sum_ref[...] = sum_ref[...] + jnp.sum(vf, axis=0)
        max_ref[...] = jnp.maximum(max_ref[...], jnp.max(vf, axis=0))

    x = x_ref[...]                                    # (CC, H, W), native dtype
    rem = C % CC                                      # static tail size
    if rem == 0:
        _accum(x)
    else:
        @pl.when(c_idx != n_chunks - 1)
        def _():
            _accum(x)

        @pl.when(c_idx == n_chunks - 1)               # tail chunk: static slice
        def _():
            _accum(x[:rem])

    # ---- finalize: copy into padded halo buffer, 7x7 VPU conv, sigmoid ------
    @pl.when(c_idx == n_chunks - 1)
    def _():
        pad_ref[...] = jnp.zeros_like(pad_ref)        # zero halo (PyTorch pad)
        pad_ref[0, 3:3 + H, 3:3 + W] = sum_ref[...]   # mean folded into weights
        pad_ref[1, 3:3 + H, 3:3 + W] = max_ref[...]

        # Row-striped conv so acc + the shifted slab stay in the vreg file.
        RS = min(H, 32)
        for r0 in range(0, H, RS):
            rs = min(RS, H - r0)
            acc = jnp.full((rs, W), wb_ref[98], jnp.float32)     # bias
            for c in range(2):                                    # 0=avg, 1=max
                for dw in range(7):
                    # one lane shift per (c, dw): 14 total
                    col = pad_ref[c, r0:r0 + rs + 6, dw:dw + W]   # (rs+6, W)
                    for dh in range(7):
                        k = c * 49 + dh * 7 + dw                  # OIHW flatten
                        acc = acc + wb_ref[k] * col[dh:dh + rs, :]
            o_ref[r0:r0 + rs, :] = jax.nn.sigmoid(acc).astype(o_ref.dtype)


# ----------------------------------------------------------------------------
# Wrapper
# ----------------------------------------------------------------------------
def spatial_attention(x, w, b, *, c_chunk=None):
    """SpatialAttentionModule.forward.

    x: (N, C, H, W) NCHW (f32 or bf16), w: (1, 2, 7, 7) PyTorch OIHW, b: (1,).
    Returns the sigmoid gate (N, 1, H, W), float32.
    """
    N, C, H, W = x.shape
    itemsize = x.dtype.itemsize
    plane_bytes = H * W * itemsize

    # VMEM-budgeted channel chunk: aim for a ~4 MiB x block per grid step so
    # DMAs are deep enough to approach the HBM roofline on every generation,
    # while 2x (double buffer) stays far under v7x's 64 MiB physical VMEM.
    if c_chunk is None:
        target_block_bytes = 4 * 1024 * 1024
        c_chunk = max(1, target_block_bytes // max(plane_bytes, 1))
    c_chunk = int(min(c_chunk, C))
    n_chunks = pl.cdiv(C, c_chunk)

    # Conv weights as a flat SMEM scalar table; fold the 1/C mean scaling into
    # the avg-channel weights so finalize never rescales the accumulator.
    w32 = jnp.asarray(w, jnp.float32)
    w32 = w32.at[:, 0, :, :].multiply(jnp.float32(1.0 / C))
    wb = jnp.concatenate(
        [w32.reshape(-1), jnp.asarray(b, jnp.float32).reshape(-1)])

    # Explicit scoped-VMEM budget (above the 16/32 MiB defaults, <= 64 MiB).
    x_block_bytes = c_chunk * plane_bytes
    scratch_bytes = (2 * (H + 6) * (W + 6) + 2 * H * W) * 4
    out_block_bytes = H * W * 4
    needed = 2 * (x_block_bytes + out_block_bytes) + scratch_bytes
    vmem_limit = int(min(64 * 1024 * 1024,
                         max(32 * 1024 * 1024, 2 * needed)))

    grid_spec = pltpu.PrefetchScalarGridSpec(
        num_scalar_prefetch=0,
        grid=(N, n_chunks),
        in_specs=[
            pl.BlockSpec(memory_space=pltpu.MemorySpace.SMEM),           # wb
            pl.BlockSpec((None, c_chunk, H, W), lambda n, c: (n, c, 0, 0)),
        ],
        out_specs=pl.BlockSpec((None, None, H, W), lambda n, c: (n, 0, 0, 0)),
        scratch_shapes=[
            pltpu.VMEM((H, W), jnp.float32),           # running channel sum
            pltpu.VMEM((H, W), jnp.float32),           # running channel max
            pltpu.VMEM((2, H + 6, W + 6), jnp.float32),  # padded conv input
        ],
    )

    # NOTE: for N == 1 on v7x the second TensorCore idles; a spatial row-stripe
    # parallel axis (with a 3-row halo) would recover it if that case matters.
    return pl.pallas_call(
        functools.partial(_sa_kernel, C=C, CC=c_chunk, H=H, W=W),
        out_shape=jax.ShapeDtypeStruct((N, 1, H, W), jnp.float32),
        grid_spec=grid_spec,
        compiler_params=pltpu.CompilerParams(
            dimension_semantics=("parallel", "arbitrary"),
            vmem_limit_bytes=vmem_limit),
    )(wb, x)


# ----------------------------------------------------------------------------
# Pure-JAX reference (for correctness check only)
# ----------------------------------------------------------------------------
def _reference(x, w, b):
    avg = jnp.mean(x, axis=1, keepdims=True)
    mx = jnp.max(x, axis=1, keepdims=True)
    cat = jnp.concatenate([avg, mx], axis=1)                  # (N, 2, H, W)
    out = jax.lax.conv_general_dilated(
        cat, w, window_strides=(1, 1), padding=((3, 3), (3, 3)),
        dimension_numbers=("NCHW", "OIHW", "NCHW"))
    return jax.nn.sigmoid(out + b.reshape(1, 1, 1, 1))


# ----------------------------------------------------------------------------
if __name__ == "__main__":
    # Small shapes; W=128 keeps output stores lane-dense (kernel is correct for
    # any H, W).  c_chunk=6 with C=16 exercises the cdiv grid + tail chunk.
    N, C, H, W = 2, 16, 16, 128

    key = jax.random.PRNGKey(0)
    kx, kw, kb = jax.random.split(key, 3)
    x = jax.random.normal(kx, (N, C, H, W), dtype=jnp.float32)
    bound = (2 * 7 * 7) ** -0.5                     # PyTorch Conv2d default init
    w = jax.random.uniform(kw, (1, 2, 7, 7), jnp.float32, -bound, bound)
    b = jax.random.uniform(kb, (1,), jnp.float32, -bound, bound)

    ref = _reference(x, w, b)

    # 1) default VMEM-budgeted chunk (single chunk at this shape)
    out = jax.block_until_ready(jax.jit(spatial_attention)(x, w, b))
    assert out.shape == (N, 1, H, W), out.shape
    assert bool(jnp.all(jnp.isfinite(out)))
    err = float(jnp.max(jnp.abs(out - ref)))
    assert err < 1e-4, f"default-chunk max abs error vs reference: {err}"

    # 2) chunked reduction with a tail chunk (16 channels = 6 + 6 + 4)
    out2 = jax.block_until_ready(
        jax.jit(functools.partial(spatial_attention, c_chunk=6))(x, w, b))
    err2 = float(jnp.max(jnp.abs(out2 - ref)))
    assert err2 < 1e-4, f"tail-chunk max abs error vs reference: {err2}"

    # 3) bf16 input path: no wrapper upcast, kernel casts per chunk
    x_bf = x.astype(jnp.bfloat16)
    out3 = jax.block_until_ready(
        jax.jit(functools.partial(spatial_attention, c_chunk=6))(x_bf, w, b))
    ref3 = _reference(x_bf.astype(jnp.float32), w, b)
    err3 = float(jnp.max(jnp.abs(out3 - ref3)))
    assert err3 < 1e-4, f"bf16 max abs error vs reference: {err3}"

    print("KERNEL_OK")
</pallas_src>

<mosaic_0001>
module attributes {stable_mosaic.version = 11 : i64} {
  func.func @_sa_kernel(%arg0: i32, %arg1: i32, %arg2: memref<99xf32, #tpu.memory_space<smem>>, %arg3: memref<1x16x16x128xf32, #tpu.memory_space<vmem>>, %arg4: memref<1x1x16x128xf32, #tpu.memory_space<vmem>>, %arg5: memref<16x128xf32, #tpu.memory_space<vmem>>, %arg6: memref<16x128xf32, #tpu.memory_space<vmem>>, %arg7: memref<2x22x134xf32, #tpu.memory_space<vmem>>) attributes {dimension_semantics = [#tpu.dimension_semantics<parallel>, #tpu.dimension_semantics<arbitrary>], iteration_bounds = array<i64: 2, 1>, scalar_prefetch = 0 : i64, scratch_operands = 3 : i64, tpu.core_type = #tpu.core_type<tc>, window_params = [{transform_indices = @transform_0, window_bounds = array<i64: 99>}, {transform_indices = @transform_1, window_bounds = array<i64: 1, 16, 16, 128>}, {transform_indices = @transform_2, window_bounds = array<i64: 1, 1, 16, 128>}]} {
    %c0_i32 = arith.constant 0 : i32
    %0 = arith.cmpi eq, %arg1, %c0_i32 : i32
    %1 = arith.extui %0 : i1 to i32
    %c0_i32_0 = arith.constant 0 : i32
    %2 = arith.cmpi ne, %1, %c0_i32_0 : i32
    scf.if %2 {
      %cst_15 = arith.constant 0.000000e+00 : f32
      %16 = vector.broadcast %cst_15 : f32 to vector<16x128xf32>
      %c0_16 = arith.constant 0 : index
      %c0_17 = arith.constant 0 : index
      %17 = vector.load %arg5[%c0_16, %c0_17] : memref<16x128xf32, #tpu.memory_space<vmem>>, vector<16x128xf32>
      tpu.vector_store %arg5[%c0_16, %c0_17], %16 {strides = array<i32>} : memref<16x128xf32, #tpu.memory_space<vmem>>, vector<16x128xf32>,
      %cst_18 = arith.constant 0xFF800000 : f32
      %18 = vector.broadcast %cst_18 : f32 to vector<16x128xf32>
      %c0_19 = arith.constant 0 : index
      %c0_20 = arith.constant 0 : index
      %19 = vector.load %arg6[%c0_19, %c0_20] : memref<16x128xf32, #tpu.memory_space<vmem>>, vector<16x128xf32>
      tpu.vector_store %arg6[%c0_19, %c0_20], %18 {strides = array<i32>} : memref<16x128xf32, #tpu.memory_space<vmem>>, vector<16x128xf32>,
    } else {
    }
    %c0 = arith.constant 0 : index
    %c0_1 = arith.constant 0 : index
    %c0_2 = arith.constant 0 : index
    %c0_3 = arith.constant 0 : index
    %3 = vector.load %arg3[%c0, %c0_1, %c0_2, %c0_3] : memref<1x16x16x128xf32, #tpu.memory_space<vmem>>, vector<1x16x16x128xf32>
    %4 = vector.shape_cast %3 : vector<1x16x16x128xf32> to vector<16x16x128xf32>
    %c0_4 = arith.constant 0 : index
    %c0_5 = arith.constant 0 : index
    %5 = vector.load %arg5[%c0_4, %c0_5] : memref<16x128xf32, #tpu.memory_space<vmem>>, vector<16x128xf32>
    %cst = arith.constant dense<0.000000e+00> : vector<16x128xf32>
    %6 = vector.multi_reduction <add>, %4, %cst [0] : vector<16x16x128xf32> to vector<16x128xf32>
    %7 = arith.addf %5, %6 : vector<16x128xf32>
    %c0_6 = arith.constant 0 : index
    %c0_7 = arith.constant 0 : index
    %8 = vector.load %arg5[%c0_6, %c0_7] : memref<16x128xf32, #tpu.memory_space<vmem>>, vector<16x128xf32>
    tpu.vector_store %arg5[%c0_6, %c0_7], %7 {strides = array<i32>} : memref<16x128xf32, #tpu.memory_space<vmem>>, vector<16x128xf32>,
    %c0_8 = arith.constant 0 : index
    %c0_9 = arith.constant 0 : index
    %9 = vector.load %arg6[%c0_8, %c0_9] : memref<16x128xf32, #tpu.memory_space<vmem>>, vector<16x128xf32>
    %cst_10 = arith.constant dense<0xFF800000> : vector<16x128xf32>
    %10 = vector.multi_reduction <maximumf>, %4, %cst_10 [0] : vector<16x16x128xf32> to vector<16x128xf32>
    %11 = arith.maximumf %9, %10 : vector<16x128xf32>
    %c0_11 = arith.constant 0 : index
    %c0_12 = arith.constant 0 : index
    %12 = vector.load %arg6[%c0_11, %c0_12] : memref<16x128xf32, #tpu.memory_space<vmem>>, vector<16x128xf32>
    tpu.vector_store %arg6[%c0_11, %c0_12], %11 {strides = array<i32>} : memref<16x128xf32, #tpu.memory_space<vmem>>, vector<16x128xf32>,
    %c0_i32_13 = arith.constant 0 : i32
    %13 = arith.cmpi eq, %arg1, %c0_i32_13 : i32
    %14 = arith.extui %13 : i1 to i32
    %c0_i32_14 = arith.constant 0 : i32
    %15 = arith.cmpi ne, %14, %c0_i32_14 : i32
    scf.if %15 {
      %cst_15 = arith.constant 0.000000e+00 : f32
      %16 = vector.broadcast %cst_15 : f32 to vector<2x22x134xf32>
      %c0_16 = arith.constant 0 : index
      %c0_17 = arith.constant 0 : index
      %c0_18 = arith.constant 0 : index
      %17 = vector.load %arg7[%c0_16, %c0_17, %c0_18] : memref<2x22x134xf32, #tpu.memory_space<vmem>>, vector<2x22x134xf32>
      tpu.vector_store %arg7[%c0_16, %c0_17, %c0_18], %16 {strides = array<i32>} : memref<2x22x134xf32, #tpu.memory_space<vmem>>, vector<2x22x134xf32>,
      %c0_19 = arith.constant 0 : index
      %c0_20 = arith.constant 0 : index
      %18 = vector.load %arg5[%c0_19, %c0_20] : memref<16x128xf32, #tpu.memory_space<vmem>>, vector<16x128xf32>
      %c0_21 = arith.constant 0 : index
      %c3 = arith.constant 3 : index
      %c3_22 = arith.constant 3 : index
      %19 = vector.load %arg7[%c0_21, %c3, %c3_22] : memref<2x22x134xf32, #tpu.memory_space<vmem>>, vector<1x16x128xf32>
      %20 = vector.shape_cast %19 : vector<1x16x128xf32> to vector<16x128xf32>
      %21 = vector.shape_cast %18 : vector<16x128xf32> to vector<1x16x128xf32>
      tpu.vector_store %arg7[%c0_21, %c3, %c3_22], %21 {strides = array<i32>} : memref<2x22x134xf32, #tpu.memory_space<vmem>>, vector<1x16x128xf32>,
      %c0_23 = arith.constant 0 : index
      %c0_24 = arith.constant 0 : index
      %22 = vector.load %arg6[%c0_23, %c0_24] : memref<16x128xf32, #tpu.memory_space<vmem>>, vector<16x128xf32>
      %c1 = arith.constant 1 : index
      %c3_25 = arith.constant 3 : index
      %c3_26 = arith.constant 3 : index
      %23 = vector.load %arg7[%c1, %c3_25, %c3_26] : memref<2x22x134xf32, #tpu.memory_space<vmem>>, vector<1x16x128xf32>
      %24 = vector.shape_cast %23 : vector<1x16x128xf32> to vector<16x128xf32>
      %25 = vector.shape_cast %22 : vector<16x128xf32> to vector<1x16x128xf32>
      tpu.vector_store %arg7[%c1, %c3_25, %c3_26], %25 {strides = array<i32>} : memref<2x22x134xf32, #tpu.memory_space<vmem>>, vector<1x16x128xf32>,
      %c98 = arith.constant 98 : index
      %26 = memref.load %arg2[%c98] : memref<99xf32, #tpu.memory_space<smem>>
      %27 = vector.broadcast %26 : f32 to vector<16x128xf32>
      %c0_27 = arith.constant 0 : index
      %c0_28 = arith.constant 0 : index
      %c0_29 = arith.constant 0 : index
      %28 = vector.load %arg7[%c0_27, %c0_28, %c0_29] : memref<2x22x134xf32, #tpu.memory_space<vmem>>, vector<1x22x128xf32>
      %29 = vector.shape_cast %28 : vector<1x22x128xf32> to vector<22x128xf32>
      %c0_30 = arith.constant 0 : index
      %30 = memref.load %arg2[%c0_30] : memref<99xf32, #tpu.memory_space<smem>>
      %31 = vector.extract_strided_slice %29 {offsets = [0, 0], sizes = [16, 128], strides = [1, 1]} : vector<22x128xf32> to vector<16x128xf32>
      %32 = vector.broadcast %30 : f32 to vector<16x128xf32>
      %33 = arith.mulf %32, %31 : vector<16x128xf32>
      %34 = arith.addf %27, %33 : vector<16x128xf32>
      %c7 = arith.constant 7 : index
      %35 = memref.load %arg2[%c7] : memref<99xf32, #tpu.memory_space<smem>>
      %36 = vector.extract_strided_slice %29 {offsets = [1, 0], sizes = [16, 128], strides = [1, 1]} : vector<22x128xf32> to vector<16x128xf32>
      %37 = vector.broadcast %35 : f32 to vector<16x128xf32>
      %38 = arith.mulf %37, %36 : vector<16x128xf32>
      %39 = arith.addf %34, %38 : vector<16x128xf32>
      %c14 = arith.constant 14 : index
      %40 = memref.load %arg2[%c14] : memref<99xf32, #tpu.memory_space<smem>>
      %41 = vector.extract_strided_slice %29 {offsets = [2, 0], sizes = [16, 128], strides = [1, 1]} : vector<22x128xf32> to vector<16x128xf32>
      %42 = vector.broadcast %40 : f32 to vector<16x128xf32>
      %43 = arith.mulf %42, %41 : vector<16x128xf32>
      %44 = arith.addf %39, %43 : vector<16x128xf32>
      %c21 = arith.constant 21 : index
      %45 = memref.load %arg2[%c21] : memref<99xf32, #tpu.memory_space<smem>>
      %46 = vector.extract_strided_slice %29 {offsets = [3, 0], sizes = [16, 128], strides = [1, 1]} : vector<22x128xf32> to vector<16x128xf32>
      %47 = vector.broadcast %45 : f32 to vector<16x128xf32>
      %48 = arith.mulf %47, %46 : vector<16x128xf32>
      %49 = arith.addf %44, %48 : vector<16x128xf32>
      %c28 = arith.constant 28 : index
      %50 = memref.load %arg2[%c28] : memref<99xf32, #tpu.memory_space<smem>>
      %51 = vector.extract_strided_slice %29 {offsets = [4, 0], sizes = [16, 128], strides = [1, 1]} : vector<22x128xf32> to vector<16x128xf32>
      %52 = vector.broadcast %50 : f32 to vector<16x128xf32>
      %53 = arith.mulf %52, %51 : vector<16x128xf32>
      %54 = arith.addf %49, %53 : vector<16x128xf32>
      %c35 = arith.constant 35 : index
      %55 = memref.load %arg2[%c35] : memref<99xf32, #tpu.memory_space<smem>>
      %56 = vector.extract_strided_slice %29 {offsets = [5, 0], sizes = [16, 128], strides = [1, 1]} : vector<22x128xf32> to vector<16x128xf32>
      %57 = vector.broadcast %55 : f32 to vector<16x128xf32>
      %58 = arith.mulf %57, %56 : vector<16x128xf32>
      %59 = arith.addf %54, %58 : vector<16x128xf32>
      %c42 = arith.constant 42 : index
      %60 = memref.load %arg2[%c42] : memref<99xf32, #tpu.memory_space<smem>>
      %61 = vector.extract_strided_slice %29 {offsets = [6, 0], sizes = [16, 128], strides = [1, 1]} : vector<22x128xf32> to vector<16x128xf32>
      %62 = vector.broadcast %60 : f32 to vector<16x128xf32>
      %63 = arith.mulf %62, %61 : vector<16x128xf32>
      %64 = arith.addf %59, %63 : vector<16x128xf32>
      %c0_31 = arith.constant 0 : index
      %c0_32 = arith.constant 0 : index
      %c1_33 = arith.constant 1 : index
      %65 = vector.load %arg7[%c0_31, %c0_32, %c1_33] : memref<2x22x134xf32, #tpu.memory_space<vmem>>, vector<1x22x128xf32>
      %66 = vector.shape_cast %65 : vector<1x22x128xf32> to vector<22x128xf32>
      %c1_34 = arith.constant 1 : index
      %67 = memref.load %arg2[%c1_34] : memref<99xf32, #tpu.memory_space<smem>>
      %68 = vector.extract_strided_slice %66 {offsets = [0, 0], sizes = [16, 128], strides = [1, 1]} : vector<22x128xf32> to vector<16x128xf32>
      %69 = vector.broadcast %67 : f32 to vector<16x128xf32>
      %70 = arith.mulf %69, %68 : vector<16x128xf32>
      %71 = arith.addf %64, %70 : vector<16x128xf32>
      %c8 = arith.constant 8 : index
      %72 = memref.load %arg2[%c8] : memref<99xf32, #tpu.memory_space<smem>>
      %73 = vector.extract_strided_slice %66 {offsets = [1, 0], sizes = [16, 128], strides = [1, 1]} : vector<22x128xf32> to vector<16x128xf32>
      %74 = vector.broadcast %72 : f32 to vector<16x128xf32>
      %75 = arith.mulf %74, %73 : vector<16x128xf32>
      %76 = arith.addf %71, %75 : vector<16x128xf32>
      %c15 = arith.constant 15 : index
      %77 = memref.load %arg2[%c15] : memref<99xf32, #tpu.memory_space<smem>>
      %78 = vector.extract_strided_slice %66 {offsets = [2, 0], sizes = [16, 128], strides = [1, 1]} : vector<22x128xf32> to vector<16x128xf32>
      %79 = vector.broadcast %77 : f32 to vector<16x128xf32>
      %80 = arith.mulf %79, %78 : vector<16x128xf32>
      %81 = arith.addf %76, %80 : vector<16x128xf32>
      %c22 = arith.constant 22 : index
      %82 = memref.load %arg2[%c22] : memref<99xf32, #tpu.memory_space<smem>>
      %83 = vector.extract_strided_slice %66 {offsets = [3, 0], sizes = [16, 128], strides = [1, 1]} : vector<22x128xf32> to vector<16x128xf32>
      %84 = vector.broadcast %82 : f32 to vector<16x128xf32>
      %85 = arith.mulf %84, %83 : vector<16x128xf32>
      %86 = arith.addf %81, %85 : vector<16x128xf32>
      %c29 = arith.constant 29 : index
      %87 = memref.load %arg2[%c29] : memref<99xf32, #tpu.memory_space<smem>>
      %88 = vector.extract_strided_slice %66 {offsets = [4, 0], sizes = [16, 128], strides = [1, 1]} : vector<22x128xf32> to vector<16x128xf32>
      %89 = vector.broadcast %87 : f32 to vector<16x128xf32>
      %90 = arith.mulf %89, %88 : vector<16x128xf32>
      %91 = arith.addf %86, %90 : vector<16x128xf32>
      %c36 = arith.constant 36 : index
      %92 = memref.load %arg2[%c36] : memref<99xf32, #tpu.memory_space<smem>>
      %93 = vector.extract_strided_slice %66 {offsets = [5, 0], sizes = [16, 128], strides = [1, 1]} : vector<22x128xf32> to vector<16x128xf32>
      %94 = vector.broadcast %92 : f32 to vector<16x128xf32>
      %95 = arith.mulf %94, %93 : vector<16x128xf32>
      %96 = arith.addf %91, %95 : vector<16x128xf32>
      %c43 = arith.constant 43 : index
      %97 = memref.load %arg2[%c43] : memref<99xf32, #tpu.memory_space<smem>>
      %98 = vector.extract_strided_slice %66 {offsets = [6, 0], sizes = [16, 128], strides = [1, 1]} : vector<22x128xf32> to vector<16x128xf32>
      %99 = vector.broadcast %97 : f32 to vector<16x128xf32>
      %100 = arith.mulf %99, %98 : vector<16x128xf32>
      %101 = arith.addf %96, %100 : vector<16x128xf32>
      %c0_35 = arith.constant 0 : index
      %c0_36 = arith.constant 0 : index
      %c2 = arith.constant 2 : index
      %102 = vector.load %arg7[%c0_35, %c0_36, %c2] : memref<2x22x134xf32, #tpu.memory_space<vmem>>, vector<1x22x128xf32>
      %103 = vector.shape_cast %102 : vector<1x22x128xf32> to vector<22x128xf32>
      %c2_37 = arith.constant 2 : index
      %104 = memref.load %arg2[%c2_37] : memref<99xf32, #tpu.memory_space<smem>>
      %105 = vector.extract_strided_slice %103 {offsets = [0, 0], sizes = [16, 128], strides = [1, 1]} : vector<22x128xf32> to vector<16x128xf32>
      %106 = vector.broadcast %104 : f32 to vector<16x128xf32>
      %107 = arith.mulf %106, %105 : vector<16x128xf32>
      %108 = arith.addf %101, %107 : vector<16x128xf32>
      %c9 = arith.constant 9 : index
      %109 = memref.load %arg2[%c9] : memref<99xf32, #tpu.memory_space<smem>>
      %110 = vector.extract_strided_slice %103 {offsets = [1, 0], sizes = [16, 128], strides = [1, 1]} : vector<22x128xf32> to vector<16x128xf32>
      %111 = vector.broadcast %109 : f32 to vector<16x128xf32>
      %112 = arith.mulf %111, %110 : vector<16x128xf32>
      %113 = arith.addf %108, %112 : vector<16x128xf32>
      %c16 = arith.constant 16 : index
      %114 = memref.load %arg2[%c16] : memref<99xf32, #tpu.memory_space<smem>>
      %115 = vector.extract_strided_slice %103 {offsets = [2, 0], sizes = [16, 128], strides = [1, 1]} : vector<22x128xf32> to vector<16x128xf32>
      %116 = vector.broadcast %114 : f32 to vector<16x128xf32>
      %117 = arith.mulf %116, %115 : vector<16x128xf32>
      %118 = arith.addf %113, %117 : vector<16x128xf32>
      %c23 = arith.constant 23 : index
      %119 = memref.load %arg2[%c23] : memref<99xf32, #tpu.memory_space<smem>>
      %120 = vector.extract_strided_slice %103 {offsets = [3, 0], sizes = [16, 128], strides = [1, 1]} : vector<22x128xf32> to vector<16x128xf32>
      %121 = vector.broadcast %119 : f32 to vector<16x128xf32>
      %122 = arith.mulf %121, %120 : vector<16x128xf32>
      %123 = arith.addf %118, %122 : vector<16x128xf32>
      %c30 = arith.constant 30 : index
      %124 = memref.load %arg2[%c30] : memref<99xf32, #tpu.memory_space<smem>>
      %125 = vector.extract_strided_slice %103 {offsets = [4, 0], sizes = [16, 128], strides = [1, 1]} : vector<22x128xf32> to vector<16x128xf32>
      %126 = vector.broadcast %124 : f32 to vector<16x128xf32>
      %127 = arith.mulf %126, %125 : vector<16x128xf32>
      %128 = arith.addf %123, %127 : vector<16x128xf32>
      %c37 = arith.constant 37 : index
      %129 = memref.load %arg2[%c37] : memref<99xf32, #tpu.memory_space<smem>>
      %130 = vector.extract_strided_slice %103 {offsets = [5, 0], sizes = [16, 128], strides = [1, 1]} : vector<22x128xf32> to vector<16x128xf32>
      %131 = vector.broadcast %129 : f32 to vector<16x128xf32>
      %132 = arith.mulf %131, %130 : vector<16x128xf32>
      %133 = arith.addf %128, %132 : vector<16x128xf32>
      %c44 = arith.constant 44 : index
      %134 = memref.load %arg2[%c44] : memref<99xf32, #tpu.memory_space<smem>>
      %135 = vector.extract_strided_slice %103 {offsets = [6, 0], sizes = [16, 128], strides = [1, 1]} : vector<22x128xf32> to vector<16x128xf32>
      %136 = vector.broadcast %134 : f32 to vector<16x128xf32>
      %137 = arith.mulf %136, %135 : vector<16x128xf32>
      %138 = arith.addf %133, %137 : vector<16x128xf32>
      %c0_38 = arith.constant 0 : index
      %c0_39 = arith.constant 0 : index
      %c3_40 = arith.constant 3 : index
      %139 = vector.load %arg7[%c0_38, %c0_39, %c3_40] : memref<2x22x134xf32, #tpu.memory_space<vmem>>, vector<1x22x128xf32>
      %140 = vector.shape_cast %139 : vector<1x22x128xf32> to vector<22x128xf32>
      %c3_41 = arith.constant 3 : index
      %141 = memref.load %arg2[%c3_41] : memref<99xf32, #tpu.memory_space<smem>>
      %142 = vector.extract_strided_slice %140 {offsets = [0, 0], sizes = [16, 128], strides = [1, 1]} : vector<22x128xf32> to vector<16x128xf32>
      %143 = vector.broadcast %141 : f32 to vector<16x128xf32>
      %144 = arith.mulf %143, %142 : vector<16x128xf32>
      %145 = arith.addf %138, %144 : vector<16x128xf32>
      %c10 = arith.constant 10 : index
      %146 = memref.load %arg2[%c10] : memref<99xf32, #tpu.memory_space<smem>>
      %147 = vector.extract_strided_slice %140 {offsets = [1, 0], sizes = [16, 128], strides = [1, 1]} : vector<22x128xf32> to vector<16x128xf32>
      %148 = vector.broadcast %146 : f32 to vector<16x128xf32>
      %149 = arith.mulf %148, %147 : vector<16x128xf32>
      %150 = arith.addf %145, %149 : vector<16x128xf32>
      %c17 = arith.constant 17 : index
      %151 = memref.load %arg2[%c17] : memref<99xf32, #tpu.memory_space<smem>>
      %152 = vector.extract_strided_slice %140 {offsets = [2, 0], sizes = [16, 128], strides = [1, 1]} : vector<22x128xf32> to vector<16x128xf32>
      %153 = vector.broadcast %151 : f32 to vector<16x128xf32>
      %154 = arith.mulf %153, %152 : vector<16x128xf32>
      %155 = arith.addf %150, %154 : vector<16x128xf32>
      %c24 = arith.constant 24 : index
      %156 = memref.load %arg2[%c24] : memref<99xf32, #tpu.memory_space<smem>>
      %157 = vector.extract_strided_slice %140 {offsets = [3, 0], sizes = [16, 128], strides = [1, 1]} : vector<22x128xf32> to vector<16x128xf32>
      %158 = vector.broadcast %156 : f32 to vector<16x128xf32>
      %159 = arith.mulf %158, %157 : vector<16x128xf32>
      %160 = arith.addf %155, %159 : vector<16x128xf32>
      %c31 = arith.constant 31 : index
      %161 = memref.load %arg2[%c31] : memref<99xf32, #tpu.memory_space<smem>>
      %162 = vector.extract_strided_slice %140 {offsets = [4, 0], sizes = [16, 128], strides = [1, 1]} : vector<22x128xf32> to vector<16x128xf32>
      %163 = vector.broadcast %161 : f32 to vector<16x128xf32>
      %164 = arith.mulf %163, %162 : vector<16x128xf32>
      %165 = arith.addf %160, %164 : vector<16x128xf32>
      %c38 = arith.constant 38 : index
      %166 = memref.load %arg2[%c38] : memref<99xf32, #tpu.memory_space<smem>>
      %167 = vector.extract_strided_slice %140 {offsets = [5, 0], sizes = [16, 128], strides = [1, 1]} : vector<22x128xf32> to vector<16x128xf32>
      %168 = vector.broadcast %166 : f32 to vector<16x128xf32>
      %169 = arith.mulf %168, %167 : vector<16x128xf32>
      %170 = arith.addf %165, %169 : vector<16x128xf32>
      %c45 = arith.constant 45 : index
      %171 = memref.load %arg2[%c45] : memref<99xf32, #tpu.memory_space<smem>>
      %172 = vector.extract_strided_slice %140 {offsets = [6, 0], sizes = [16, 128], strides = [1, 1]} : vector<22x128xf32> to vector<16x128xf32>
      %173 = vector.broadcast %171 : f32 to vector<16x128xf32>
      %174 = arith.mulf %173, %172 : vector<16x128xf32>
      %175 = arith.addf %170, %174 : vector<16x128xf32>
      %c0_42 = arith.constant 0 : index
      %c0_43 = arith.constant 0 : index
      %c4 = arith.constant 4 : index
      %176 = vector.load %arg7[%c0_42, %c0_43, %c4] : memref<2x22x134xf32, #tpu.memory_space<vmem>>, vector<1x22x128xf32>
      %177 = vector.shape_cast %176 : vector<1x22x128xf32> to vector<22x128xf32>
      %c4_44 = arith.constant 4 : index
      %178 = memref.load %arg2[%c4_44] : memref<99xf32, #tpu.memory_space<smem>>
      %179 = vector.extract_strided_slice %177 {offsets = [0, 0], sizes = [16, 128], strides = [1, 1]} : vector<22x128xf32> to vector<16x128xf32>
      %180 = vector.broadcast %178 : f32 to vector<16x128xf32>
      %181 = arith.mulf %180, %179 : vector<16x128xf32>
      %182 = arith.addf %175, %181 : vector<16x128xf32>
      %c11 = arith.constant 11 : index
      %183 = memref.load %arg2[%c11] : memref<99xf32, #tpu.memory_space<smem>>
      %184 = vector.extract_strided_slice %177 {offsets = [1, 0], sizes = [16, 128], strides = [1, 1]} : vector<22x128xf32> to vector<16x128xf32>
      %185 = vector.broadcast %183 : f32 to vector<16x128xf32>
      %186 = arith.mulf %185, %184 : vector<16x128xf32>
      %187 = arith.addf %182, %186 : vector<16x128xf32>
      %c18 = arith.constant 18 : index
      %188 = memref.load %arg2[%c18] : memref<99xf32, #tpu.memory_space<smem>>
      %189 = vector.extract_strided_slice %177 {offsets = [2, 0], sizes = [16, 128], strides = [1, 1]} : vector<22x128xf32> to vector<16x128xf32>
      %190 = vector.broadcast %188 : f32 to vector<16x128xf32>
      %191 = arith.mulf %190, %189 : vector<16x128xf32>
      %192 = arith.addf %187, %191 : vector<16x128xf32>
      %c25 = arith.constant 25 : index
      %193 = memref.load %arg2[%c25] : memref<99xf32, #tpu.memory_space<smem>>
      %194 = vector.extract_strided_slice %177 {offsets = [3, 0], sizes = [16, 128], strides = [1, 1]} : vector<22x128xf32> to vector<16x128xf32>
      %195 = vector.broadcast %193 : f32 to vector<16x128xf32>
      %196 = arith.mulf %195, %194 : vector<16x128xf32>
      %197 = arith.addf %192, %196 : vector<16x128xf32>
      %c32 = arith.constant 32 : index
      %198 = memref.load %arg2[%c32] : memref<99xf32, #tpu.memory_space<smem>>
      %199 = vector.extract_strided_slice %177 {offsets = [4, 0], sizes = [16, 128], strides = [1, 1]} : vector<22x128xf32> to vector<16x128xf32>
      %200 = vector.broadcast %198 : f32 to vector<16x128xf32>
      %201 = arith.mulf %200, %199 : vector<16x128xf32>
      %202 = arith.addf %197, %201 : vector<16x128xf32>
      %c39 = arith.constant 39 : index
      %203 = memref.load %arg2[%c39] : memref<99xf32, #tpu.memory_space<smem>>
      %204 = vector.extract_strided_slice %177 {offsets = [5, 0], sizes = [16, 128], strides = [1, 1]} : vector<22x128xf32> to vector<16x128xf32>
      %205 = vector.broadcast %203 : f32 to vector<16x128xf32>
      %206 = arith.mulf %205, %204 : vector<16x128xf32>
      %207 = arith.addf %202, %206 : vector<16x128xf32>
      %c46 = arith.constant 46 : index
      %208 = memref.load %arg2[%c46] : memref<99xf32, #tpu.memory_space<smem>>
      %209 = vector.extract_strided_slice %177 {offsets = [6, 0], sizes = [16, 128], strides = [1, 1]} : vector<22x128xf32> to vector<16x128xf32>
      %210 = vector.broadcast %208 : f32 to vector<16x128xf32>
      %211 = arith.mulf %210, %209 : vector<16x128xf32>
      %212 = arith.addf %207, %211 : vector<16x128xf32>
      %c0_45 = arith.constant 0 : index
      %c0_46 = arith.constant 0 : index
      %c5 = arith.constant 5 : index
      %213 = vector.load %arg7[%c0_45, %c0_46, %c5] : memref<2x22x134xf32, #tpu.memory_space<vmem>>, vector<1x22x128xf32>
      %214 = vector.shape_cast %213 : vector<1x22x128xf32> to vector<22x128xf32>
      %c5_47 = arith.constant 5 : index
      %215 = memref.load %arg2[%c5_47] : memref<99xf32, #tpu.memory_space<smem>>
      %216 = vector.extract_strided_slice %214 {offsets = [0, 0], sizes = [16, 128], strides = [1, 1]} : vector<22x128xf32> to vector<16x128xf32>
      %217 = vector.broadcast %215 : f32 to vector<16x128xf32>
      %218 = arith.mulf %217, %216 : vector<16x128xf32>
      %219 = arith.addf %212, %218 : vector<16x128xf32>
      %c12 = arith.constant 12 : index
      %220 = memref.load %arg2[%c12] : memref<99xf32, #tpu.memory_space<smem>>
      %221 = vector.extract_strided_slice %214 {offsets = [1, 0], sizes = [16, 128], strides = [1, 1]} : vector<22x128xf32> to vector<16x128xf32>
      %222 = vector.broadcast %220 : f32 to vector<16x128xf32>
      %223 = arith.mulf %222, %221 : vector<16x128xf32>
      %224 = arith.addf %219, %223 : vector<16x128xf32>
      %c19 = arith.constant 19 : index
      %225 = memref.load %arg2[%c19] : memref<99xf32, #tpu.memory_space<smem>>
      %226 = vector.extract_strided_slice %214 {offsets = [2, 0], sizes = [16, 128], strides = [1, 1]} : vector<22x128xf32> to vector<16x128xf32>
      %227 = vector.broadcast %225 : f32 to vector<16x128xf32>
      %228 = arith.mulf %227, %226 : vector<16x128xf32>
      %229 = arith.addf %224, %228 : vector<16x128xf32>
      %c26 = arith.constant 26 : index
      %230 = memref.load %arg2[%c26] : memref<99xf32, #tpu.memory_space<smem>>
      %231 = vector.extract_strided_slice %214 {offsets = [3, 0], sizes = [16, 128], strides = [1, 1]} : vector<22x128xf32> to vector<16x128xf32>
      %232 = vector.broadcast %230 : f32 to vector<16x128xf32>
      %233 = arith.mulf %232, %231 : vector<16x128xf32>
      %234 = arith.addf %229, %233 : vector<16x128xf32>
      %c33 = arith.constant 33 : index
      %235 = memref.load %arg2[%c33] : memref<99xf32, #tpu.memory_space<smem>>
      %236 = vector.extract_strided_slice %214 {offsets = [4, 0], sizes = [16, 128], strides = [1, 1]} : vector<22x128xf32> to vector<16x128xf32>
      %237 = vector.broadcast %235 : f32 to vector<16x128xf32>
      %238 = arith.mulf %237, %236 : vector<16x128xf32>
      %239 = arith.addf %234, %238 : vector<16x128xf32>
      %c40 = arith.constant 40 : index
      %240 = memref.load %arg2[%c40] : memref<99xf32, #tpu.memory_space<smem>>
      %241 = vector.extract_strided_slice %214 {offsets = [5, 0], sizes = [16, 128], strides = [1, 1]} : vector<22x128xf32> to vector<16x128xf32>
      %242 = vector.broadcast %240 : f32 to vector<16x128xf32>
      %243 = arith.mulf %242, %241 : vector<16x128xf32>
      %244 = arith.addf %239, %243 : vector<16x128xf32>
      %c47 = arith.constant 47 : index
      %245 = memref.load %arg2[%c47] : memref<99xf32, #tpu.memory_space<smem>>
      %246 = vector.extract_strided_slice %214 {offsets = [6, 0], sizes = [16, 128], strides = [1, 1]} : vector<22x128xf32> to vector<16x128xf32>
      %247 = vector.broadcast %245 : f32 to vector<16x128xf32>
      %248 = arith.mulf %247, %246 : vector<16x128xf32>
      %249 = arith.addf %244, %248 : vector<16x128xf32>
      %c0_48 = arith.constant 0 : index
      %c0_49 = arith.constant 0 : index
      %c6 = arith.constant 6 : index
      %250 = vector.load %arg7[%c0_48, %c0_49, %c6] : memref<2x22x134xf32, #tpu.memory_space<vmem>>, vector<1x22x128xf32>
      %251 = vector.shape_cast %250 : vector<1x22x128xf32> to vector<22x128xf32>
      %c6_50 = arith.constant 6 : index
      %252 = memref.load %arg2[%c6_50] : memref<99xf32, #tpu.memory_space<smem>>
      %253 = vector.extract_strided_slice %251 {offsets = [0, 0], sizes = [16, 128], strides = [1, 1]} : vector<22x128xf32> to vector<16x128xf32>
      %254 = vector.broadcast %252 : f32 to vector<16x128xf32>
      %255 = arith.mulf %254, %253 : vector<16x128xf32>
      %256 = arith.addf %249, %255 : vector<16x128xf32>
      %c13 = arith.constant 13 : index
      %257 = memref.load %arg2[%c13] : memref<99xf32, #tpu.memory_space<smem>>
      %258 = vector.extract_strided_slice %251 {offsets = [1, 0], sizes = [16, 128], strides = [1, 1]} : vector<22x128xf32> to vector<16x128xf32>
      %259 = vector.broadcast %257 : f32 to vector<16x128xf32>
      %260 = arith.mulf %259, %258 : vector<16x128xf32>
      %261 = arith.addf %256, %260 : vector<16x128xf32>
      %c20 = arith.constant 20 : index
      %262 = memref.load %arg2[%c20] : memref<99xf32, #tpu.memory_space<smem>>
      %263 = vector.extract_strided_slice %251 {offsets = [2, 0], sizes = [16, 128], strides = [1, 1]} : vector<22x128xf32> to vector<16x128xf32>
      %264 = vector.broadcast %262 : f32 to vector<16x128xf32>
      %265 = arith.mulf %264, %263 : vector<16x128xf32>
      %266 = arith.addf %261, %265 : vector<16x128xf32>
      %c27 = arith.constant 27 : index
      %267 = memref.load %arg2[%c27] : memref<99xf32, #tpu.memory_space<smem>>
      %268 = vector.extract_strided_slice %251 {offsets = [3, 0], sizes = [16, 128], strides = [1, 1]} : vector<22x128xf32> to vector<16x128xf32>
      %269 = vector.broadcast %267 : f32 to vector<16x128xf32>
      %270 = arith.mulf %269, %268 : vector<16x128xf32>
      %271 = arith.addf %266, %270 : vector<16x128xf32>
      %c34 = arith.constant 34 : index
      %272 = memref.load %arg2[%c34] : memref<99xf32, #tpu.memory_space<smem>>
      %273 = vector.extract_strided_slice %251 {offsets = [4, 0], sizes = [16, 128], strides = [1, 1]} : vector<22x128xf32> to vector<16x128xf32>
      %274 = vector.broadcast %272 : f32 to vector<16x128xf32>
      %275 = arith.mulf %274, %273 : vector<16x128xf32>
      %276 = arith.addf %271, %275 : vector<16x128xf32>
      %c41 = arith.constant 41 : index
      %277 = memref.load %arg2[%c41] : memref<99xf32, #tpu.memory_space<smem>>
      %278 = vector.extract_strided_slice %251 {offsets = [5, 0], sizes = [16, 128], strides = [1, 1]} : vector<22x128xf32> to vector<16x128xf32>
      %279 = vector.broadcast %277 : f32 to vector<16x128xf32>
      %280 = arith.mulf %279, %278 : vector<16x128xf32>
      %281 = arith.addf %276, %280 : vector<16x128xf32>
      %c48 = arith.constant 48 : index
      %282 = memref.load %arg2[%c48] : memref<99xf32, #tpu.memory_space<smem>>
      %283 = vector.extract_strided_slice %251 {offsets = [6, 0], sizes = [16, 128], strides = [1, 1]} : vector<22x128xf32> to vector<16x128xf32>
      %284 = vector.broadcast %282 : f32 to vector<16x128xf32>
      %285 = arith.mulf %284, %283 : vector<16x128xf32>
      %286 = arith.addf %281, %285 : vector<16x128xf32>
      %c1_51 = arith.constant 1 : index
      %c0_52 = arith.constant 0 : index
      %c0_53 = arith.constant 0 : index
      %287 = vector.load %arg7[%c1_51, %c0_52, %c0_53] : memref<2x22x134xf32, #tpu.memory_space<vmem>>, vector<1x22x128xf32>
      %288 = vector.shape_cast %287 : vector<1x22x128xf32> to vector<22x128xf32>
      %c49 = arith.constant 49 : index
      %289 = memref.load %arg2[%c49] : memref<99xf32, #tpu.memory_space<smem>>
      %290 = vector.extract_strided_slice %288 {offsets = [0, 0], sizes = [16, 128], strides = [1, 1]} : vector<22x128xf32> to vector<16x128xf32>
      %291 = vector.broadcast %289 : f32 to vector<16x128xf32>
      %292 = arith.mulf %291, %290 : vector<16x128xf32>
      %293 = arith.addf %286, %292 : vector<16x128xf32>
      %c56 = arith.constant 56 : index
      %294 = memref.load %arg2[%c56] : memref<99xf32, #tpu.memory_space<smem>>
      %295 = vector.extract_strided_slice %288 {offsets = [1, 0], sizes = [16, 128], strides = [1, 1]} : vector<22x128xf32> to vector<16x128xf32>
      %296 = vector.broadcast %294 : f32 to vector<16x128xf32>
      %297 = arith.mulf %296, %295 : vector<16x128xf32>
      %298 = arith.addf %293, %297 : vector<16x128xf32>
      %c63 = arith.constant 63 : index
      %299 = memref.load %arg2[%c63] : memref<99xf32, #tpu.memory_space<smem>>
      %300 = vector.extract_strided_slice %288 {offsets = [2, 0], sizes = [16, 128], strides = [1, 1]} : vector<22x128xf32> to vector<16x128xf32>
      %301 = vector.broadcast %299 : f32 to vector<16x128xf32>
      %302 = arith.mulf %301, %300 : vector<16x128xf32>
      %303 = arith.addf %298, %302 : vector<16x128xf32>
      %c70 = arith.constant 70 : index
      %304 = memref.load %arg2[%c70] : memref<99xf32, #tpu.memory_space<smem>>
      %305 = vector.extract_strided_slice %288 {offsets = [3, 0], sizes = [16, 128], strides = [1, 1]} : vector<22x128xf32> to vector<16x128xf32>
      %306 = vector.broadcast %304 : f32 to vector<16x128xf32>
      %307 = arith.mulf %306, %305 : vector<16x128xf32>
      %308 = arith.addf %303, %307 : vector<16x128xf32>
      %c77 = arith.constant 77 : index
      %309 = memref.load %arg2[%c77] : memref<99xf32, #tpu.memory_space<smem>>
      %310 = vector.extract_strided_slice %288 {offsets = [4, 0], sizes = [16, 128], strides = [1, 1]} : vector<22x128xf32> to vector<16x128xf32>
      %311 = vector.broadcast %309 : f32 to vector<16x128xf32>
      %312 = arith.mulf %311, %310 : vector<16x128xf32>
      %313 = arith.addf %308, %312 : vector<16x128xf32>
      %c84 = arith.constant 84 : index
      %314 = memref.load %arg2[%c84] : memref<99xf32, #tpu.memory_space<smem>>
      %315 = vector.extract_strided_slice %288 {offsets = [5, 0], sizes = [16, 128], strides = [1, 1]} : vector<22x128xf32> to vector<16x128xf32>
      %316 = vector.broadcast %314 : f32 to vector<16x128xf32>
      %317 = arith.mulf %316, %315 : vector<16x128xf32>
      %318 = arith.addf %313, %317 : vector<16x128xf32>
      %c91 = arith.constant 91 : index
      %319 = memref.load %arg2[%c91] : memref<99xf32, #tpu.memory_space<smem>>
      %320 = vector.extract_strided_slice %288 {offsets = [6, 0], sizes = [16, 128], strides = [1, 1]} : vector<22x128xf32> to vector<16x128xf32>
      %321 = vector.broadcast %319 : f32 to vector<16x128xf32>
      %322 = arith.mulf %321, %320 : vector<16x128xf32>
      %323 = arith.addf %318, %322 : vector<16x128xf32>
      %c1_54 = arith.constant 1 : index
      %c0_55 = arith.constant 0 : index
      %c1_56 = arith.constant 1 : index
      %324 = vector.load %arg7[%c1_54, %c0_55, %c1_56] : memref<2x22x134xf32, #tpu.memory_space<vmem>>, vector<1x22x128xf32>
      %325 = vector.shape_cast %324 : vector<1x22x128xf32> to vector<22x128xf32>
      %c50 = arith.constant 50 : index
      %326 = memref.load %arg2[%c50] : memref<99xf32, #tpu.memory_space<smem>>
      %327 = vector.extract_strided_slice %325 {offsets = [0, 0], sizes = [16, 128], strides = [1, 1]} : vector<22x128xf32> to vector<16x128xf32>
      %328 = vector.broadcast %326 : f32 to vector<16x128xf32>
      %329 = arith.mulf %328, %327 : vector<16x128xf32>
      %330 = arith.addf %323, %329 : vector<16x128xf32>
      %c57 = arith.constant 57 : index
      %331 = memref.load %arg2[%c57] : memref<99xf32, #tpu.memory_space<smem>>
      %332 = vector.extract_strided_slice %325 {offsets = [1, 0], sizes = [16, 128], strides = [1, 1]} : vector<22x128xf32> to vector<16x128xf32>
      %333 = vector.broadcast %331 : f32 to vector<16x128xf32>
      %334 = arith.mulf %333, %332 : vector<16x128xf32>
      %335 = arith.addf %330, %334 : vector<16x128xf32>
      %c64 = arith.constant 64 : index
      %336 = memref.load %arg2[%c64] : memref<99xf32, #tpu.memory_space<smem>>
      %337 = vector.extract_strided_slice %325 {offsets = [2, 0], sizes = [16, 128], strides = [1, 1]} : vector<22x128xf32> to vector<16x128xf32>
      %338 = vector.broadcast %336 : f32 to vector<16x128xf32>
      %339 = arith.mulf %338, %337 : vector<16x128xf32>
      %340 = arith.addf %335, %339 : vector<16x128xf32>
      %c71 = arith.constant 71 : index
      %341 = memref.load %arg2[%c71] : memref<99xf32, #tpu.memory_space<smem>>
      %342 = vector.extract_strided_slice %325 {offsets = [3, 0], sizes = [16, 128], strides = [1, 1]} : vector<22x128xf32> to vector<16x128xf32>
      %343 = vector.broadcast %341 : f32 to vector<16x128xf32>
      %344 = arith.mulf %343, %342 : vector<16x128xf32>
      %345 = arith.addf %340, %344 : vector<16x128xf32>
      %c78 = arith.constant 78 : index
      %346 = memref.load %arg2[%c78] : memref<99xf32, #tpu.memory_space<smem>>
      %347 = vector.extract_strided_slice %325 {offsets = [4, 0], sizes = [16, 128], strides = [1, 1]} : vector<22x128xf32> to vector<16x128xf32>
      %348 = vector.broadcast %346 : f32 to vector<16x128xf32>
      %349 = arith.mulf %348, %347 : vector<16x128xf32>
      %350 = arith.addf %345, %349 : vector<16x128xf32>
      %c85 = arith.constant 85 : index
      %351 = memref.load %arg2[%c85] : memref<99xf32, #tpu.memory_space<smem>>
      %352 = vector.extract_strided_slice %325 {offsets = [5, 0], sizes = [16, 128], strides = [1, 1]} : vector<22x128xf32> to vector<16x128xf32>
      %353 = vector.broadcast %351 : f32 to vector<16x128xf32>
      %354 = arith.mulf %353, %352 : vector<16x128xf32>
      %355 = arith.addf %350, %354 : vector<16x128xf32>
      %c92 = arith.constant 92 : index
      %356 = memref.load %arg2[%c92] : memref<99xf32, #tpu.memory_space<smem>>
      %357 = vector.extract_strided_slice %325 {offsets = [6, 0], sizes = [16, 128], strides = [1, 1]} : vector<22x128xf32> to vector<16x128xf32>
      %358 = vector.broadcast %356 : f32 to vector<16x128xf32>
      %359 = arith.mulf %358, %357 : vector<16x128xf32>
      %360 = arith.addf %355, %359 : vector<16x128xf32>
      %c1_57 = arith.constant 1 : index
      %c0_58 = arith.constant 0 : index
      %c2_59 = arith.constant 2 : index
      %361 = vector.load %arg7[%c1_57, %c0_58, %c2_59] : memref<2x22x134xf32, #tpu.memory_space<vmem>>, vector<1x22x128xf32>
      %362 = vector.shape_cast %361 : vector<1x22x128xf32> to vector<22x128xf32>
      %c51 = arith.constant 51 : index
      %363 = memref.load %arg2[%c51] : memref<99xf32, #tpu.memory_space<smem>>
      %364 = vector.extract_strided_slice %362 {offsets = [0, 0], sizes = [16, 128], strides = [1, 1]} : vector<22x128xf32> to vector<16x128xf32>
      %365 = vector.broadcast %363 : f32 to vector<16x128xf32>
      %366 = arith.mulf %365, %364 : vector<16x128xf32>
      %367 = arith.addf %360, %366 : vector<16x128xf32>
      %c58 = arith.constant 58 : index
      %368 = memref.load %arg2[%c58] : memref<99xf32, #tpu.memory_space<smem>>
      %369 = vector.extract_strided_slice %362 {offsets = [1, 0], sizes = [16, 128], strides = [1, 1]} : vector<22x128xf32> to vector<16x128xf32>
      %370 = vector.broadcast %368 : f32 to vector<16x128xf32>
      %371 = arith.mulf %370, %369 : vector<16x128xf32>
      %372 = arith.addf %367, %371 : vector<16x128xf32>
      %c65 = arith.constant 65 : index
      %373 = memref.load %arg2[%c65] : memref<99xf32, #tpu.memory_space<smem>>
      %374 = vector.extract_strided_slice %362 {offsets = [2, 0], sizes = [16, 128], strides = [1, 1]} : vector<22x128xf32> to vector<16x128xf32>
      %375 = vector.broadcast %373 : f32 to vector<16x128xf32>
      %376 = arith.mulf %375, %374 : vector<16x128xf32>
      %377 = arith.addf %372, %376 : vector<16x128xf32>
      %c72 = arith.constant 72 : index
      %378 = memref.load %arg2[%c72] : memref<99xf32, #tpu.memory_space<smem>>
      %379 = vector.extract_strided_slice %362 {offsets = [3, 0], sizes = [16, 128], strides = [1, 1]} : vector<22x128xf32> to vector<16x128xf32>
      %380 = vector.broadcast %378 : f32 to vector<16x128xf32>
      %381 = arith.mulf %380, %379 : vector<16x128xf32>
      %382 = arith.addf %377, %381 : vector<16x128xf32>
      %c79 = arith.constant 79 : index
      %383 = memref.load %arg2[%c79] : memref<99xf32, #tpu.memory_space<smem>>
      %384 = vector.extract_strided_slice %362 {offsets = [4, 0], sizes = [16, 128], strides = [1, 1]} : vector<22x128xf32> to vector<16x128xf32>
      %385 = vector.broadcast %383 : f32 to vector<16x128xf32>
      %386 = arith.mulf %385, %384 : vector<16x128xf32>
      %387 = arith.addf %382, %386 : vector<16x128xf32>
      %c86 = arith.constant 86 : index
      %388 = memref.load %arg2[%c86] : memref<99xf32, #tpu.memory_space<smem>>
      %389 = vector.extract_strided_slice %362 {offsets = [5, 0], sizes = [16, 128], strides = [1, 1]} : vector<22x128xf32> to vector<16x128xf32>
      %390 = vector.broadcast %388 : f32 to vector<16x128xf32>
      %391 = arith.mulf %390, %389 : vector<16x128xf32>
      %392 = arith.addf %387, %391 : vector<16x128xf32>
      %c93 = arith.constant 93 : index
      %393 = memref.load %arg2[%c93] : memref<99xf32, #tpu.memory_space<smem>>
      %394 = vector.extract_strided_slice %362 {offsets = [6, 0], sizes = [16, 128], strides = [1, 1]} : vector<22x128xf32> to vector<16x128xf32>
      %395 = vector.broadcast %393 : f32 to vector<16x128xf32>
      %396 = arith.mulf %395, %394 : vector<16x128xf32>
      %397 = arith.addf %392, %396 : vector<16x128xf32>
      %c1_60 = arith.constant 1 : index
      %c0_61 = arith.constant 0 : index
      %c3_62 = arith.constant 3 : index
      %398 = vector.load %arg7[%c1_60, %c0_61, %c3_62] : memref<2x22x134xf32, #tpu.memory_space<vmem>>, vector<1x22x128xf32>
      %399 = vector.shape_cast %398 : vector<1x22x128xf32> to vector<22x128xf32>
      %c52 = arith.constant 52 : index
      %400 = memref.load %arg2[%c52] : memref<99xf32, #tpu.memory_space<smem>>
      %401 = vector.extract_strided_slice %399 {offsets = [0, 0], sizes = [16, 128], strides = [1, 1]} : vector<22x128xf32> to vector<16x128xf32>
      %402 = vector.broadcast %400 : f32 to vector<16x128xf32>
      %403 = arith.mulf %402, %401 : vector<16x128xf32>
      %404 = arith.addf %397, %403 : vector<16x128xf32>
      %c59 = arith.constant 59 : index
      %405 = memref.load %arg2[%c59] : memref<99xf32, #tpu.memory_space<smem>>
      %406 = vector.extract_strided_slice %399 {offsets = [1, 0], sizes = [16, 128], strides = [1, 1]} : vector<22x128xf32> to vector<16x128xf32>
      %407 = vector.broadcast %405 : f32 to vector<16x128xf32>
      %408 = arith.mulf %407, %406 : vector<16x128xf32>
      %409 = arith.addf %404, %408 : vector<16x128xf32>
      %c66 = arith.constant 66 : index
      %410 = memref.load %arg2[%c66] : memref<99xf32, #tpu.memory_space<smem>>
      %411 = vector.extract_strided_slice %399 {offsets = [2, 0], sizes = [16, 128], strides = [1, 1]} : vector<22x128xf32> to vector<16x128xf32>
      %412 = vector.broadcast %410 : f32 to vector<16x128xf32>
      %413 = arith.mulf %412, %411 : vector<16x128xf32>
      %414 = arith.addf %409, %413 : vector<16x128xf32>
      %c73 = arith.constant 73 : index
      %415 = memref.load %arg2[%c73] : memref<99xf32, #tpu.memory_space<smem>>
      %416 = vector.extract_strided_slice %399 {offsets = [3, 0], sizes = [16, 128], strides = [1, 1]} : vector<22x128xf32> to vector<16x128xf32>
      %417 = vector.broadcast %415 : f32 to vector<16x128xf32>
      %418 = arith.mulf %417, %416 : vector<16x128xf32>
      %419 = arith.addf %414, %418 : vector<16x128xf32>
      %c80 = arith.constant 80 : index
      %420 = memref.load %arg2[%c80] : memref<99xf32, #tpu.memory_space<smem>>
      %421 = vector.extract_strided_slice %399 {offsets = [4, 0], sizes = [16, 128], strides = [1, 1]} : vector<22x128xf32> to vector<16x128xf32>
      %422 = vector.broadcast %420 : f32 to vector<16x128xf32>
      %423 = arith.mulf %422, %421 : vector<16x128xf32>
      %424 = arith.addf %419, %423 : vector<16x128xf32>
      %c87 = arith.constant 87 : index
      %425 = memref.load %arg2[%c87] : memref<99xf32, #tpu.memory_space<smem>>
      %426 = vector.extract_strided_slice %399 {offsets = [5, 0], sizes = [16, 128], strides = [1, 1]} : vector<22x128xf32> to vector<16x128xf32>
      %427 = vector.broadcast %425 : f32 to vector<16x128xf32>
      %428 = arith.mulf %427, %426 : vector<16x128xf32>
      %429 = arith.addf %424, %428 : vector<16x128xf32>
      %c94 = arith.constant 94 : index
      %430 = memref.load %arg2[%c94] : memref<99xf32, #tpu.memory_space<smem>>
      %431 = vector.extract_strided_slice %399 {offsets = [6, 0], sizes = [16, 128], strides = [1, 1]} : vector<22x128xf32> to vector<16x128xf32>
      %432 = vector.broadcast %430 : f32 to vector<16x128xf32>
      %433 = arith.mulf %432, %431 : vector<16x128xf32>
      %434 = arith.addf %429, %433 : vector<16x128xf32>
      %c1_63 = arith.constant 1 : index
      %c0_64 = arith.constant 0 : index
      %c4_65 = arith.constant 4 : index
      %435 = vector.load %arg7[%c1_63, %c0_64, %c4_65] : memref<2x22x134xf32, #tpu.memory_space<vmem>>, vector<1x22x128xf32>
      %436 = vector.shape_cast %435 : vector<1x22x128xf32> to vector<22x128xf32>
      %c53 = arith.constant 53 : index
      %437 = memref.load %arg2[%c53] : memref<99xf32, #tpu.memory_space<smem>>
      %438 = vector.extract_strided_slice %436 {offsets = [0, 0], sizes = [16, 128], strides = [1, 1]} : vector<22x128xf32> to vector<16x128xf32>
      %439 = vector.broadcast %437 : f32 to vector<16x128xf32>
      %440 = arith.mulf %439, %438 : vector<16x128xf32>
      %441 = arith.addf %434, %440 : vector<16x128xf32>
      %c60 = arith.constant 60 : index
      %442 = memref.load %arg2[%c60] : memref<99xf32, #tpu.memory_space<smem>>
      %443 = vector.extract_strided_slice %436 {offsets = [1, 0], sizes = [16, 128], strides = [1, 1]} : vector<22x128xf32> to vector<16x128xf32>
      %444 = vector.broadcast %442 : f32 to vector<16x128xf32>
      %445 = arith.mulf %444, %443 : vector<16x128xf32>
      %446 = arith.addf %441, %445 : vector<16x128xf32>
      %c67 = arith.constant 67 : index
      %447 = memref.load %arg2[%c67] : memref<99xf32, #tpu.memory_space<smem>>
      %448 = vector.extract_strided_slice %436 {offsets = [2, 0], sizes = [16, 128], strides = [1, 1]} : vector<22x128xf32> to vector<16x128xf32>
      %449 = vector.broadcast %447 : f32 to vector<16x128xf32>
      %450 = arith.mulf %449, %448 : vector<16x128xf32>
      %451 = arith.addf %446, %450 : vector<16x128xf32>
      %c74 = arith.constant 74 : index
      %452 = memref.load %arg2[%c74] : memref<99xf32, #tpu.memory_space<smem>>
      %453 = vector.extract_strided_slice %436 {offsets = [3, 0], sizes = [16, 128], strides = [1, 1]} : vector<22x128xf32> to vector<16x128xf32>
      %454 = vector.broadcast %452 : f32 to vector<16x128xf32>
      %455 = arith.mulf %454, %453 : vector<16x128xf32>
      %456 = arith.addf %451, %455 : vector<16x128xf32>
      %c81 = arith.constant 81 : index
      %457 = memref.load %arg2[%c81] : memref<99xf32, #tpu.memory_space<smem>>
      %458 = vector.extract_strided_slice %436 {offsets = [4, 0], sizes = [16, 128], strides = [1, 1]} : vector<22x128xf32> to vector<16x128xf32>
      %459 = vector.broadcast %457 : f32 to vector<16x128xf32>
      %460 = arith.mulf %459, %458 : vector<16x128xf32>
      %461 = arith.addf %456, %460 : vector<16x128xf32>
      %c88 = arith.constant 88 : index
      %462 = memref.load %arg2[%c88] : memref<99xf32, #tpu.memory_space<smem>>
      %463 = vector.extract_strided_slice %436 {offsets = [5, 0], sizes = [16, 128], strides = [1, 1]} : vector<22x128xf32> to vector<16x128xf32>
      %464 = vector.broadcast %462 : f32 to vector<16x128xf32>
      %465 = arith.mulf %464, %463 : vector<16x128xf32>
      %466 = arith.addf %461, %465 : vector<16x128xf32>
      %c95 = arith.constant 95 : index
      %467 = memref.load %arg2[%c95] : memref<99xf32, #tpu.memory_space<smem>>
      %468 = vector.extract_strided_slice %436 {offsets = [6, 0], sizes = [16, 128], strides = [1, 1]} : vector<22x128xf32> to vector<16x128xf32>
      %469 = vector.broadcast %467 : f32 to vector<16x128xf32>
      %470 = arith.mulf %469, %468 : vector<16x128xf32>
      %471 = arith.addf %466, %470 : vector<16x128xf32>
      %c1_66 = arith.constant 1 : index
      %c0_67 = arith.constant 0 : index
      %c5_68 = arith.constant 5 : index
      %472 = vector.load %arg7[%c1_66, %c0_67, %c5_68] : memref<2x22x134xf32, #tpu.memory_space<vmem>>, vector<1x22x128xf32>
      %473 = vector.shape_cast %472 : vector<1x22x128xf32> to vector<22x128xf32>
      %c54 = arith.constant 54 : index
      %474 = memref.load %arg2[%c54] : memref<99xf32, #tpu.memory_space<smem>>
      %475 = vector.extract_strided_slice %473 {offsets = [0, 0], sizes = [16, 128], strides = [1, 1]} : vector<22x128xf32> to vector<16x128xf32>
      %476 = vector.broadcast %474 : f32 to vector<16x128xf32>
      %477 = arith.mulf %476, %475 : vector<16x128xf32>
      %478 = arith.addf %471, %477 : vector<16x128xf32>
      %c61 = arith.constant 61 : index
      %479 = memref.load %arg2[%c61] : memref<99xf32, #tpu.memory_space<smem>>
      %480 = vector.extract_strided_slice %473 {offsets = [1, 0], sizes = [16, 128], strides = [1, 1]} : vector<22x128xf32> to vector<16x128xf32>
      %481 = vector.broadcast %479 : f32 to vector<16x128xf32>
      %482 = arith.mulf %481, %480 : vector<16x128xf32>
      %483 = arith.addf %478, %482 : vector<16x128xf32>
      %c68 = arith.constant 68 : index
      %484 = memref.load %arg2[%c68] : memref<99xf32, #tpu.memory_space<smem>>
      %485 = vector.extract_strided_slice %473 {offsets = [2, 0], sizes = [16, 128], strides = [1, 1]} : vector<22x128xf32> to vector<16x128xf32>
      %486 = vector.broadcast %484 : f32 to vector<16x128xf32>
      %487 = arith.mulf %486, %485 : vector<16x128xf32>
      %488 = arith.addf %483, %487 : vector<16x128xf32>
      %c75 = arith.constant 75 : index
      %489 = memref.load %arg2[%c75] : memref<99xf32, #tpu.memory_space<smem>>
      %490 = vector.extract_strided_slice %473 {offsets = [3, 0], sizes = [16, 128], strides = [1, 1]} : vector<22x128xf32> to vector<16x128xf32>
      %491 = vector.broadcast %489 : f32 to vector<16x128xf32>
      %492 = arith.mulf %491, %490 : vector<16x128xf32>
      %493 = arith.addf %488, %492 : vector<16x128xf32>
      %c82 = arith.constant 82 : index
      %494 = memref.load %arg2[%c82] : memref<99xf32, #tpu.memory_space<smem>>
      %495 = vector.extract_strided_slice %473 {offsets = [4, 0], sizes = [16, 128], strides = [1, 1]} : vector<22x128xf32> to vector<16x128xf32>
      %496 = vector.broadcast %494 : f32 to vector<16x128xf32>
      %497 = arith.mulf %496, %495 : vector<16x128xf32>
      %498 = arith.addf %493, %497 : vector<16x128xf32>
      %c89 = arith.constant 89 : index
      %499 = memref.load %arg2[%c89] : memref<99xf32, #tpu.memory_space<smem>>
      %500 = vector.extract_strided_slice %473 {offsets = [5, 0], sizes = [16, 128], strides = [1, 1]} : vector<22x128xf32> to vector<16x128xf32>
      %501 = vector.broadcast %499 : f32 to vector<16x128xf32>
      %502 = arith.mulf %501, %500 : vector<16x128xf32>
      %503 = arith.addf %498, %502 : vector<16x128xf32>
      %c96 = arith.constant 96 : index
      %504 = memref.load %arg2[%c96] : memref<99xf32, #tpu.memory_space<smem>>
      %505 = vector.extract_strided_slice %473 {offsets = [6, 0], sizes = [16, 128], strides = [1, 1]} : vector<22x128xf32> to vector<16x128xf32>
      %506 = vector.broadcast %504 : f32 to vector<16x128xf32>
      %507 = arith.mulf %506, %505 : vector<16x128xf32>
      %508 = arith.addf %503, %507 : vector<16x128xf32>
      %c1_69 = arith.constant 1 : index
      %c0_70 = arith.constant 0 : index
      %c6_71 = arith.constant 6 : index
      %509 = vector.load %arg7[%c1_69, %c0_70, %c6_71] : memref<2x22x134xf32, #tpu.memory_space<vmem>>, vector<1x22x128xf32>
      %510 = vector.shape_cast %509 : vector<1x22x128xf32> to vector<22x128xf32>
      %c55 = arith.constant 55 : index
      %511 = memref.load %arg2[%c55] : memref<99xf32, #tpu.memory_space<smem>>
      %512 = vector.extract_strided_slice %510 {offsets = [0, 0], sizes = [16, 128], strides = [1, 1]} : vector<22x128xf32> to vector<16x128xf32>
      %513 = vector.broadcast %511 : f32 to vector<16x128xf32>
      %514 = arith.mulf %513, %512 : vector<16x128xf32>
      %515 = arith.addf %508, %514 : vector<16x128xf32>
      %c62 = arith.constant 62 : index
      %516 = memref.load %arg2[%c62] : memref<99xf32, #tpu.memory_space<smem>>
      %517 = vector.extract_strided_slice %510 {offsets = [1, 0], sizes = [16, 128], strides = [1, 1]} : vector<22x128xf32> to vector<16x128xf32>
      %518 = vector.broadcast %516 : f32 to vector<16x128xf32>
      %519 = arith.mulf %518, %517 : vector<16x128xf32>
      %520 = arith.addf %515, %519 : vector<16x128xf32>
      %c69 = arith.constant 69 : index
      %521 = memref.load %arg2[%c69] : memref<99xf32, #tpu.memory_space<smem>>
      %522 = vector.extract_strided_slice %510 {offsets = [2, 0], sizes = [16, 128], strides = [1, 1]} : vector<22x128xf32> to vector<16x128xf32>
      %523 = vector.broadcast %521 : f32 to vector<16x128xf32>
      %524 = arith.mulf %523, %522 : vector<16x128xf32>
      %525 = arith.addf %520, %524 : vector<16x128xf32>
      %c76 = arith.constant 76 : index
      %526 = memref.load %arg2[%c76] : memref<99xf32, #tpu.memory_space<smem>>
      %527 = vector.extract_strided_slice %510 {offsets = [3, 0], sizes = [16, 128], strides = [1, 1]} : vector<22x128xf32> to vector<16x128xf32>
      %528 = vector.broadcast %526 : f32 to vector<16x128xf32>
      %529 = arith.mulf %528, %527 : vector<16x128xf32>
      %530 = arith.addf %525, %529 : vector<16x128xf32>
      %c83 = arith.constant 83 : index
      %531 = memref.load %arg2[%c83] : memref<99xf32, #tpu.memory_space<smem>>
      %532 = vector.extract_strided_slice %510 {offsets = [4, 0], sizes = [16, 128], strides = [1, 1]} : vector<22x128xf32> to vector<16x128xf32>
      %533 = vector.broadcast %531 : f32 to vector<16x128xf32>
      %534 = arith.mulf %533, %532 : vector<16x128xf32>
      %535 = arith.addf %530, %534 : vector<16x128xf32>
      %c90 = arith.constant 90 : index
      %536 = memref.load %arg2[%c90] : memref<99xf32, #tpu.memory_space<smem>>
      %537 = vector.extract_strided_slice %510 {offsets = [5, 0], sizes = [16, 128], strides = [1, 1]} : vector<22x128xf32> to vector<16x128xf32>
      %538 = vector.broadcast %536 : f32 to vector<16x128xf32>
      %539 = arith.mulf %538, %537 : vector<16x128xf32>
      %540 = arith.addf %535, %539 : vector<16x128xf32>
      %c97 = arith.constant 97 : index
      %541 = memref.load %arg2[%c97] : memref<99xf32, #tpu.memory_space<smem>>
      %542 = vector.extract_strided_slice %510 {offsets = [6, 0], sizes = [16, 128], strides = [1, 1]} : vector<22x128xf32> to vector<16x128xf32>
      %543 = vector.broadcast %541 : f32 to vector<16x128xf32>
      %544 = arith.mulf %543, %542 : vector<16x128xf32>
      %545 = arith.addf %540, %544 : vector<16x128xf32>
      %546 = arith.negf %545 : vector<16x128xf32>
      %547 = math.exp %546 : vector<16x128xf32>
      %cst_72 = arith.constant 1.000000e+00 : f32
      %548 = vector.broadcast %cst_72 : f32 to vector<16x128xf32>
      %549 = arith.addf %548, %547 : vector<16x128xf32>
      %550 = arith.divf %548, %549 : vector<16x128xf32>
      %c0_73 = arith.constant 0 : index
      %c0_74 = arith.constant 0 : index
      %c0_75 = arith.constant 0 : index
      %c0_76 = arith.constant 0 : index
      %551 = vector.load %arg4[%c0_73, %c0_74, %c0_75, %c0_76] : memref<1x1x16x128xf32, #tpu.memory_space<vmem>>, vector<1x1x16x128xf32>
      %552 = vector.shape_cast %551 : vector<1x1x16x128xf32> to vector<16x128xf32>
      %553 = vector.shape_cast %550 : vector<16x128xf32> to vector<1x1x16x128xf32>
      tpu.vector_store %arg4[%c0_73, %c0_74, %c0_75, %c0_76], %553 {strides = array<i32>} : memref<1x1x16x128xf32, #tpu.memory_space<vmem>>, vector<1x1x16x128xf32>,
    } else {
    }
    return
  }
  func.func @transform_0(%arg0: i32, %arg1: i32) -> i32 {
    %c0_i32 = arith.constant 0 : i32
    %c0_i32_0 = arith.constant 0 : i32
    return %c0_i32 : i32
  }
  func.func @transform_1(%arg0: i32, %arg1: i32) -> (i32, i32, i32, i32) {
    %c0_i32 = arith.constant 0 : i32
    %c0_i32_0 = arith.constant 0 : i32
    %c0_i32_1 = arith.constant 0 : i32
    return %arg0, %arg1, %c0_i32, %c0_i32_0 : i32, i32, i32, i32
  }
  func.func @transform_2(%arg0: i32, %arg1: i32) -> (i32, i32, i32, i32) {
    %c0_i32 = arith.constant 0 : i32
    %c0_i32_0 = arith.constant 0 : i32
    %c0_i32_1 = arith.constant 0 : i32
    %c0_i32_2 = arith.constant 0 : i32
    return %arg0, %c0_i32, %c0_i32_0, %c0_i32_1 : i32, i32, i32, i32
  }
}

</mosaic_0001>

<llo_original>
// kernel: spatial_attention.1
$region0: #{spatial_attention.1}
  #allocation0 [shape = 'u32[]', space=smem, size = 0x4, offset = 0x4, fixed_abs, tag = 'smem constant byte address 0x4 - core index']
  #allocation1 [shape = 'u32[72,128]{1,0:T(1,128)}', space=vmem, size = 0x9000, scoped, tag = 'internal scratch']
  #allocation2 [shape = 'f32[16,128]{1,0:T(8,128)}', space=vmem, size = 0x2000, scoped, tag = 'scratch operand']
  #allocation3 [shape = 'f32[16,128]{1,0:T(8,128)}', space=vmem, size = 0x2000, scoped, tag = 'scratch operand']
  #allocation4 [shape = 'f32[2,22,134]{2,1,0:T(8,128)}', space=vmem, size = 0xc000, scoped, tag = 'scratch operand']
  %s0 = inlined_call_operand.vmem [shape: f32[99], index: 0, kind: input, shape index: {}]
  %s1 = inlined_call_operand.hbm [shape: f32[2,16,16,128], index: 1, kind: input, shape index: {}]
  %s2 = inlined_call_operand.hbm [shape: f32[2,1,16,128], index: 2, kind: output, shape index: {}]
  %s3 = sld [smem:[#allocation0]]
  $region57: #{spatial_attention.1} parent=0
    _
  %s5 = ssub.s32 1, %s3
  %s6 = scalar_select 0, %s5, %s3
  $region1: #{spatial_attention.1} parent=0
    #allocation5 [shape = 'u8[512]{0}', space=smem, size = 0x200, scoped, tag = 'input window, operand 0, single buffered']
    #allocation6 [shape = 's32[2]{0}', space=sflag, size = 0x8, scoped, tag = 'scoped memory for spatial_attention.1']
    #allocation7 [shape = 's32[2]{0}', space=sflag, size = 0x8, scoped, tag = 'scoped memory for spatial_attention.1']
    #allocation8 [shape = 's32[2]{0}', space=sflag, size = 0x8, scoped, tag = 'scoped memory for spatial_attention.1']
    #allocation9 [shape = 'u8[262144]{0}', space=vmem, size = 0x40000, scoped, tag = 'input window, operand 1']
    #allocation10 [shape = 'u8[16384]{0}', space=vmem, size = 0x4000, scoped, tag = 'output window, operand 0']
    %7 = vsyncpa [#allocation8], 0
    %8 = vsyncpa [#allocation6], 0
    %s9 = scalar_lea.sflag [#allocation6], 1
    %10 = vsyncpa %s9, 0
    %11 = vsyncpa [#allocation7], 0
    %s12 = scalar_lea.sflag [#allocation7], 1
    %13 = vsyncpa %s12, 0
    loop: start=0, step=1, limit=4
    $region2: #{spatial_attention.1} parent=1 // loop_pre_header
      _
    $region3: #{spatial_attention.1} parent=1 // loop_header
      %s15 = sphi 0, %s19
      %p16 = scmp.ge.s32.totalorder %s15, 4
      %s22 = sphi 0, %s34
      %s23 = sphi 0, %s30
      %s24 = sphi 0, %s22
      %s25 = sphi 0, %s23
      %s26 = sphi 0, %s24
      %s27 = sphi 0, %s25
      %s35 = sphi 0, %s35
      %s37 = sphi 0, %s35
      %s38 = sphi 0, %s37
      %s52 = sphi 0, %s38
      %s60 = sphi 0, %s62
      %s63 = sphi 0, %s60
      %s64 = sphi 0, %s63
      %s80 = sphi 0, %s64
      %s86 = sphi 0, %s88
      %s89 = sphi 0, %s86
      %s90 = sphi 0, %s89
      %s106 = sphi 0, %s90
    $region4: #{spatial_attention.1} parent=1 // loop_header_branch
      %18 = sbr.rel (%p16) target = $region8
    $region5: #{spatial_attention.1} parent=1 // loop_body
      %s20 = ssub.s32 %s15, 1
      %s21 = ssub.s32 %s15, 2
      %s28 = sadd.s32 1, %s23
      %p29 = scmp.ge.s32.totalorder %s28, 1
      %s30 = scalar_select %p29, 0, %s28
      %s31 = sadd.s32 1, %s22
      %s32 = scalar_select %p29, %s31, %s22
      %p33 = scmp.ge.s32.totalorder %s32, 2
      %s34 = scalar_select %p33, 0, %s32
      %s36 = sadd.s32 %s35, 1
      %p39 = scmp.eq.s32.totalorder %s15, 1
      %p40 = scmp.ne.s32.totalorder %s35, %s37
      %p41 = scmp.eq.s32.totalorder %s15, 0
      %p42 = por %p40, %p41
      %p43 = scmp.ne.s32.totalorder %s35, %s37
      %p44 = scmp.eq.s32.totalorder %s20, 1
      %p45 = por %p43, %p44
      %p46 = scmp.ne.s32.totalorder %s37, %s38
      %p47 = scmp.eq.s32.totalorder %s20, 0
      %p48 = por %p46, %p47
      %p49 = scmp.ne.s32.totalorder %s37, %s38
      %p50 = scmp.eq.s32.totalorder %s21, 1
      %p51 = por %p49, %p50
      %p53 = scmp.ne.s32.totalorder %s38, %s52
      %p54 = scmp.eq.s32.totalorder %s21, 0
      %p55 = por %p53, %p54
      %s56 = ssub.s32 %s22, %s34
      %s57 = ssub.s32 %s23, %s30
      %s58 = sor.u32 %s56, %s57
      %p59 = scmp.eq.s32.totalorder %s58, 0
      %s61 = sadd.s32 %s60, 1
      %s62 = scalar_select %p59, %s60, %s61
      %p65 = pneg %p59
      %p66 = scmp.eq.s32.totalorder %s15, 1
      %p67 = por %p65, %p66
      %p68 = scmp.ne.s32.totalorder %s60, %s63
      %p69 = scmp.eq.s32.totalorder %s15, 0
      %p70 = por %p68, %p69
      %p71 = scmp.ne.s32.totalorder %s60, %s63
      %p72 = scmp.eq.s32.totalorder %s20, 1
      %p73 = por %p71, %p72
      %p74 = scmp.ne.s32.totalorder %s63, %s64
      %p75 = scmp.eq.s32.totalorder %s20, 0
      %p76 = por %p74, %p75
      %p77 = scmp.ne.s32.totalorder %s63, %s64
      %p78 = scmp.eq.s32.totalorder %s21, 1
      %p79 = por %p77, %p78
      %p81 = scmp.ne.s32.totalorder %s64, %s80
      %p82 = scmp.eq.s32.totalorder %s21, 0
      %p83 = por %p81, %p82
      %s84 = ssub.s32 %s22, %s34
      %p85 = scmp.eq.s32.totalorder %s84, 0
      %s87 = sadd.s32 %s86, 1
      %s88 = scalar_select %p85, %s86, %s87
      %p91 = pneg %p85
      %p92 = scmp.eq.s32.totalorder %s15, 1
      %p93 = por %p91, %p92
      %p94 = scmp.ne.s32.totalorder %s86, %s89
      %p95 = scmp.eq.s32.totalorder %s15, 0
      %p96 = por %p94, %p95
      %p97 = scmp.ne.s32.totalorder %s86, %s89
      %p98 = scmp.eq.s32.totalorder %s20, 1
      %p99 = por %p97, %p98
      %p100 = scmp.ne.s32.totalorder %s89, %s90
      %p101 = scmp.eq.s32.totalorder %s20, 0
      %p102 = por %p100, %p101
      %p103 = scmp.ne.s32.totalorder %s89, %s90
      %p104 = scmp.eq.s32.totalorder %s21, 1
      %p105 = por %p103, %p104
      %p107 = scmp.ne.s32.totalorder %s90, %s106
      %p108 = scmp.eq.s32.totalorder %s21, 0
      %p109 = por %p107, %p108
      %p110 = scmp.le.s32.totalorder 1, %s15
      %p111 = scmp.lt.s32.totalorder %s15, 3
      %p112 = pnand %p110, %p111
      %p113 = pneg %p112
      // Predicated region
      $region9: #{spatial_attention.1} parent=5 // pred_check
        _
      $region10: #{spatial_attention.1} parent=5 // pred_check_branch
        %115 = sbr.rel (%p112) target = $region12
      $region11: #{spatial_attention.1} parent=5 // pred_region
        %s116 = ssub.s32 %s15, 1
        // Predicated region
        $region13: #{spatial_attention.1} parent=11 // pred_check
          %p117 = pneg %p48
        $region14: #{spatial_attention.1} parent=11 // pred_check_branch
          %119 = sbr.rel (%p117) target = $region16
        $region15: #{spatial_attention.1} parent=11 // pred_region
          %121 = vsyncadd [#allocation8], 0
          %s123 = sshll.u32 %s0, 4
          %s124 = int_to_ptr.vmem [resolvable:$true] %s123
          %126 = dma.vmem_to_smem %s124, 16, [#allocation5], [#allocation8]
        $region16: #{spatial_attention.1} parent=11 // pred_fallthru
          _
      $region12: #{spatial_attention.1} parent=5 // pred_fallthru
        _
      %p127 = scmp.lt.s32.totalorder %s15, 2
      // Predicated region
      $region17: #{spatial_attention.1} parent=5 // pred_check
        %p128 = pneg %p127
      $region18: #{spatial_attention.1} parent=5 // pred_check_branch
        %130 = sbr.rel (%p128) target = $region20
      $region19: #{spatial_attention.1} parent=5 // pred_region
        // Predicated region
        $region21: #{spatial_attention.1} parent=19 // pred_check
          %p131 = pneg %p70
        $region22: #{spatial_attention.1} parent=19 // pred_check_branch
          %133 = sbr.rel (%p131) target = $region24
        $region23: #{spatial_attention.1} parent=19 // pred_region
          %s134 = sand.u32 %s60, 1
          %s135 = scalar_lea.sflag [#allocation6], %s134
          %s136 = sand.u32 %s60, 1
          %s137 = smul.addr %s136, 256
          %s138 = scalar_lea.vmem [#allocation9], %s137
          %s139 = smul.u32 16, %s23
          %141 = vsyncadd %s135, 0
          %s142 = smul.addr %s139, 2
          %s143 = smul.addr %s22, 32
          %s144 = sadd.s32 %s142, %s143
          %s145 = smul.addr %s144, 8
          %s146 = scalar_lea.hbm %s1, %s145
          %s147 = sshll.u32 %s146, 4
          %s148 = int_to_ptr.hbm [resolvable:$true] %s147
          %s149 = sshll.u32 %s138, 4
          %s150 = int_to_ptr.vmem [resolvable:$true] %s149
          %155 = dma.hbm_to_vmem [thread:$0]  %s148, 4096, %s150, %s135, 128, 128, 8
        $region24: #{spatial_attention.1} parent=19 // pred_fallthru
          _
      $region20: #{spatial_attention.1} parent=5 // pred_fallthru
        _
      %p156 = scmp.le.s32.totalorder 1, %s15
      %p157 = scmp.lt.s32.totalorder %s15, 3
      %p158 = pnand %p156, %p157
      %p159 = pneg %p158
      // Predicated region
      $region25: #{spatial_attention.1} parent=5 // pred_check
        _
      $region26: #{spatial_attention.1} parent=5 // pred_check_branch
        %161 = sbr.rel (%p158) target = $region28
      $region27: #{spatial_attention.1} parent=5 // pred_region
        %s162 = ssub.s32 %s15, 1
        // Predicated region
        $region29: #{spatial_attention.1} parent=27 // pred_check
          %p163 = pneg %p48
        $region30: #{spatial_attention.1} parent=27 // pred_check_branch
          %165 = sbr.rel (%p163) target = $region32
        $region31: #{spatial_attention.1} parent=27 // pred_region
          %167 = dma.done [#allocation8], 16
        $region32: #{spatial_attention.1} parent=27 // pred_fallthru
          _
        %s168 = sand.u32 %s63, 1
        %s169 = scalar_lea.sflag [#allocation6], %s168
        %s170 = sand.u32 %s63, 1
        %s171 = smul.addr %s170, 256
        %s172 = scalar_lea.vmem [#allocation9], %s171
        // Predicated region
        $region33: #{spatial_attention.1} parent=27 // pred_check
          %p173 = pneg %p76
        $region34: #{spatial_attention.1} parent=27 // pred_check_branch
          %175 = sbr.rel (%p173) target = $region36
        $region35: #{spatial_attention.1} parent=27 // pred_region
          %177 = dma.done %s169, 4096
        $region36: #{spatial_attention.1} parent=27 // pred_fallthru
          _
        %178 = sfence
        %p179 = pneg %p48
        %p180 = pneg %p45
        %s181 = sand.u32 %s63, 1
        %s182 = scalar_lea.sflag [#allocation6], %s181
        %s183 = sand.u32 %s63, 1
        %s184 = smul.addr %s183, 256
        %s185 = scalar_lea.vmem [#allocation9], %s184
        %p186 = pneg %p76
        %p187 = pneg %p73
        %p188 = pneg %p102
        %p189 = pneg %p99
        %s190 = sand.u32 %s89, 1
        %s191 = scalar_lea.sflag [#allocation7], %s190
        %s192 = sand.u32 %s89, 1
        %s193 = smul.addr %s192, 16
        %s194 = scalar_lea.vmem [#allocation10], %s193
        %s195 = smul.u32 16, %s25
        %p196 = scmp.eq.s32.totalorder %s25, 0
        // Predicated region
        $region37: #{spatial_attention.1} parent=27 // pred_check
          %p197 = pneg %p196
        $region38: #{spatial_attention.1} parent=27 // pred_check_branch
          %199 = sbr.rel (%p197) target = $region40
        $region39: #{spatial_attention.1} parent=27 // pred_region
          %200 = vst [vmem:[#allocation2] sm:$0xff] 0.0
          %201 = vst [vmem:[#allocation2 + $0x8] sm:$0xff] 0.0
          %202 = vst [vmem:[#allocation3] sm:$0xff] -inf
          %203 = vst [vmem:[#allocation3 + $0x8] sm:$0xff] -inf
        $region40: #{spatial_attention.1} parent=27 // pred_fallthru
          _
        %v204 = vld [vmem:[%s172] sm:$0xff]
        %v205 = vld [vmem:[%s172 + $0x8] sm:$0xff]
        %v206 = vld [vmem:[%s172 + $0x10] sm:$0xff]
        %v207 = vld [vmem:[%s172 + $0x18] sm:$0xff]
        %v208 = vld [vmem:[%s172 + $0x20] sm:$0xff]
        %v209 = vld [vmem:[%s172 + $0x28] sm:$0xff]
        %v210 = vld [vmem:[%s172 + $0x30] sm:$0xff]
        %v211 = vld [vmem:[%s172 + $0x38] sm:$0xff]
        %v212 = vld [vmem:[%s172 + $0x40] sm:$0xff]
        %v213 = vld [vmem:[%s172 + $0x48] sm:$0xff]
        %v214 = vld [vmem:[%s172 + $0x50] sm:$0xff]
        %v215 = vld [vmem:[%s172 + $0x58] sm:$0xff]
        %v216 = vld [vmem:[%s172 + $0x60] sm:$0xff]
        %v217 = vld [vmem:[%s172 + $0x68] sm:$0xff]
        %v218 = vld [vmem:[%s172 + $0x70] sm:$0xff]
        %v219 = vld [vmem:[%s172 + $0x78] sm:$0xff]
        %v220 = vld [vmem:[%s172 + $0x80] sm:$0xff]
        %v221 = vld [vmem:[%s172 + $0x88] sm:$0xff]
        %v222 = vld [vmem:[%s172 + $0x90] sm:$0xff]
        %v223 = vld [vmem:[%s172 + $0x98] sm:$0xff]
        %v224 = vld [vmem:[%s172 + $0xa0] sm:$0xff]
        %v225 = vld [vmem:[%s172 + $0xa8] sm:$0xff]
        %v226 = vld [vmem:[%s172 + $0xb0] sm:$0xff]
        %v227 = vld [vmem:[%s172 + $0xb8] sm:$0xff]
        %v228 = vld [vmem:[%s172 + $0xc0] sm:$0xff]
        %v229 = vld [vmem:[%s172 + $0xc8] sm:$0xff]
        %v230 = vld [vmem:[%s172 + $0xd0] sm:$0xff]
        %v231 = vld [vmem:[%s172 + $0xd8] sm:$0xff]
        %v232 = vld [vmem:[%s172 + $0xe0] sm:$0xff]
        %v233 = vld [vmem:[%s172 + $0xe8] sm:$0xff]
        %v234 = vld [vmem:[%s172 + $0xf0] sm:$0xff]
        %v235 = vld [vmem:[%s172 + $0xf8] sm:$0xff]
        %v236 = vld [vmem:[#allocation2] sm:$0xff]
        %v237 = vld [vmem:[#allocation2 + $0x8] sm:$0xff]
        %v238 = vadd.f32 %v204, %v206
        %v239 = vadd.f32 %v238, %v208
        %v240 = vadd.f32 %v239, %v210
        %v241 = vadd.f32 %v240, %v212
        %v242 = vadd.f32 %v241, %v214
        %v243 = vadd.f32 %v242, %v216
        %v244 = vadd.f32 %v243, %v218
        %v245 = vadd.f32 %v244, %v220
        %v246 = vadd.f32 %v245, %v222
        %v247 = vadd.f32 %v246, %v224
        %v248 = vadd.f32 %v247, %v226
        %v249 = vadd.f32 %v248, %v228
        %v250 = vadd.f32 %v249, %v230
        %v251 = vadd.f32 %v250, %v232
        %v252 = vadd.f32 %v251, %v234
        %v253 = vadd.f32 %v205, %v207
        %v254 = vadd.f32 %v253, %v209
        %v255 = vadd.f32 %v254, %v211
        %v256 = vadd.f32 %v255, %v213
        %v257 = vadd.f32 %v256, %v215
        %v258 = vadd.f32 %v257, %v217
        %v259 = vadd.f32 %v258, %v219
        %v260 = vadd.f32 %v259, %v221
        %v261 = vadd.f32 %v260, %v223
        %v262 = vadd.f32 %v261, %v225
        %v263 = vadd.f32 %v262, %v227
        %v264 = vadd.f32 %v263, %v229
        %v265 = vadd.f32 %v264, %v231
        %v266 = vadd.f32 %v265, %v233
        %v267 = vadd.f32 %v266, %v235
        %v268 = vadd.f32 %v236, %v252
        %v269 = vadd.f32 %v237, %v267
        %270 = vst [vmem:[#allocation2] sm:$0xff] %v268
        %271 = vst [vmem:[#allocation2 + $0x8] sm:$0xff] %v269
        %v272 = vld [vmem:[#allocation3] sm:$0xff]
        %v273 = vld [vmem:[#allocation3 + $0x8] sm:$0xff]
        %v274 = vmax.f32 %v204, %v208
        %v275 = vmax.f32 %v206, %v210
        %v276 = vmax.f32 %v274, %v212
        %v277 = vmax.f32 %v275, %v214
        %v278 = vmax.f32 %v276, %v216
        %v279 = vmax.f32 %v277, %v218
        %v280 = vmax.f32 %v278, %v220
        %v281 = vmax.f32 %v279, %v222
        %v282 = vmax.f32 %v280, %v224
        %v283 = vmax.f32 %v281, %v226
        %v284 = vmax.f32 %v282, %v228
        %v285 = vmax.f32 %v283, %v230
        %v286 = vmax.f32 %v284, %v232
        %v287 = vmax.f32 %v285, %v234
        %v288 = vmax.f32 %v286, %v287
        %v289 = vmax.f32 %v205, %v209
        %v290 = vmax.f32 %v207, %v211
        %v291 = vmax.f32 %v289, %v213
        %v292 = vmax.f32 %v290, %v215
        %v293 = vmax.f32 %v291, %v217
        %v294 = vmax.f32 %v292, %v219
        %v295 = vmax.f32 %v293, %v221
        %v296 = vmax.f32 %v294, %v223
        %v297 = vmax.f32 %v295, %v225
        %v298 = vmax.f32 %v296, %v227
        %v299 = vmax.f32 %v297, %v229
        %v300 = vmax.f32 %v298, %v231
        %v301 = vmax.f32 %v299, %v233
        %v302 = vmax.f32 %v300, %v235
        %v303 = vmax.f32 %v301, %v302
        %v304 = vmax.f32 %v272, %v288
        %v305 = vmax.f32 %v273, %v303
        %306 = vst [vmem:[#allocation3] sm:$0xff] %v304
        %307 = vst [vmem:[#allocation3 + $0x8] sm:$0xff] %v305
        // Predicated region
        $region41: #{spatial_attention.1} parent=27 // pred_check
          %p308 = pneg %p196
        $region42: #{spatial_attention.1} parent=27 // pred_check_branch
          %310 = sbr.rel (%p308) target = $region44
        $region43: #{spatial_attention.1} parent=27 // pred_region
          %311 = vst [vmem:[#allocation4] sm:$0xff] 0.0
          %vm312 = vcmask 48128
          %313 = vst.msk [vmem:[#allocation4 + $0x8] sm:$0xff] %vm312, 0.0
          %314 = vst [vmem:[#allocation4 + $0x10] sm:$0xff] 0.0
          %315 = vst.msk [vmem:[#allocation4 + $0x18] sm:$0xff] %vm312, 0.0
          %316 = vst [vmem:[#allocation4 + $0x20] sm:$0x3f] 0.0
          %vm317 = vcmask 46080
          %318 = vst.msk [vmem:[#allocation4 + $0x28] sm:$0x3f] %vm317, 0.0
          %319 = vst [vmem:[#allocation4 + $0x30] sm:$0xff] 0.0
          %320 = vst.msk [vmem:[#allocation4 + $0x38] sm:$0xff] %vm312, 0.0
          %321 = vst [vmem:[#allocation4 + $0x40] sm:$0xff] 0.0
          %322 = vst.msk [vmem:[#allocation4 + $0x48] sm:$0xff] %vm312, 0.0
          %323 = vst [vmem:[#allocation4 + $0x50] sm:$0x3f] 0.0
          %324 = vst.msk [vmem:[#allocation4 + $0x58] sm:$0x3f] %vm317, 0.0
          %v325 = vld [vmem:[#allocation2] sm:$0xff]
          %v326 = vld [vmem:[#allocation2 + $0x8] sm:$0xff]
          %vm329 = vcmask 1042432
          %v330 = vrot.slane %v325, 5
          %v331 = vrot.slane %v326, 5
          %v332 = vsel %vm329, %v330, %v331
          %333 = vrot.lane.b32.xlu0 %v330, 3
          %v334 = vpop.permute.xlu0 %333
          %335 = vrot.lane.b32.xlu0 %v332, 3
          %v336 = vpop.permute.xlu0 %335
          %337 = vrot.lane.b32.xlu0 %v331, 3
          %v338 = vpop.permute.xlu0 %337
          %vm342 = vcmask 1047579
          %343 = vst.msk [vmem:[#allocation4] sm:$0xf8] %vm342, %v334
          %vm344 = vcmask 23555
          %345 = vst.msk [vmem:[#allocation4 + $0x8] sm:$0xf8] %vm344, %v334
          %vm346 = vcmask 1047576
          %347 = vst.msk [vmem:[#allocation4 + $0x10] sm:$0xff] %vm346, %v336
          %vm348 = vcmask 23552
          %349 = vst.msk [vmem:[#allocation4 + $0x18] sm:$0xff] %vm348, %v336
          %vm350 = vcmask 1042456
          %351 = vst.msk [vmem:[#allocation4 + $0x20] sm:$0x7] %vm350, %v338
          %vm352 = vcmask 18432
          %353 = vst.msk [vmem:[#allocation4 + $0x28] sm:$0x7] %vm352, %v338
          %v354 = vld [vmem:[#allocation3] sm:$0xff]
          %v355 = vld [vmem:[#allocation3 + $0x8] sm:$0xff]
          %v358 = vrot.slane %v354, 5
          %v359 = vrot.slane %v355, 5
          %v360 = vsel %vm329, %v358, %v359
          %361 = vrot.lane.b32.xlu0 %v358, 3
          %v362 = vpop.permute.xlu0 %361
          %363 = vrot.lane.b32.xlu0 %v360, 3
          %v364 = vpop.permute.xlu0 %363
          %365 = vrot.lane.b32.xlu0 %v359, 3
          %v366 = vpop.permute.xlu0 %365
          %s370 = scalar_lea.vmem [#allocation4], 48
          %371 = vst.msk [vmem:[%s370] sm:$0xf8] %vm342, %v362
          %372 = vst.msk [vmem:[%s370 + $0x8] sm:$0xf8] %vm344, %v362
          %373 = vst.msk [vmem:[%s370 + $0x10] sm:$0xff] %vm346, %v364
          %374 = vst.msk [vmem:[%s370 + $0x18] sm:$0xff] %vm348, %v364
          %375 = vst.msk [vmem:[%s370 + $0x20] sm:$0x7] %vm350, %v366
          %376 = vst.msk [vmem:[%s370 + $0x28] sm:$0x7] %vm352, %v366
          %s377 = sld [smem:[#allocation5 + $0x62]]
          %v378 = vstv %s377
          %v379 = vld [vmem:[#allocation4] sm:$0xff]
          %v380 = vld [vmem:[#allocation4 + $0x10] sm:$0xff]
          %v381 = vld [vmem:[#allocation4 + $0x20] sm:$0x3f]
          %s382 = sld [smem:[#allocation5]]
          %v383 = vstv %s382
          %v384 = vmul.f32 %v383, %v379
          %v385 = vmul.f32 %v383, %v380
          %v386 = vadd.f32 %v378, %v384
          %v387 = vadd.f32 %v378, %v385
          %s388 = sld [smem:[#allocation5 + $0x7]]
          %v389 = vstv %s388
          %v390 = vmul.f32 %v389, %v379
          %v391 = vmul.f32 %v389, %v380
          %v392 = vmul.f32 %v389, %v381
          %vm396 = vcmask 1046528
          %v397 = vrot.slane %v390, 1
          %v398 = vrot.slane %v391, 1
          %v399 = vsel %vm396, %v397, %v398
          %v400 = vrot.slane %v392, 1
          %v401 = vsel %vm396, %v398, %v400
          %v404 = vadd.f32 %v386, %v399
          %v405 = vadd.f32 %v387, %v401
          %s406 = sld [smem:[#allocation5 + $0xe]]
          %v407 = vstv %s406
          %v408 = vmul.f32 %v407, %v379
          %v409 = vmul.f32 %v407, %v380
          %v410 = vmul.f32 %v407, %v381
          %vm414 = vcmask 1045504
          %v415 = vrot.slane %v408, 2
          %v416 = vrot.slane %v409, 2
          %v417 = vsel %vm414, %v415, %v416
          %v418 = vrot.slane %v410, 2
          %v419 = vsel %vm414, %v416, %v418
          %v422 = vadd.f32 %v404, %v417
          %v423 = vadd.f32 %v405, %v419
          %s424 = sld [smem:[#allocation5 + $0x15]]
          %v425 = vstv %s424
          %v426 = vmul.f32 %v425, %v379
          %v427 = vmul.f32 %v425, %v380
          %v428 = vmul.f32 %v425, %v381
          %vm432 = vcmask 1044480
          %v433 = vrot.slane %v426, 3
          %v434 = vrot.slane %v427, 3
          %v435 = vsel %vm432, %v433, %v434
          %v436 = vrot.slane %v428, 3
          %v437 = vsel %vm432, %v434, %v436
          %v440 = vadd.f32 %v422, %v435
          %v441 = vadd.f32 %v423, %v437
          %s442 = sld [smem:[#allocation5 + $0x1c]]
          %v443 = vstv %s442
          %v444 = vmul.f32 %v443, %v379
          %v445 = vmul.f32 %v443, %v380
          %v446 = vmul.f32 %v443, %v381
          %vm450 = vcmask 1043456
          %v451 = vrot.slane %v444, 4
          %v452 = vrot.slane %v445, 4
          %v453 = vsel %vm450, %v451, %v452
          %v454 = vrot.slane %v446, 4
          %v455 = vsel %vm450, %v452, %v454
          %v458 = vadd.f32 %v440, %v453
          %v459 = vadd.f32 %v441, %v455
          %s460 = sld [smem:[#allocation5 + $0x23]]
          %v461 = vstv %s460
          %v462 = vmul.f32 %v461, %v379
          %v463 = vmul.f32 %v461, %v380
          %v464 = vmul.f32 %v461, %v381
          %v468 = vrot.slane %v462, 5
          %v469 = vrot.slane %v463, 5
          %v470 = vsel %vm329, %v468, %v469
          %v471 = vrot.slane %v464, 5
          %v472 = vsel %vm329, %v469, %v471
          %v475 = vadd.f32 %v458, %v470
          %v476 = vadd.f32 %v459, %v472
          %s477 = sld [smem:[#allocation5 + $0x2a]]
          %v478 = vstv %s477
          %v479 = vmul.f32 %v478, %v379
          %v480 = vmul.f32 %v478, %v380
          %v481 = vmul.f32 %v478, %v381
          %vm485 = vcmask 1041408
          %v486 = vrot.slane %v479, 6
          %v487 = vrot.slane %v480, 6
          %v488 = vsel %vm485, %v486, %v487
          %v489 = vrot.slane %v481, 6
          %v490 = vsel %vm485, %v487, %v489
          %v493 = vadd.f32 %v475, %v488
          %v494 = vadd.f32 %v476, %v490
          %v495 = vld [vmem:[#allocation4] sm:$0xff]
          %v496 = vld [vmem:[#allocation4 + $0x8] sm:$0xff]
          %v497 = vld [vmem:[#allocation4 + $0x10] sm:$0xff]
          %v498 = vld [vmem:[#allocation4 + $0x18] sm:$0xff]
          %v499 = vld [vmem:[#allocation4 + $0x20] sm:$0x3f]
          %v500 = vld [vmem:[#allocation4 + $0x28] sm:$0x3f]
          %s501 = sld [smem:[#allocation5 + $0x1]]
          %v502 = vstv %s501
          %v503 = vmul.f32 %v502, %v495
          %v504 = vmul.f32 %v502, %v496
          %v505 = vmul.f32 %v502, %v497
          %v506 = vmul.f32 %v502, %v498
          %511 = vrot.lane.b32.xlu0 %v503, 127
          %v512 = vpop.permute.xlu0 %511
          %513 = vrot.lane.b32.xlu0 %v504, 127
          %v514 = vpop.permute.xlu0 %513
          %515 = vrot.lane.b32.xlu0 %v505, 127
          %v516 = vpop.permute.xlu0 %515
          %517 = vrot.lane.b32.xlu0 %v506, 127
          %v518 = vpop.permute.xlu0 %517
          %vm519 = vcmask 1039360
          %v520 = vsel %vm519, %v512, %v514
          %v521 = vsel %vm519, %v516, %v518
          %v524 = vadd.f32 %v493, %v520
          %v525 = vadd.f32 %v494, %v521
          %s526 = sld [smem:[#allocation5 + $0x8]]
          %v527 = vstv %s526
          %v528 = vmul.f32 %v527, %v495
          %v529 = vmul.f32 %v527, %v496
          %v530 = vmul.f32 %v527, %v497
          %v531 = vmul.f32 %v527, %v498
          %v532 = vmul.f32 %v527, %v499
          %v533 = vmul.f32 %v527, %v500
          %v540 = vrot.slane %v528, 1
          %v541 = vrot.slane %v530, 1
          %v542 = vsel %vm396, %v540, %v541
          %v543 = vrot.slane %v529, 1
          %v544 = vrot.slane %v531, 1
          %v545 = vsel %vm396, %v543, %v544
          %v546 = vrot.slane %v532, 1
          %v547 = vsel %vm396, %v541, %v546
          %v548 = vrot.slane %v533, 1
          %v549 = vsel %vm396, %v544, %v548
          %550 = vrot.lane.b32.xlu0 %v542, 127
          %v551 = vpop.permute.xlu0 %550
          %552 = vrot.lane.b32.xlu0 %v545, 127
          %v553 = vpop.permute.xlu0 %552
          %554 = vrot.lane.b32.xlu0 %v547, 127
          %v555 = vpop.permute.xlu0 %554
          %556 = vrot.lane.b32.xlu0 %v549, 127
          %v557 = vpop.permute.xlu0 %556
          %v558 = vsel %vm519, %v551, %v553
          %v559 = vsel %vm519, %v555, %v557
          %v562 = vadd.f32 %v524, %v558
          %v563 = vadd.f32 %v525, %v559
          %s564 = sld [smem:[#allocation5 + $0xf]]
          %v565 = vstv %s564
          %v566 = vmul.f32 %v565, %v495
          %v567 = vmul.f32 %v565, %v496
          %v568 = vmul.f32 %v565, %v497
          %v569 = vmul.f32 %v565, %v498
          %v570 = vmul.f32 %v565, %v499
          %v571 = vmul.f32 %v565, %v500
          %v578 = vrot.slane %v566, 2
          %v579 = vrot.slane %v568, 2
          %v580 = vsel %vm414, %v578, %v579
          %v581 = vrot.slane %v567, 2
          %v582 = vrot.slane %v569, 2
          %v583 = vsel %vm414, %v581, %v582
          %v584 = vrot.slane %v570, 2
          %v585 = vsel %vm414, %v579, %v584
          %v586 = vrot.slane %v571, 2
          %v587 = vsel %vm414, %v582, %v586
          %588 = vrot.lane.b32.xlu0 %v580, 127
          %v589 = vpop.permute.xlu0 %588
          %590 = vrot.lane.b32.xlu0 %v583, 127
          %v591 = vpop.permute.xlu0 %590
          %592 = vrot.lane.b32.xlu0 %v585, 127
          %v593 = vpop.permute.xlu0 %592
          %594 = vrot.lane.b32.xlu0 %v587, 127
          %v595 = vpop.permute.xlu0 %594
          %v596 = vsel %vm519, %v589, %v591
          %v597 = vsel %vm519, %v593, %v595
          %v600 = vadd.f32 %v562, %v596
          %v601 = vadd.f32 %v563, %v597
          %s602 = sld [smem:[#allocation5 + $0x16]]
          %v603 = vstv %s602
          %v604 = vmul.f32 %v603, %v495
          %v605 = vmul.f32 %v603, %v496
          %v606 = vmul.f32 %v603, %v497
          %v607 = vmul.f32 %v603, %v498
          %v608 = vmul.f32 %v603, %v499
          %v609 = vmul.f32 %v603, %v500
          %v616 = vrot.slane %v604, 3
          %v617 = vrot.slane %v606, 3
          %v618 = vsel %vm432, %v616, %v617
          %v619 = vrot.slane %v605, 3
          %v620 = vrot.slane %v607, 3
          %v621 = vsel %vm432, %v619, %v620
          %v622 = vrot.slane %v608, 3
          %v623 = vsel %vm432, %v617, %v622
          %v624 = vrot.slane %v609, 3
          %v625 = vsel %vm432, %v620, %v624
          %626 = vrot.lane.b32.xlu0 %v618, 127
          %v627 = vpop.permute.xlu0 %626
          %628 = vrot.lane.b32.xlu0 %v621, 127
          %v629 = vpop.permute.xlu0 %628
          %630 = vrot.lane.b32.xlu0 %v623, 127
          %v631 = vpop.permute.xlu0 %630
          %632 = vrot.lane.b32.xlu0 %v625, 127
          %v633 = vpop.permute.xlu0 %632
          %v634 = vsel %vm519, %v627, %v629
          %v635 = vsel %vm519, %v631, %v633
          %v638 = vadd.f32 %v600, %v634
          %v639 = vadd.f32 %v601, %v635
          %s640 = sld [smem:[#allocation5 + $0x1d]]
          %v641 = vstv %s640
          %v642 = vmul.f32 %v641, %v495
          %v643 = vmul.f32 %v641, %v496
          %v644 = vmul.f32 %v641, %v497
          %v645 = vmul.f32 %v641, %v498
          %v646 = vmul.f32 %v641, %v499
          %v647 = vmul.f32 %v641, %v500
          %v654 = vrot.slane %v642, 4
          %v655 = vrot.slane %v644, 4
          %v656 = vsel %vm450, %v654, %v655
          %v657 = vrot.slane %v643, 4
          %v658 = vrot.slane %v645, 4
          %v659 = vsel %vm450, %v657, %v658
          %v660 = vrot.slane %v646, 4
          %v661 = vsel %vm450, %v655, %v660
          %v662 = vrot.slane %v647, 4
          %v663 = vsel %vm450, %v658, %v662
          %664 = vrot.lane.b32.xlu0 %v656, 127
          %v665 = vpop.permute.xlu0 %664
          %666 = vrot.lane.b32.xlu0 %v659, 127
          %v667 = vpop.permute.xlu0 %666
          %668 = vrot.lane.b32.xlu0 %v661, 127
          %v669 = vpop.permute.xlu0 %668
          %670 = vrot.lane.b32.xlu0 %v663, 127
          %v671 = vpop.permute.xlu0 %670
          %v672 = vsel %vm519, %v665, %v667
          %v673 = vsel %vm519, %v669, %v671
          %v676 = vadd.f32 %v638, %v672
          %v677 = vadd.f32 %v639, %v673
          %s678 = sld [smem:[#allocation5 + $0x24]]
          %v679 = vstv %s678
          %v680 = vmul.f32 %v679, %v495
          %v681 = vmul.f32 %v679, %v496
          %v682 = vmul.f32 %v679, %v497
          %v683 = vmul.f32 %v679, %v498
          %v684 = vmul.f32 %v679, %v499
          %v685 = vmul.f32 %v679, %v500
          %v692 = vrot.slane %v680, 5
          %v693 = vrot.slane %v682, 5
          %v694 = vsel %vm329, %v692, %v693
          %v695 = vrot.slane %v681, 5
          %v696 = vrot.slane %v683, 5
          %v697 = vsel %vm329, %v695, %v696
          %v698 = vrot.slane %v684, 5
          %v699 = vsel %vm329, %v693, %v698
          %v700 = vrot.slane %v685, 5
          %v701 = vsel %vm329, %v696, %v700
          %702 = vrot.lane.b32.xlu0 %v694, 127
          %v703 = vpop.permute.xlu0 %702
          %704 = vrot.lane.b32.xlu0 %v697, 127
          %v705 = vpop.permute.xlu0 %704
          %706 = vrot.lane.b32.xlu0 %v699, 127
          %v707 = vpop.permute.xlu0 %706
          %708 = vrot.lane.b32.xlu0 %v701, 127
          %v709 = vpop.permute.xlu0 %708
          %v710 = vsel %vm519, %v703, %v705
          %v711 = vsel %vm519, %v707, %v709
          %v714 = vadd.f32 %v676, %v710
          %v715 = vadd.f32 %v677, %v711
          %s716 = sld [smem:[#allocation5 + $0x2b]]
          %v717 = vstv %s716
          %v718 = vmul.f32 %v717, %v495
          %v719 = vmul.f32 %v717, %v496
          %v720 = vmul.f32 %v717, %v497
          %v721 = vmul.f32 %v717, %v498
          %v722 = vmul.f32 %v717, %v499
          %v723 = vmul.f32 %v717, %v500
          %v730 = vrot.slane %v718, 6
          %v731 = vrot.slane %v720, 6
          %v732 = vsel %vm485, %v730, %v731
          %v733 = vrot.slane %v719, 6
          %v734 = vrot.slane %v721, 6
          %v735 = vsel %vm485, %v733, %v734
          %v736 = vrot.slane %v722, 6
          %v737 = vsel %vm485, %v731, %v736
          %v738 = vrot.slane %v723, 6
          %v739 = vsel %vm485, %v734, %v738
          %740 = vrot.lane.b32.xlu0 %v732, 127
          %v741 = vpop.permute.xlu0 %740
          %742 = vrot.lane.b32.xlu0 %v735, 127
          %v743 = vpop.permute.xlu0 %742
          %744 = vrot.lane.b32.xlu0 %v737, 127
          %v745 = vpop.permute.xlu0 %744
          %746 = vrot.lane.b32.xlu0 %v739, 127
          %v747 = vpop.permute.xlu0 %746
          %v748 = vsel %vm519, %v741, %v743
          %v749 = vsel %vm519, %v745, %v747
          %v752 = vadd.f32 %v714, %v748
          %v753 = vadd.f32 %v715, %v749
          %s754 = sld [smem:[#allocation5 + $0x2]]
          %v755 = vstv %s754
          %v756 = vmul.f32 %v755, %v495
          %v757 = vmul.f32 %v755, %v496
          %v758 = vmul.f32 %v755, %v497
          %v759 = vmul.f32 %v755, %v498
          %764 = vrot.lane.b32.xlu0 %v756, 126
          %v765 = vpop.permute.xlu0 %764
          %766 = vrot.lane.b32.xlu0 %v757, 126
          %v767 = vpop.permute.xlu0 %766
          %768 = vrot.lane.b32.xlu0 %v758, 126
          %v769 = vpop.permute.xlu0 %768
          %770 = vrot.lane.b32.xlu0 %v759, 126
          %v771 = vpop.permute.xlu0 %770
          %vm772 = vcmask 1031168
          %v773 = vsel %vm772, %v765, %v767
          %v774 = vsel %vm772, %v769, %v771
          %v777 = vadd.f32 %v752, %v773
          %v778 = vadd.f32 %v753, %v774
          %s779 = sld [smem:[#allocation5 + $0x9]]
          %v780 = vstv %s779
          %v781 = vmul.f32 %v780, %v495
          %v782 = vmul.f32 %v780, %v496
          %v783 = vmul.f32 %v780, %v497
          %v784 = vmul.f32 %v780, %v498
          %v785 = vmul.f32 %v780, %v499
          %v786 = vmul.f32 %v780, %v500
          %v793 = vrot.slane %v781, 1
          %v794 = vrot.slane %v783, 1
          %v795 = vsel %vm396, %v793, %v794
          %v796 = vrot.slane %v782, 1
          %v797 = vrot.slane %v784, 1
          %v798 = vsel %vm396, %v796, %v797
          %v799 = vrot.slane %v785, 1
          %v800 = vsel %vm396, %v794, %v799
          %v801 = vrot.slane %v786, 1
          %v802 = vsel %vm396, %v797, %v801
          %803 = vrot.lane.b32.xlu0 %v795, 126
          %v804 = vpop.permute.xlu0 %803
          %805 = vrot.lane.b32.xlu0 %v798, 126
          %v806 = vpop.permute.xlu0 %805
          %807 = vrot.lane.b32.xlu0 %v800, 126
          %v808 = vpop.permute.xlu0 %807
          %809 = vrot.lane.b32.xlu0 %v802, 126
          %v810 = vpop.permute.xlu0 %809
          %v811 = vsel %vm772, %v804, %v806
          %v812 = vsel %vm772, %v808, %v810
          %v815 = vadd.f32 %v777, %v811
          %v816 = vadd.f32 %v778, %v812
          %s817 = sld [smem:[#allocation5 + $0x10]]
          %v818 = vstv %s817
          %v819 = vmul.f32 %v818, %v495
          %v820 = vmul.f32 %v818, %v496
          %v821 = vmul.f32 %v818, %v497
          %v822 = vmul.f32 %v818, %v498
          %v823 = vmul.f32 %v818, %v499
          %v824 = vmul.f32 %v818, %v500
          %v831 = vrot.slane %v819, 2
          %v832 = vrot.slane %v821, 2
          %v833 = vsel %vm414, %v831, %v832
          %v834 = vrot.slane %v820, 2
          %v835 = vrot.slane %v822, 2
          %v836 = vsel %vm414, %v834, %v835
          %v837 = vrot.slane %v823, 2
          %v838 = vsel %vm414, %v832, %v837
          %v839 = vrot.slane %v824, 2
          %v840 = vsel %vm414, %v835, %v839
          %841 = vrot.lane.b32.xlu0 %v833, 126
          %v842 = vpop.permute.xlu0 %841
          %843 = vrot.lane.b32.xlu0 %v836, 126
          %v844 = vpop.permute.xlu0 %843
          %845 = vrot.lane.b32.xlu0 %v838, 126
          %v846 = vpop.permute.xlu0 %845
          %847 = vrot.lane.b32.xlu0 %v840, 126
          %v848 = vpop.permute.xlu0 %847
          %v849 = vsel %vm772, %v842, %v844
          %v850 = vsel %vm772, %v846, %v848
          %v853 = vadd.f32 %v815, %v849
          %v854 = vadd.f32 %v816, %v850
          %s855 = sld [smem:[#allocation5 + $0x17]]
          %v856 = vstv %s855
          %v857 = vmul.f32 %v856, %v495
          %v858 = vmul.f32 %v856, %v496
          %v859 = vmul.f32 %v856, %v497
          %v860 = vmul.f32 %v856, %v498
          %v861 = vmul.f32 %v856, %v499
          %v862 = vmul.f32 %v856, %v500
          %v869 = vrot.slane %v857, 3
          %v870 = vrot.slane %v859, 3
          %v871 = vsel %vm432, %v869, %v870
          %v872 = vrot.slane %v858, 3
          %v873 = vrot.slane %v860, 3
          %v874 = vsel %vm432, %v872, %v873
          %v875 = vrot.slane %v861, 3
          %v876 = vsel %vm432, %v870, %v875
          %v877 = vrot.slane %v862, 3
          %v878 = vsel %vm432, %v873, %v877
          %879 = vrot.lane.b32.xlu0 %v871, 126
          %v880 = vpop.permute.xlu0 %879
          %881 = vrot.lane.b32.xlu0 %v874, 126
          %v882 = vpop.permute.xlu0 %881
          %883 = vrot.lane.b32.xlu0 %v876, 126
          %v884 = vpop.permute.xlu0 %883
          %885 = vrot.lane.b32.xlu0 %v878, 126
          %v886 = vpop.permute.xlu0 %885
          %v887 = vsel %vm772, %v880, %v882
          %v888 = vsel %vm772, %v884, %v886
          %v891 = vadd.f32 %v853, %v887
          %v892 = vadd.f32 %v854, %v888
          %s893 = sld [smem:[#allocation5 + $0x1e]]
          %v894 = vstv %s893
          %v895 = vmul.f32 %v894, %v495
          %v896 = vmul.f32 %v894, %v496
          %v897 = vmul.f32 %v894, %v497
          %v898 = vmul.f32 %v894, %v498
          %v899 = vmul.f32 %v894, %v499
          %v900 = vmul.f32 %v894, %v500
          %v907 = vrot.slane %v895, 4
          %v908 = vrot.slane %v897, 4
          %v909 = vsel %vm450, %v907, %v908
          %v910 = vrot.slane %v896, 4
          %v911 = vrot.slane %v898, 4
          %v912 = vsel %vm450, %v910, %v911
          %v913 = vrot.slane %v899, 4
          %v914 = vsel %vm450, %v908, %v913
          %v915 = vrot.slane %v900, 4
          %v916 = vsel %vm450, %v911, %v915
          %917 = vrot.lane.b32.xlu0 %v909, 126
          %v918 = vpop.permute.xlu0 %917
          %919 = vrot.lane.b32.xlu0 %v912, 126
          %v920 = vpop.permute.xlu0 %919
          %921 = vrot.lane.b32.xlu0 %v914, 126
          %v922 = vpop.permute.xlu0 %921
          %923 = vrot.lane.b32.xlu0 %v916, 126
          %v924 = vpop.permute.xlu0 %923
          %v925 = vsel %vm772, %v918, %v920
          %v926 = vsel %vm772, %v922, %v924
          %v929 = vadd.f32 %v891, %v925
          %v930 = vadd.f32 %v892, %v926
          %s931 = sld [smem:[#allocation5 + $0x25]]
          %v932 = vstv %s931
          %v933 = vmul.f32 %v932, %v495
          %v934 = vmul.f32 %v932, %v496
          %v935 = vmul.f32 %v932, %v497
          %v936 = vmul.f32 %v932, %v498
          %v937 = vmul.f32 %v932, %v499
          %v938 = vmul.f32 %v932, %v500
          %v945 = vrot.slane %v933, 5
          %v946 = vrot.slane %v935, 5
          %v947 = vsel %vm329, %v945, %v946
          %v948 = vrot.slane %v934, 5
          %v949 = vrot.slane %v936, 5
          %v950 = vsel %vm329, %v948, %v949
          %v951 = vrot.slane %v937, 5
          %v952 = vsel %vm329, %v946, %v951
          %v953 = vrot.slane %v938, 5
          %v954 = vsel %vm329, %v949, %v953
          %955 = vrot.lane.b32.xlu0 %v947, 126
          %v956 = vpop.permute.xlu0 %955
          %957 = vrot.lane.b32.xlu0 %v950, 126
          %v958 = vpop.permute.xlu0 %957
          %959 = vrot.lane.b32.xlu0 %v952, 126
          %v960 = vpop.permute.xlu0 %959
          %961 = vrot.lane.b32.xlu0 %v954, 126
          %v962 = vpop.permute.xlu0 %961
          %v963 = vsel %vm772, %v956, %v958
          %v964 = vsel %vm772, %v960, %v962
          %v967 = vadd.f32 %v929, %v963
          %v968 = vadd.f32 %v930, %v964
          %s969 = sld [smem:[#allocation5 + $0x2c]]
          %v970 = vstv %s969
          %v971 = vmul.f32 %v970, %v495
          %v972 = vmul.f32 %v970, %v496
          %v973 = vmul.f32 %v970, %v497
          %v974 = vmul.f32 %v970, %v498
          %v975 = vmul.f32 %v970, %v499
          %v976 = vmul.f32 %v970, %v500
          %v983 = vrot.slane %v971, 6
          %v984 = vrot.slane %v973, 6
          %v985 = vsel %vm485, %v983, %v984
          %v986 = vrot.slane %v972, 6
          %v987 = vrot.slane %v974, 6
          %v988 = vsel %vm485, %v986, %v987
          %v989 = vrot.slane %v975, 6
          %v990 = vsel %vm485, %v984, %v989
          %v991 = vrot.slane %v976, 6
          %v992 = vsel %vm485, %v987, %v991
          %993 = vrot.lane.b32.xlu0 %v985, 126
          %v994 = vpop.permute.xlu0 %993
          %995 = vrot.lane.b32.xlu0 %v988, 126
          %v996 = vpop.permute.xlu0 %995
          %997 = vrot.lane.b32.xlu0 %v990, 126
          %v998 = vpop.permute.xlu0 %997
          %999 = vrot.lane.b32.xlu0 %v992, 126
          %v1000 = vpop.permute.xlu0 %999
          %v1001 = vsel %vm772, %v994, %v996
          %v1002 = vsel %vm772, %v998, %v1000
          %v1005 = vadd.f32 %v967, %v1001
          %v1006 = vadd.f32 %v968, %v1002
          %s1007 = sld [smem:[#allocation5 + $0x3]]
          %v1008 = vstv %s1007
          %v1009 = vmul.f32 %v1008, %v495
          %v1010 = vmul.f32 %v1008, %v496
          %v1011 = vmul.f32 %v1008, %v497
          %v1012 = vmul.f32 %v1008, %v498
          %1017 = vrot.lane.b32.xlu0 %v1009, 125
          %v1018 = vpop.permute.xlu0 %1017
          %1019 = vrot.lane.b32.xlu0 %v1010, 125
          %v1020 = vpop.permute.xlu0 %1019
          %1021 = vrot.lane.b32.xlu0 %v1011, 125
          %v1022 = vpop.permute.xlu0 %1021
          %1023 = vrot.lane.b32.xlu0 %v1012, 125
          %v1024 = vpop.permute.xlu0 %1023
          %vm1025 = vcmask 1022976
          %v1026 = vsel %vm1025, %v1018, %v1020
          %v1027 = vsel %vm1025, %v1022, %v1024
          %v1030 = vadd.f32 %v1005, %v1026
          %v1031 = vadd.f32 %v1006, %v1027
          %s1032 = sld [smem:[#allocation5 + $0xa]]
          %v1033 = vstv %s1032
          %v1034 = vmul.f32 %v1033, %v495
          %v1035 = vmul.f32 %v1033, %v496
          %v1036 = vmul.f32 %v1033, %v497
          %v1037 = vmul.f32 %v1033, %v498
          %v1038 = vmul.f32 %v1033, %v499
          %v1039 = vmul.f32 %v1033, %v500
          %v1046 = vrot.slane %v1034, 1
          %v1047 = vrot.slane %v1036, 1
          %v1048 = vsel %vm396, %v1046, %v1047
          %v1049 = vrot.slane %v1035, 1
          %v1050 = vrot.slane %v1037, 1
          %v1051 = vsel %vm396, %v1049, %v1050
          %v1052 = vrot.slane %v1038, 1
          %v1053 = vsel %vm396, %v1047, %v1052
          %v1054 = vrot.slane %v1039, 1
          %v1055 = vsel %vm396, %v1050, %v1054
          %1056 = vrot.lane.b32.xlu0 %v1048, 125
          %v1057 = vpop.permute.xlu0 %1056
          %1058 = vrot.lane.b32.xlu0 %v1051, 125
          %v1059 = vpop.permute.xlu0 %1058
          %1060 = vrot.lane.b32.xlu0 %v1053, 125
          %v1061 = vpop.permute.xlu0 %1060
          %1062 = vrot.lane.b32.xlu0 %v1055, 125
          %v1063 = vpop.permute.xlu0 %1062
          %v1064 = vsel %vm1025, %v1057, %v1059
          %v1065 = vsel %vm1025, %v1061, %v1063
          %v1068 = vadd.f32 %v1030, %v1064
          %v1069 = vadd.f32 %v1031, %v1065
          %s1070 = sld [smem:[#allocation5 + $0x11]]
          %v1071 = vstv %s1070
          %v1072 = vmul.f32 %v1071, %v495
          %v1073 = vmul.f32 %v1071, %v496
          %v1074 = vmul.f32 %v1071, %v497
          %v1075 = vmul.f32 %v1071, %v498
          %v1076 = vmul.f32 %v1071, %v499
          %v1077 = vmul.f32 %v1071, %v500
          %v1084 = vrot.slane %v1072, 2
          %v1085 = vrot.slane %v1074, 2
          %v1086 = vsel %vm414, %v1084, %v1085
          %v1087 = vrot.slane %v1073, 2
          %v1088 = vrot.slane %v1075, 2
          %v1089 = vsel %vm414, %v1087, %v1088
          %v1090 = vrot.slane %v1076, 2
          %v1091 = vsel %vm414, %v1085, %v1090
          %v1092 = vrot.slane %v1077, 2
          %v1093 = vsel %vm414, %v1088, %v1092
          %1094 = vrot.lane.b32.xlu0 %v1086, 125
          %v1095 = vpop.permute.xlu0 %1094
          %1096 = vrot.lane.b32.xlu0 %v1089, 125
          %v1097 = vpop.permute.xlu0 %1096
          %1098 = vrot.lane.b32.xlu0 %v1091, 125
          %v1099 = vpop.permute.xlu0 %1098
          %1100 = vrot.lane.b32.xlu0 %v1093, 125
          %v1101 = vpop.permute.xlu0 %1100
          %v1102 = vsel %vm1025, %v1095, %v1097
          %v1103 = vsel %vm1025, %v1099, %v1101
          %v1106 = vadd.f32 %v1068, %v1102
          %v1107 = vadd.f32 %v1069, %v1103
          %s1108 = sld [smem:[#allocation5 + $0x18]]
          %v1109 = vstv %s1108
          %v1110 = vmul.f32 %v1109, %v495
          %v1111 = vmul.f32 %v1109, %v496
          %v1112 = vmul.f32 %v1109, %v497
          %v1113 = vmul.f32 %v1109, %v498
          %v1114 = vmul.f32 %v1109, %v499
          %v1115 = vmul.f32 %v1109, %v500
          %v1122 = vrot.slane %v1110, 3
          %v1123 = vrot.slane %v1112, 3
          %v1124 = vsel %vm432, %v1122, %v1123
          %v1125 = vrot.slane %v1111, 3
          %v1126 = vrot.slane %v1113, 3
          %v1127 = vsel %vm432, %v1125, %v1126
          %v1128 = vrot.slane %v1114, 3
          %v1129 = vsel %vm432, %v1123, %v1128
          %v1130 = vrot.slane %v1115, 3
          %v1131 = vsel %vm432, %v1126, %v1130
          %1132 = vrot.lane.b32.xlu0 %v1124, 125
          %v1133 = vpop.permute.xlu0 %1132
          %1134 = vrot.lane.b32.xlu0 %v1127, 125
          %v1135 = vpop.permute.xlu0 %1134
          %1136 = vrot.lane.b32.xlu0 %v1129, 125
          %v1137 = vpop.permute.xlu0 %1136
          %1138 = vrot.lane.b32.xlu0 %v1131, 125
          %v1139 = vpop.permute.xlu0 %1138
          %v1140 = vsel %vm1025, %v1133, %v1135
          %v1141 = vsel %vm1025, %v1137, %v1139
          %v1144 = vadd.f32 %v1106, %v1140
          %v1145 = vadd.f32 %v1107, %v1141
          %s1146 = sld [smem:[#allocation5 + $0x1f]]
          %v1147 = vstv %s1146
          %v1148 = vmul.f32 %v1147, %v495
          %v1149 = vmul.f32 %v1147, %v496
          %v1150 = vmul.f32 %v1147, %v497
          %v1151 = vmul.f32 %v1147, %v498
          %v1152 = vmul.f32 %v1147, %v499
          %v1153 = vmul.f32 %v1147, %v500
          %v1160 = vrot.slane %v1148, 4
          %v1161 = vrot.slane %v1150, 4
          %v1162 = vsel %vm450, %v1160, %v1161
          %v1163 = vrot.slane %v1149, 4
          %v1164 = vrot.slane %v1151, 4
          %v1165 = vsel %vm450, %v1163, %v1164
          %v1166 = vrot.slane %v1152, 4
          %v1167 = vsel %vm450, %v1161, %v1166
          %v1168 = vrot.slane %v1153, 4
          %v1169 = vsel %vm450, %v1164, %v1168
          %1170 = vrot.lane.b32.xlu0 %v1162, 125
          %v1171 = vpop.permute.xlu0 %1170
          %1172 = vrot.lane.b32.xlu0 %v1165, 125
          %v1173 = vpop.permute.xlu0 %1172
          %1174 = vrot.lane.b32.xlu0 %v1167, 125
          %v1175 = vpop.permute.xlu0 %1174
          %1176 = vrot.lane.b32.xlu0 %v1169, 125
          %v1177 = vpop.permute.xlu0 %1176
          %v1178 = vsel %vm1025, %v1171, %v1173
          %v1179 = vsel %vm1025, %v1175, %v1177
          %v1182 = vadd.f32 %v1144, %v1178
          %v1183 = vadd.f32 %v1145, %v1179
          %s1184 = sld [smem:[#allocation5 + $0x26]]
          %v1185 = vstv %s1184
          %v1186 = vmul.f32 %v1185, %v495
          %v1187 = vmul.f32 %v1185, %v496
          %v1188 = vmul.f32 %v1185, %v497
          %v1189 = vmul.f32 %v1185, %v498
          %v1190 = vmul.f32 %v1185, %v499
          %v1191 = vmul.f32 %v1185, %v500
          %v1198 = vrot.slane %v1186, 5
          %v1199 = vrot.slane %v1188, 5
          %v1200 = vsel %vm329, %v1198, %v1199
          %v1201 = vrot.slane %v1187, 5
          %v1202 = vrot.slane %v1189, 5
          %v1203 = vsel %vm329, %v1201, %v1202
          %v1204 = vrot.slane %v1190, 5
          %v1205 = vsel %vm329, %v1199, %v1204
          %v1206 = vrot.slane %v1191, 5
          %v1207 = vsel %vm329, %v1202, %v1206
          %1208 = vrot.lane.b32.xlu0 %v1200, 125
          %v1209 = vpop.permute.xlu0 %1208
          %1210 = vrot.lane.b32.xlu0 %v1203, 125
          %v1211 = vpop.permute.xlu0 %1210
          %1212 = vrot.lane.b32.xlu0 %v1205, 125
          %v1213 = vpop.permute.xlu0 %1212
          %1214 = vrot.lane.b32.xlu0 %v1207, 125
          %v1215 = vpop.permute.xlu0 %1214
          %v1216 = vsel %vm1025, %v1209, %v1211
          %v1217 = vsel %vm1025, %v1213, %v1215
          %v1220 = vadd.f32 %v1182, %v1216
          %v1221 = vadd.f32 %v1183, %v1217
          %s1222 = sld [smem:[#allocation5 + $0x2d]]
          %v1223 = vstv %s1222
          %v1224 = vmul.f32 %v1223, %v495
          %v1225 = vmul.f32 %v1223, %v496
          %v1226 = vmul.f32 %v1223, %v497
          %v1227 = vmul.f32 %v1223, %v498
          %v1228 = vmul.f32 %v1223, %v499
          %v1229 = vmul.f32 %v1223, %v500
          %v1236 = vrot.slane %v1224, 6
          %v1237 = vrot.slane %v1226, 6
          %v1238 = vsel %vm485, %v1236, %v1237
          %v1239 = vrot.slane %v1225, 6
          %v1240 = vrot.slane %v1227, 6
          %v1241 = vsel %vm485, %v1239, %v1240
          %v1242 = vrot.slane %v1228, 6
          %v1243 = vsel %vm485, %v1237, %v1242
          %v1244 = vrot.slane %v1229, 6
          %v1245 = vsel %vm485, %v1240, %v1244
          %1246 = vrot.lane.b32.xlu0 %v1238, 125
          %v1247 = vpop.permute.xlu0 %1246
          %1248 = vrot.lane.b32.xlu0 %v1241, 125
          %v1249 = vpop.permute.xlu0 %1248
          %1250 = vrot.lane.b32.xlu0 %v1243, 125
          %v1251 = vpop.permute.xlu0 %1250
          %1252 = vrot.lane.b32.xlu0 %v1245, 125
          %v1253 = vpop.permute.xlu0 %1252
          %v1254 = vsel %vm1025, %v1247, %v1249
          %v1255 = vsel %vm1025, %v1251, %v1253
          %v1258 = vadd.f32 %v1220, %v1254
          %v1259 = vadd.f32 %v1221, %v1255
          %s1260 = sld [smem:[#allocation5 + $0x4]]
          %v1261 = vstv %s1260
          %v1262 = vmul.f32 %v1261, %v495
          %v1263 = vmul.f32 %v1261, %v496
          %v1264 = vmul.f32 %v1261, %v497
          %v1265 = vmul.f32 %v1261, %v498
          %1270 = vrot.lane.b32.xlu0 %v1262, 124
          %v1271 = vpop.permute.xlu0 %1270
          %1272 = vrot.lane.b32.xlu0 %v1263, 124
          %v1273 = vpop.permute.xlu0 %1272
          %1274 = vrot.lane.b32.xlu0 %v1264, 124
          %v1275 = vpop.permute.xlu0 %1274
          %1276 = vrot.lane.b32.xlu0 %v1265, 124
          %v1277 = vpop.permute.xlu0 %1276
          %vm1278 = vcmask 1014784
          %v1279 = vsel %vm1278, %v1271, %v1273
          %v1280 = vsel %vm1278, %v1275, %v1277
          %v1283 = vadd.f32 %v1258, %v1279
          %v1284 = vadd.f32 %v1259, %v1280
          %s1285 = sld [smem:[#allocation5 + $0xb]]
          %v1286 = vstv %s1285
          %v1287 = vmul.f32 %v1286, %v495
          %v1288 = vmul.f32 %v1286, %v496
          %v1289 = vmul.f32 %v1286, %v497
          %v1290 = vmul.f32 %v1286, %v498
          %v1291 = vmul.f32 %v1286, %v499
          %v1292 = vmul.f32 %v1286, %v500
          %v1299 = vrot.slane %v1287, 1
          %v1300 = vrot.slane %v1289, 1
          %v1301 = vsel %vm396, %v1299, %v1300
          %v1302 = vrot.slane %v1288, 1
          %v1303 = vrot.slane %v1290, 1
          %v1304 = vsel %vm396, %v1302, %v1303
          %v1305 = vrot.slane %v1291, 1
          %v1306 = vsel %vm396, %v1300, %v1305
          %v1307 = vrot.slane %v1292, 1
          %v1308 = vsel %vm396, %v1303, %v1307
          %1309 = vrot.lane.b32.xlu0 %v1301, 124
          %v1310 = vpop.permute.xlu0 %1309
          %1311 = vrot.lane.b32.xlu0 %v1304, 124
          %v1312 = vpop.permute.xlu0 %1311
          %1313 = vrot.lane.b32.xlu0 %v1306, 124
          %v1314 = vpop.permute.xlu0 %1313
          %1315 = vrot.lane.b32.xlu0 %v1308, 124
          %v1316 = vpop.permute.xlu0 %1315
          %v1317 = vsel %vm1278, %v1310, %v1312
          %v1318 = vsel %vm1278, %v1314, %v1316
          %v1321 = vadd.f32 %v1283, %v1317
          %v1322 = vadd.f32 %v1284, %v1318
          %s1323 = sld [smem:[#allocation5 + $0x12]]
          %v1324 = vstv %s1323
          %v1325 = vmul.f32 %v1324, %v495
          %v1326 = vmul.f32 %v1324, %v496
          %v1327 = vmul.f32 %v1324, %v497
          %v1328 = vmul.f32 %v1324, %v498
          %v1329 = vmul.f32 %v1324, %v499
          %v1330 = vmul.f32 %v1324, %v500
          %v1337 = vrot.slane %v1325, 2
          %v1338 = vrot.slane %v1327, 2
          %v1339 = vsel %vm414, %v1337, %v1338
          %v1340 = vrot.slane %v1326, 2
          %v1341 = vrot.slane %v1328, 2
          %v1342 = vsel %vm414, %v1340, %v1341
          %v1343 = vrot.slane %v1329, 2
          %v1344 = vsel %vm414, %v1338, %v1343
          %v1345 = vrot.slane %v1330, 2
          %v1346 = vsel %vm414, %v1341, %v1345
          %1347 = vrot.lane.b32.xlu0 %v1339, 124
          %v1348 = vpop.permute.xlu0 %1347
          %1349 = vrot.lane.b32.xlu0 %v1342, 124
          %v1350 = vpop.permute.xlu0 %1349
          %1351 = vrot.lane.b32.xlu0 %v1344, 124
          %v1352 = vpop.permute.xlu0 %1351
          %1353 = vrot.lane.b32.xlu0 %v1346, 124
          %v1354 = vpop.permute.xlu0 %1353
          %v1355 = vsel %vm1278, %v1348, %v1350
          %v1356 = vsel %vm1278, %v1352, %v1354
          %v1359 = vadd.f32 %v1321, %v1355
          %v1360 = vadd.f32 %v1322, %v1356
          %s1361 = sld [smem:[#allocation5 + $0x19]]
          %v1362 = vstv %s1361
          %v1363 = vmul.f32 %v1362, %v495
          %v1364 = vmul.f32 %v1362, %v496
          %v1365 = vmul.f32 %v1362, %v497
          %v1366 = vmul.f32 %v1362, %v498
          %v1367 = vmul.f32 %v1362, %v499
          %v1368 = vmul.f32 %v1362, %v500
          %v1375 = vrot.slane %v1363, 3
          %v1376 = vrot.slane %v1365, 3
          %v1377 = vsel %vm432, %v1375, %v1376
          %v1378 = vrot.slane %v1364, 3
          %v1379 = vrot.slane %v1366, 3
          %v1380 = vsel %vm432, %v1378, %v1379
          %v1381 = vrot.slane %v1367, 3
          %v1382 = vsel %vm432, %v1376, %v1381
          %v1383 = vrot.slane %v1368, 3
          %v1384 = vsel %vm432, %v1379, %v1383
          %1385 = vrot.lane.b32.xlu0 %v1377, 124
          %v1386 = vpop.permute.xlu0 %1385
          %1387 = vrot.lane.b32.xlu0 %v1380, 124
          %v1388 = vpop.permute.xlu0 %1387
          %1389 = vrot.lane.b32.xlu0 %v1382, 124
          %v1390 = vpop.permute.xlu0 %1389
          %1391 = vrot.lane.b32.xlu0 %v1384, 124
          %v1392 = vpop.permute.xlu0 %1391
          %v1393 = vsel %vm1278, %v1386, %v1388
          %v1394 = vsel %vm1278, %v1390, %v1392
          %v1397 = vadd.f32 %v1359, %v1393
          %v1398 = vadd.f32 %v1360, %v1394
          %s1399 = sld [smem:[#allocation5 + $0x20]]
          %v1400 = vstv %s1399
          %v1401 = vmul.f32 %v1400, %v495
          %v1402 = vmul.f32 %v1400, %v496
          %v1403 = vmul.f32 %v1400, %v497
          %v1404 = vmul.f32 %v1400, %v498
          %v1405 = vmul.f32 %v1400, %v499
          %v1406 = vmul.f32 %v1400, %v500
          %v1413 = vrot.slane %v1401, 4
          %v1414 = vrot.slane %v1403, 4
          %v1415 = vsel %vm450, %v1413, %v1414
          %v1416 = vrot.slane %v1402, 4
          %v1417 = vrot.slane %v1404, 4
          %v1418 = vsel %vm450, %v1416, %v1417
          %v1419 = vrot.slane %v1405, 4
          %v1420 = vsel %vm450, %v1414, %v1419
          %v1421 = vrot.slane %v1406, 4
          %v1422 = vsel %vm450, %v1417, %v1421
          %1423 = vrot.lane.b32.xlu0 %v1415, 124
          %v1424 = vpop.permute.xlu0 %1423
          %1425 = vrot.lane.b32.xlu0 %v1418, 124
          %v1426 = vpop.permute.xlu0 %1425
          %1427 = vrot.lane.b32.xlu0 %v1420, 124
          %v1428 = vpop.permute.xlu0 %1427
          %1429 = vrot.lane.b32.xlu0 %v1422, 124
          %v1430 = vpop.permute.xlu0 %1429
          %v1431 = vsel %vm1278, %v1424, %v1426
          %v1432 = vsel %vm1278, %v1428, %v1430
          %v1435 = vadd.f32 %v1397, %v1431
          %v1436 = vadd.f32 %v1398, %v1432
          %s1437 = sld [smem:[#allocation5 + $0x27]]
          %v1438 = vstv %s1437
          %v1439 = vmul.f32 %v1438, %v495
          %v1440 = vmul.f32 %v1438, %v496
          %v1441 = vmul.f32 %v1438, %v497
          %v1442 = vmul.f32 %v1438, %v498
          %v1443 = vmul.f32 %v1438, %v499
          %v1444 = vmul.f32 %v1438, %v500
          %v1451 = vrot.slane %v1439, 5
          %v1452 = vrot.slane %v1441, 5
          %v1453 = vsel %vm329, %v1451, %v1452
          %v1454 = vrot.slane %v1440, 5
          %v1455 = vrot.slane %v1442, 5
          %v1456 = vsel %vm329, %v1454, %v1455
          %v1457 = vrot.slane %v1443, 5
          %v1458 = vsel %vm329, %v1452, %v1457
          %v1459 = vrot.slane %v1444, 5
          %v1460 = vsel %vm329, %v1455, %v1459
          %1461 = vrot.lane.b32.xlu0 %v1453, 124
          %v1462 = vpop.permute.xlu0 %1461
          %1463 = vrot.lane.b32.xlu0 %v1456, 124
          %v1464 = vpop.permute.xlu0 %1463
          %1465 = vrot.lane.b32.xlu0 %v1458, 124
          %v1466 = vpop.permute.xlu0 %1465
          %1467 = vrot.lane.b32.xlu0 %v1460, 124
          %v1468 = vpop.permute.xlu0 %1467
          %v1469 = vsel %vm1278, %v1462, %v1464
          %v1470 = vsel %vm1278, %v1466, %v1468
          %v1473 = vadd.f32 %v1435, %v1469
          %v1474 = vadd.f32 %v1436, %v1470
          %s1475 = sld [smem:[#allocation5 + $0x2e]]
          %v1476 = vstv %s1475
          %v1477 = vmul.f32 %v1476, %v495
          %v1478 = vmul.f32 %v1476, %v496
          %v1479 = vmul.f32 %v1476, %v497
          %v1480 = vmul.f32 %v1476, %v498
          %v1481 = vmul.f32 %v1476, %v499
          %v1482 = vmul.f32 %v1476, %v500
          %v1489 = vrot.slane %v1477, 6
          %v1490 = vrot.slane %v1479, 6
          %v1491 = vsel %vm485, %v1489, %v1490
          %v1492 = vrot.slane %v1478, 6
          %v1493 = vrot.slane %v1480, 6
          %v1494 = vsel %vm485, %v1492, %v1493
          %v1495 = vrot.slane %v1481, 6
          %v1496 = vsel %vm485, %v1490, %v1495
          %v1497 = vrot.slane %v1482, 6
          %v1498 = vsel %vm485, %v1493, %v1497
          %1499 = vrot.lane.b32.xlu0 %v1491, 124
          %v1500 = vpop.permute.xlu0 %1499
          %1501 = vrot.lane.b32.xlu0 %v1494, 124
          %v1502 = vpop.permute.xlu0 %1501
          %1503 = vrot.lane.b32.xlu0 %v1496, 124
          %v1504 = vpop.permute.xlu0 %1503
          %1505 = vrot.lane.b32.xlu0 %v1498, 124
          %v1506 = vpop.permute.xlu0 %1505
          %v1507 = vsel %vm1278, %v1500, %v1502
          %v1508 = vsel %vm1278, %v1504, %v1506
          %v1511 = vadd.f32 %v1473, %v1507
          %v1512 = vadd.f32 %v1474, %v1508
          %s1513 = sld [smem:[#allocation5 + $0x5]]
          %v1514 = vstv %s1513
          %v1515 = vmul.f32 %v1514, %v495
          %v1516 = vmul.f32 %v1514, %v496
          %v1517 = vmul.f32 %v1514, %v497
          %v1518 = vmul.f32 %v1514, %v498
          %1523 = vrot.lane.b32.xlu0 %v1515, 123
          %v1524 = vpop.permute.xlu0 %1523
          %1525 = vrot.lane.b32.xlu0 %v1516, 123
          %v1526 = vpop.permute.xlu0 %1525
          %1527 = vrot.lane.b32.xlu0 %v1517, 123
          %v1528 = vpop.permute.xlu0 %1527
          %1529 = vrot.lane.b32.xlu0 %v1518, 123
          %v1530 = vpop.permute.xlu0 %1529
          %vm1531 = vcmask 1006592
          %v1532 = vsel %vm1531, %v1524, %v1526
          %v1533 = vsel %vm1531, %v1528, %v1530
          %v1536 = vadd.f32 %v1511, %v1532
          %v1537 = vadd.f32 %v1512, %v1533
          %s1538 = sld [smem:[#allocation5 + $0xc]]
          %v1539 = vstv %s1538
          %v1540 = vmul.f32 %v1539, %v495
          %v1541 = vmul.f32 %v1539, %v496
          %v1542 = vmul.f32 %v1539, %v497
          %v1543 = vmul.f32 %v1539, %v498
          %v1544 = vmul.f32 %v1539, %v499
          %v1545 = vmul.f32 %v1539, %v500
          %v1552 = vrot.slane %v1540, 1
          %v1553 = vrot.slane %v1542, 1
          %v1554 = vsel %vm396, %v1552, %v1553
          %v1555 = vrot.slane %v1541, 1
          %v1556 = vrot.slane %v1543, 1
          %v1557 = vsel %vm396, %v1555, %v1556
          %v1558 = vrot.slane %v1544, 1
          %v1559 = vsel %vm396, %v1553, %v1558
          %v1560 = vrot.slane %v1545, 1
          %v1561 = vsel %vm396, %v1556, %v1560
          %1562 = vrot.lane.b32.xlu0 %v1554, 123
          %v1563 = vpop.permute.xlu0 %1562
          %1564 = vrot.lane.b32.xlu0 %v1557, 123
          %v1565 = vpop.permute.xlu0 %1564
          %1566 = vrot.lane.b32.xlu0 %v1559, 123
          %v1567 = vpop.permute.xlu0 %1566
          %1568 = vrot.lane.b32.xlu0 %v1561, 123
          %v1569 = vpop.permute.xlu0 %1568
          %v1570 = vsel %vm1531, %v1563, %v1565
          %v1571 = vsel %vm1531, %v1567, %v1569
          %v1574 = vadd.f32 %v1536, %v1570
          %v1575 = vadd.f32 %v1537, %v1571
          %s1576 = sld [smem:[#allocation5 + $0x13]]
          %v1577 = vstv %s1576
          %v1578 = vmul.f32 %v1577, %v495
          %v1579 = vmul.f32 %v1577, %v496
          %v1580 = vmul.f32 %v1577, %v497
          %v1581 = vmul.f32 %v1577, %v498
          %v1582 = vmul.f32 %v1577, %v499
          %v1583 = vmul.f32 %v1577, %v500
          %v1590 = vrot.slane %v1578, 2
          %v1591 = vrot.slane %v1580, 2
          %v1592 = vsel %vm414, %v1590, %v1591
          %v1593 = vrot.slane %v1579, 2
          %v1594 = vrot.slane %v1581, 2
          %v1595 = vsel %vm414, %v1593, %v1594
          %v1596 = vrot.slane %v1582, 2
          %v1597 = vsel %vm414, %v1591, %v1596
          %v1598 = vrot.slane %v1583, 2
          %v1599 = vsel %vm414, %v1594, %v1598
          %1600 = vrot.lane.b32.xlu0 %v1592, 123
          %v1601 = vpop.permute.xlu0 %1600
          %1602 = vrot.lane.b32.xlu0 %v1595, 123
          %v1603 = vpop.permute.xlu0 %1602
          %1604 = vrot.lane.b32.xlu0 %v1597, 123
          %v1605 = vpop.permute.xlu0 %1604
          %1606 = vrot.lane.b32.xlu0 %v1599, 123
          %v1607 = vpop.permute.xlu0 %1606
          %v1608 = vsel %vm1531, %v1601, %v1603
          %v1609 = vsel %vm1531, %v1605, %v1607
          %v1612 = vadd.f32 %v1574, %v1608
          %v1613 = vadd.f32 %v1575, %v1609
          %s1614 = sld [smem:[#allocation5 + $0x1a]]
          %v1615 = vstv %s1614
          %v1616 = vmul.f32 %v1615, %v495
          %v1617 = vmul.f32 %v1615, %v496
          %v1618 = vmul.f32 %v1615, %v497
          %v1619 = vmul.f32 %v1615, %v498
          %v1620 = vmul.f32 %v1615, %v499
          %v1621 = vmul.f32 %v1615, %v500
          %v1628 = vrot.slane %v1616, 3
          %v1629 = vrot.slane %v1618, 3
          %v1630 = vsel %vm432, %v1628, %v1629
          %v1631 = vrot.slane %v1617, 3
          %v1632 = vrot.slane %v1619, 3
          %v1633 = vsel %vm432, %v1631, %v1632
          %v1634 = vrot.slane %v1620, 3
          %v1635 = vsel %vm432, %v1629, %v1634
          %v1636 = vrot.slane %v1621, 3
          %v1637 = vsel %vm432, %v1632, %v1636
          %1638 = vrot.lane.b32.xlu0 %v1630, 123
          %v1639 = vpop.permute.xlu0 %1638
          %1640 = vrot.lane.b32.xlu0 %v1633, 123
          %v1641 = vpop.permute.xlu0 %1640
          %1642 = vrot.lane.b32.xlu0 %v1635, 123
          %v1643 = vpop.permute.xlu0 %1642
          %1644 = vrot.lane.b32.xlu0 %v1637, 123
          %v1645 = vpop.permute.xlu0 %1644
          %v1646 = vsel %vm1531, %v1639, %v1641
          %v1647 = vsel %vm1531, %v1643, %v1645
          %v1650 = vadd.f32 %v1612, %v1646
          %v1651 = vadd.f32 %v1613, %v1647
          %s1652 = sld [smem:[#allocation5 + $0x21]]
          %v1653 = vstv %s1652
          %v1654 = vmul.f32 %v1653, %v495
          %v1655 = vmul.f32 %v1653, %v496
          %v1656 = vmul.f32 %v1653, %v497
          %v1657 = vmul.f32 %v1653, %v498
          %v1658 = vmul.f32 %v1653, %v499
          %v1659 = vmul.f32 %v1653, %v500
          %v1666 = vrot.slane %v1654, 4
          %v1667 = vrot.slane %v1656, 4
          %v1668 = vsel %vm450, %v1666, %v1667
          %v1669 = vrot.slane %v1655, 4
          %v1670 = vrot.slane %v1657, 4
          %v1671 = vsel %vm450, %v1669, %v1670
          %v1672 = vrot.slane %v1658, 4
          %v1673 = vsel %vm450, %v1667, %v1672
          %v1674 = vrot.slane %v1659, 4
          %v1675 = vsel %vm450, %v1670, %v1674
          %1676 = vrot.lane.b32.xlu0 %v1668, 123
          %v1677 = vpop.permute.xlu0 %1676
          %1678 = vrot.lane.b32.xlu0 %v1671, 123
          %v1679 = vpop.permute.xlu0 %1678
          %1680 = vrot.lane.b32.xlu0 %v1673, 123
          %v1681 = vpop.permute.xlu0 %1680
          %1682 = vrot.lane.b32.xlu0 %v1675, 123
          %v1683 = vpop.permute.xlu0 %1682
          %v1684 = vsel %vm1531, %v1677, %v1679
          %v1685 = vsel %vm1531, %v1681, %v1683
          %v1688 = vadd.f32 %v1650, %v1684
          %v1689 = vadd.f32 %v1651, %v1685
          %s1690 = sld [smem:[#allocation5 + $0x28]]
          %v1691 = vstv %s1690
          %v1692 = vmul.f32 %v1691, %v495
          %v1693 = vmul.f32 %v1691, %v496
          %v1694 = vmul.f32 %v1691, %v497
          %v1695 = vmul.f32 %v1691, %v498
          %v1696 = vmul.f32 %v1691, %v499
          %v1697 = vmul.f32 %v1691, %v500
          %v1704 = vrot.slane %v1692, 5
          %v1705 = vrot.slane %v1694, 5
          %v1706 = vsel %vm329, %v1704, %v1705
          %v1707 = vrot.slane %v1693, 5
          %v1708 = vrot.slane %v1695, 5
          %v1709 = vsel %vm329, %v1707, %v1708
          %v1710 = vrot.slane %v1696, 5
          %v1711 = vsel %vm329, %v1705, %v1710
          %v1712 = vrot.slane %v1697, 5
          %v1713 = vsel %vm329, %v1708, %v1712
          %1714 = vrot.lane.b32.xlu0 %v1706, 123
          %v1715 = vpop.permute.xlu0 %1714
          %1716 = vrot.lane.b32.xlu0 %v1709, 123
          %v1717 = vpop.permute.xlu0 %1716
          %1718 = vrot.lane.b32.xlu0 %v1711, 123
          %v1719 = vpop.permute.xlu0 %1718
          %1720 = vrot.lane.b32.xlu0 %v1713, 123
          %v1721 = vpop.permute.xlu0 %1720
          %v1722 = vsel %vm1531, %v1715, %v1717
          %v1723 = vsel %vm1531, %v1719, %v1721
          %v1726 = vadd.f32 %v1688, %v1722
          %v1727 = vadd.f32 %v1689, %v1723
          %s1728 = sld [smem:[#allocation5 + $0x2f]]
          %v1729 = vstv %s1728
          %v1730 = vmul.f32 %v1729, %v495
          %v1731 = vmul.f32 %v1729, %v496
          %v1732 = vmul.f32 %v1729, %v497
          %v1733 = vmul.f32 %v1729, %v498
          %v1734 = vmul.f32 %v1729, %v499
          %v1735 = vmul.f32 %v1729, %v500
          %v1742 = vrot.slane %v1730, 6
          %v1743 = vrot.slane %v1732, 6
          %v1744 = vsel %vm485, %v1742, %v1743
          %v1745 = vrot.slane %v1731, 6
          %v1746 = vrot.slane %v1733, 6
          %v1747 = vsel %vm485, %v1745, %v1746
          %v1748 = vrot.slane %v1734, 6
          %v1749 = vsel %vm485, %v1743, %v1748
          %v1750 = vrot.slane %v1735, 6
          %v1751 = vsel %vm485, %v1746, %v1750
          %1752 = vrot.lane.b32.xlu0 %v1744, 123
          %v1753 = vpop.permute.xlu0 %1752
          %1754 = vrot.lane.b32.xlu0 %v1747, 123
          %v1755 = vpop.permute.xlu0 %1754
          %1756 = vrot.lane.b32.xlu0 %v1749, 123
          %v1757 = vpop.permute.xlu0 %1756
          %1758 = vrot.lane.b32.xlu0 %v1751, 123
          %v1759 = vpop.permute.xlu0 %1758
          %v1760 = vsel %vm1531, %v1753, %v1755
          %v1761 = vsel %vm1531, %v1757, %v1759
          %v1764 = vadd.f32 %v1726, %v1760
          %v1765 = vadd.f32 %v1727, %v1761
          %s1766 = sld [smem:[#allocation5 + $0x6]]
          %v1767 = vstv %s1766
          %v1768 = vmul.f32 %v1767, %v495
          %v1769 = vmul.f32 %v1767, %v496
          %v1770 = vmul.f32 %v1767, %v497
          %v1771 = vmul.f32 %v1767, %v498
          %1776 = vrot.lane.b32.xlu0 %v1768, 122
          %v1777 = vpop.permute.xlu0 %1776
          %1778 = vrot.lane.b32.xlu0 %v1769, 122
          %v1779 = vpop.permute.xlu0 %1778
          %1780 = vrot.lane.b32.xlu0 %v1770, 122
          %v1781 = vpop.permute.xlu0 %1780
          %1782 = vrot.lane.b32.xlu0 %v1771, 122
          %v1783 = vpop.permute.xlu0 %1782
          %vm1784 = vcmask 998400
          %v1785 = vsel %vm1784, %v1777, %v1779
          %v1786 = vsel %vm1784, %v1781, %v1783
          %v1789 = vadd.f32 %v1764, %v1785
          %v1790 = vadd.f32 %v1765, %v1786
          %s1791 = sld [smem:[#allocation5 + $0xd]]
          %v1792 = vstv %s1791
          %v1793 = vmul.f32 %v1792, %v495
          %v1794 = vmul.f32 %v1792, %v496
          %v1795 = vmul.f32 %v1792, %v497
          %v1796 = vmul.f32 %v1792, %v498
          %v1797 = vmul.f32 %v1792, %v499
          %v1798 = vmul.f32 %v1792, %v500
          %v1805 = vrot.slane %v1793, 1
          %v1806 = vrot.slane %v1795, 1
          %v1807 = vsel %vm396, %v1805, %v1806
          %v1808 = vrot.slane %v1794, 1
          %v1809 = vrot.slane %v1796, 1
          %v1810 = vsel %vm396, %v1808, %v1809
          %v1811 = vrot.slane %v1797, 1
          %v1812 = vsel %vm396, %v1806, %v1811
          %v1813 = vrot.slane %v1798, 1
          %v1814 = vsel %vm396, %v1809, %v1813
          %1815 = vrot.lane.b32.xlu0 %v1807, 122
          %v1816 = vpop.permute.xlu0 %1815
          %1817 = vrot.lane.b32.xlu0 %v1810, 122
          %v1818 = vpop.permute.xlu0 %1817
          %1819 = vrot.lane.b32.xlu0 %v1812, 122
          %v1820 = vpop.permute.xlu0 %1819
          %1821 = vrot.lane.b32.xlu0 %v1814, 122
          %v1822 = vpop.permute.xlu0 %1821
          %v1823 = vsel %vm1784, %v1816, %v1818
          %v1824 = vsel %vm1784, %v1820, %v1822
          %v1827 = vadd.f32 %v1789, %v1823
          %v1828 = vadd.f32 %v1790, %v1824
          %s1829 = sld [smem:[#allocation5 + $0x14]]
          %v1830 = vstv %s1829
          %v1831 = vmul.f32 %v1830, %v495
          %v1832 = vmul.f32 %v1830, %v496
          %v1833 = vmul.f32 %v1830, %v497
          %v1834 = vmul.f32 %v1830, %v498
          %v1835 = vmul.f32 %v1830, %v499
          %v1836 = vmul.f32 %v1830, %v500
          %v1843 = vrot.slane %v1831, 2
          %v1844 = vrot.slane %v1833, 2
          %v1845 = vsel %vm414, %v1843, %v1844
          %v1846 = vrot.slane %v1832, 2
          %v1847 = vrot.slane %v1834, 2
          %v1848 = vsel %vm414, %v1846, %v1847
          %v1849 = vrot.slane %v1835, 2
          %v1850 = vsel %vm414, %v1844, %v1849
          %v1851 = vrot.slane %v1836, 2
          %v1852 = vsel %vm414, %v1847, %v1851
          %1853 = vrot.lane.b32.xlu0 %v1845, 122
          %v1854 = vpop.permute.xlu0 %1853
          %1855 = vrot.lane.b32.xlu0 %v1848, 122
          %v1856 = vpop.permute.xlu0 %1855
          %1857 = vrot.lane.b32.xlu0 %v1850, 122
          %v1858 = vpop.permute.xlu0 %1857
          %1859 = vrot.lane.b32.xlu0 %v1852, 122
          %v1860 = vpop.permute.xlu0 %1859
          %v1861 = vsel %vm1784, %v1854, %v1856
          %v1862 = vsel %vm1784, %v1858, %v1860
          %v1865 = vadd.f32 %v1827, %v1861
          %v1866 = vadd.f32 %v1828, %v1862
          %s1867 = sld [smem:[#allocation5 + $0x1b]]
          %v1868 = vstv %s1867
          %v1869 = vmul.f32 %v1868, %v495
          %v1870 = vmul.f32 %v1868, %v496
          %v1871 = vmul.f32 %v1868, %v497
          %v1872 = vmul.f32 %v1868, %v498
          %v1873 = vmul.f32 %v1868, %v499
          %v1874 = vmul.f32 %v1868, %v500
          %v1881 = vrot.slane %v1869, 3
          %v1882 = vrot.slane %v1871, 3
          %v1883 = vsel %vm432, %v1881, %v1882
          %v1884 = vrot.slane %v1870, 3
          %v1885 = vrot.slane %v1872, 3
          %v1886 = vsel %vm432, %v1884, %v1885
          %v1887 = vrot.slane %v1873, 3
          %v1888 = vsel %vm432, %v1882, %v1887
          %v1889 = vrot.slane %v1874, 3
          %v1890 = vsel %vm432, %v1885, %v1889
          %1891 = vrot.lane.b32.xlu0 %v1883, 122
          %v1892 = vpop.permute.xlu0 %1891
          %1893 = vrot.lane.b32.xlu0 %v1886, 122
          %v1894 = vpop.permute.xlu0 %1893
          %1895 = vrot.lane.b32.xlu0 %v1888, 122
          %v1896 = vpop.permute.xlu0 %1895
          %1897 = vrot.lane.b32.xlu0 %v1890, 122
          %v1898 = vpop.permute.xlu0 %1897
          %v1899 = vsel %vm1784, %v1892, %v1894
          %v1900 = vsel %vm1784, %v1896, %v1898
          %v1903 = vadd.f32 %v1865, %v1899
          %v1904 = vadd.f32 %v1866, %v1900
          %s1905 = sld [smem:[#allocation5 + $0x22]]
          %v1906 = vstv %s1905
          %v1907 = vmul.f32 %v1906, %v495
          %v1908 = vmul.f32 %v1906, %v496
          %v1909 = vmul.f32 %v1906, %v497
          %v1910 = vmul.f32 %v1906, %v498
          %v1911 = vmul.f32 %v1906, %v499
          %v1912 = vmul.f32 %v1906, %v500
          %v1919 = vrot.slane %v1907, 4
          %v1920 = vrot.slane %v1909, 4
          %v1921 = vsel %vm450, %v1919, %v1920
          %v1922 = vrot.slane %v1908, 4
          %v1923 = vrot.slane %v1910, 4
          %v1924 = vsel %vm450, %v1922, %v1923
          %v1925 = vrot.slane %v1911, 4
          %v1926 = vsel %vm450, %v1920, %v1925
          %v1927 = vrot.slane %v1912, 4
          %v1928 = vsel %vm450, %v1923, %v1927
          %1929 = vrot.lane.b32.xlu0 %v1921, 122
          %v1930 = vpop.permute.xlu0 %1929
          %1931 = vrot.lane.b32.xlu0 %v1924, 122
          %v1932 = vpop.permute.xlu0 %1931
          %1933 = vrot.lane.b32.xlu0 %v1926, 122
          %v1934 = vpop.permute.xlu0 %1933
          %1935 = vrot.lane.b32.xlu0 %v1928, 122
          %v1936 = vpop.permute.xlu0 %1935
          %v1937 = vsel %vm1784, %v1930, %v1932
          %v1938 = vsel %vm1784, %v1934, %v1936
          %v1941 = vadd.f32 %v1903, %v1937
          %v1942 = vadd.f32 %v1904, %v1938
          %s1943 = sld [smem:[#allocation5 + $0x29]]
          %v1944 = vstv %s1943
          %v1945 = vmul.f32 %v1944, %v495
          %v1946 = vmul.f32 %v1944, %v496
          %v1947 = vmul.f32 %v1944, %v497
          %v1948 = vmul.f32 %v1944, %v498
          %v1949 = vmul.f32 %v1944, %v499
          %v1950 = vmul.f32 %v1944, %v500
          %v1957 = vrot.slane %v1945, 5
          %v1958 = vrot.slane %v1947, 5
          %v1959 = vsel %vm329, %v1957, %v1958
          %v1960 = vrot.slane %v1946, 5
          %v1961 = vrot.slane %v1948, 5
          %v1962 = vsel %vm329, %v1960, %v1961
          %v1963 = vrot.slane %v1949, 5
          %v1964 = vsel %vm329, %v1958, %v1963
          %v1965 = vrot.slane %v1950, 5
          %v1966 = vsel %vm329, %v1961, %v1965
          %1967 = vrot.lane.b32.xlu0 %v1959, 122
          %v1968 = vpop.permute.xlu0 %1967
          %1969 = vrot.lane.b32.xlu0 %v1962, 122
          %v1970 = vpop.permute.xlu0 %1969
          %1971 = vrot.lane.b32.xlu0 %v1964, 122
          %v1972 = vpop.permute.xlu0 %1971
          %1973 = vrot.lane.b32.xlu0 %v1966, 122
          %v1974 = vpop.permute.xlu0 %1973
          %v1975 = vsel %vm1784, %v1968, %v1970
          %v1976 = vsel %vm1784, %v1972, %v1974
          %v1979 = vadd.f32 %v1941, %v1975
          %v1980 = vadd.f32 %v1942, %v1976
          %s1981 = sld [smem:[#allocation5 + $0x30]]
          %v1982 = vstv %s1981
          %v1983 = vmul.f32 %v1982, %v495
          %v1984 = vmul.f32 %v1982, %v496
          %v1985 = vmul.f32 %v1982, %v497
          %v1986 = vmul.f32 %v1982, %v498
          %v1987 = vmul.f32 %v1982, %v499
          %v1988 = vmul.f32 %v1982, %v500
          %v1995 = vrot.slane %v1983, 6
          %v1996 = vrot.slane %v1985, 6
          %v1997 = vsel %vm485, %v1995, %v1996
          %v1998 = vrot.slane %v1984, 6
          %v1999 = vrot.slane %v1986, 6
          %v2000 = vsel %vm485, %v1998, %v1999
          %v2001 = vrot.slane %v1987, 6
          %v2002 = vsel %vm485, %v1996, %v2001
          %v2003 = vrot.slane %v1988, 6
          %v2004 = vsel %vm485, %v1999, %v2003
          %2005 = vrot.lane.b32.xlu0 %v1997, 122
          %v2006 = vpop.permute.xlu0 %2005
          %2007 = vrot.lane.b32.xlu0 %v2000, 122
          %v2008 = vpop.permute.xlu0 %2007
          %2009 = vrot.lane.b32.xlu0 %v2002, 122
          %v2010 = vpop.permute.xlu0 %2009
          %2011 = vrot.lane.b32.xlu0 %v2004, 122
          %v2012 = vpop.permute.xlu0 %2011
          %v2013 = vsel %vm1784, %v2006, %v2008
          %v2014 = vsel %vm1784, %v2010, %v2012
          %v2017 = vadd.f32 %v1979, %v2013
          %v2018 = vadd.f32 %v1980, %v2014
          %v2019 = vld [vmem:[%s370] sm:$0xff]
          %v2020 = vld [vmem:[%s370 + $0x10] sm:$0xff]
          %v2021 = vld [vmem:[%s370 + $0x20] sm:$0x3f]
          %s2022 = sld [smem:[#allocation5 + $0x31]]
          %v2023 = vstv %s2022
          %v2024 = vmul.f32 %v2023, %v2019
          %v2025 = vmul.f32 %v2023, %v2020
          %v2026 = vadd.f32 %v2017, %v2024
          %v2027 = vadd.f32 %v2018, %v2025
          %s2028 = sld [smem:[#allocation5 + $0x38]]
          %v2029 = vstv %s2028
          %v2030 = vmul.f32 %v2029, %v2019
          %v2031 = vmul.f32 %v2029, %v2020
          %v2032 = vmul.f32 %v2029, %v2021
          %v2036 = vrot.slane %v2030, 1
          %v2037 = vrot.slane %v2031, 1
          %v2038 = vsel %vm396, %v2036, %v2037
          %v2039 = vrot.slane %v2032, 1
          %v2040 = vsel %vm396, %v2037, %v2039
          %v2043 = vadd.f32 %v2026, %v2038
          %v2044 = vadd.f32 %v2027, %v2040
          %s2045 = sld [smem:[#allocation5 + $0x3f]]
          %v2046 = vstv %s2045
          %v2047 = vmul.f32 %v2046, %v2019
          %v2048 = vmul.f32 %v2046, %v2020
          %v2049 = vmul.f32 %v2046, %v2021
          %v2053 = vrot.slane %v2047, 2
          %v2054 = vrot.slane %v2048, 2
          %v2055 = vsel %vm414, %v2053, %v2054
          %v2056 = vrot.slane %v2049, 2
          %v2057 = vsel %vm414, %v2054, %v2056
          %v2060 = vadd.f32 %v2043, %v2055
          %v2061 = vadd.f32 %v2044, %v2057
          %s2062 = sld [smem:[#allocation5 + $0x46]]
          %v2063 = vstv %s2062
          %v2064 = vmul.f32 %v2063, %v2019
          %v2065 = vmul.f32 %v2063, %v2020
          %v2066 = vmul.f32 %v2063, %v2021
          %v2070 = vrot.slane %v2064, 3
          %v2071 = vrot.slane %v2065, 3
          %v2072 = vsel %vm432, %v2070, %v2071
          %v2073 = vrot.slane %v2066, 3
          %v2074 = vsel %vm432, %v2071, %v2073
          %v2077 = vadd.f32 %v2060, %v2072
          %v2078 = vadd.f32 %v2061, %v2074
          %s2079 = sld [smem:[#allocation5 + $0x4d]]
          %v2080 = vstv %s2079
          %v2081 = vmul.f32 %v2080, %v2019
          %v2082 = vmul.f32 %v2080, %v2020
          %v2083 = vmul.f32 %v2080, %v2021
          %v2087 = vrot.slane %v2081, 4
          %v2088 = vrot.slane %v2082, 4
          %v2089 = vsel %vm450, %v2087, %v2088
          %v2090 = vrot.slane %v2083, 4
          %v2091 = vsel %vm450, %v2088, %v2090
          %v2094 = vadd.f32 %v2077, %v2089
          %v2095 = vadd.f32 %v2078, %v2091
          %s2096 = sld [smem:[#allocation5 + $0x54]]
          %v2097 = vstv %s2096
          %v2098 = vmul.f32 %v2097, %v2019
          %v2099 = vmul.f32 %v2097, %v2020
          %v2100 = vmul.f32 %v2097, %v2021
          %v2104 = vrot.slane %v2098, 5
          %v2105 = vrot.slane %v2099, 5
          %v2106 = vsel %vm329, %v2104, %v2105
          %v2107 = vrot.slane %v2100, 5
          %v2108 = vsel %vm329, %v2105, %v2107
          %v2111 = vadd.f32 %v2094, %v2106
          %v2112 = vadd.f32 %v2095, %v2108
          %s2113 = sld [smem:[#allocation5 + $0x5b]]
          %v2114 = vstv %s2113
          %v2115 = vmul.f32 %v2114, %v2019
          %v2116 = vmul.f32 %v2114, %v2020
          %v2117 = vmul.f32 %v2114, %v2021
          %v2121 = vrot.slane %v2115, 6
          %v2122 = vrot.slane %v2116, 6
          %v2123 = vsel %vm485, %v2121, %v2122
          %v2124 = vrot.slane %v2117, 6
          %v2125 = vsel %vm485, %v2122, %v2124
          %v2128 = vadd.f32 %v2111, %v2123
          %v2129 = vadd.f32 %v2112, %v2125
          %v2130 = vld [vmem:[%s370] sm:$0xff]
          %v2131 = vld [vmem:[%s370 + $0x8] sm:$0xff]
          %v2132 = vld [vmem:[%s370 + $0x10] sm:$0xff]
          %v2133 = vld [vmem:[%s370 + $0x18] sm:$0xff]
          %v2134 = vld [vmem:[%s370 + $0x20] sm:$0x3f]
          %v2135 = vld [vmem:[%s370 + $0x28] sm:$0x3f]
          %s2136 = sld [smem:[#allocation5 + $0x32]]
          %v2137 = vstv %s2136
          %v2138 = vmul.f32 %v2137, %v2130
          %v2139 = vmul.f32 %v2137, %v2131
          %v2140 = vmul.f32 %v2137, %v2132
          %v2141 = vmul.f32 %v2137, %v2133
          %2146 = vrot.lane.b32.xlu0 %v2138, 127
          %v2147 = vpop.permute.xlu0 %2146
          %2148 = vrot.lane.b32.xlu0 %v2139, 127
          %v2149 = vpop.permute.xlu0 %2148
          %2150 = vrot.lane.b32.xlu0 %v2140, 127
          %v2151 = vpop.permute.xlu0 %2150
          %2152 = vrot.lane.b32.xlu0 %v2141, 127
          %v2153 = vpop.permute.xlu0 %2152
          %v2154 = vsel %vm519, %v2147, %v2149
          %v2155 = vsel %vm519, %v2151, %v2153
          %v2158 = vadd.f32 %v2128, %v2154
          %v2159 = vadd.f32 %v2129, %v2155
          %s2160 = sld [smem:[#allocation5 + $0x39]]
          %v2161 = vstv %s2160
          %v2162 = vmul.f32 %v2161, %v2130
          %v2163 = vmul.f32 %v2161, %v2131
          %v2164 = vmul.f32 %v2161, %v2132
          %v2165 = vmul.f32 %v2161, %v2133
          %v2166 = vmul.f32 %v2161, %v2134
          %v2167 = vmul.f32 %v2161, %v2135
          %v2174 = vrot.slane %v2162, 1
          %v2175 = vrot.slane %v2164, 1
          %v2176 = vsel %vm396, %v2174, %v2175
          %v2177 = vrot.slane %v2163, 1
          %v2178 = vrot.slane %v2165, 1
          %v2179 = vsel %vm396, %v2177, %v2178
          %v2180 = vrot.slane %v2166, 1
          %v2181 = vsel %vm396, %v2175, %v2180
          %v2182 = vrot.slane %v2167, 1
          %v2183 = vsel %vm396, %v2178, %v2182
          %2184 = vrot.lane.b32.xlu0 %v2176, 127
          %v2185 = vpop.permute.xlu0 %2184
          %2186 = vrot.lane.b32.xlu0 %v2179, 127
          %v2187 = vpop.permute.xlu0 %2186
          %2188 = vrot.lane.b32.xlu0 %v2181, 127
          %v2189 = vpop.permute.xlu0 %2188
          %2190 = vrot.lane.b32.xlu0 %v2183, 127
          %v2191 = vpop.permute.xlu0 %2190
          %v2192 = vsel %vm519, %v2185, %v2187
          %v2193 = vsel %vm519, %v2189, %v2191
          %v2196 = vadd.f32 %v2158, %v2192
          %v2197 = vadd.f32 %v2159, %v2193
          %s2198 = sld [smem:[#allocation5 + $0x40]]
          %v2199 = vstv %s2198
          %v2200 = vmul.f32 %v2199, %v2130
          %v2201 = vmul.f32 %v2199, %v2131
          %v2202 = vmul.f32 %v2199, %v2132
          %v2203 = vmul.f32 %v2199, %v2133
          %v2204 = vmul.f32 %v2199, %v2134
          %v2205 = vmul.f32 %v2199, %v2135
          %v2212 = vrot.slane %v2200, 2
          %v2213 = vrot.slane %v2202, 2
          %v2214 = vsel %vm414, %v2212, %v2213
          %v2215 = vrot.slane %v2201, 2
          %v2216 = vrot.slane %v2203, 2
          %v2217 = vsel %vm414, %v2215, %v2216
          %v2218 = vrot.slane %v2204, 2
          %v2219 = vsel %vm414, %v2213, %v2218
          %v2220 = vrot.slane %v2205, 2
          %v2221 = vsel %vm414, %v2216, %v2220
          %2222 = vrot.lane.b32.xlu0 %v2214, 127
          %v2223 = vpop.permute.xlu0 %2222
          %2224 = vrot.lane.b32.xlu0 %v2217, 127
          %v2225 = vpop.permute.xlu0 %2224
          %2226 = vrot.lane.b32.xlu0 %v2219, 127
          %v2227 = vpop.permute.xlu0 %2226
          %2228 = vrot.lane.b32.xlu0 %v2221, 127
          %v2229 = vpop.permute.xlu0 %2228
          %v2230 = vsel %vm519, %v2223, %v2225
          %v2231 = vsel %vm519, %v2227, %v2229
          %v2234 = vadd.f32 %v2196, %v2230
          %v2235 = vadd.f32 %v2197, %v2231
          %s2236 = sld [smem:[#allocation5 + $0x47]]
          %v2237 = vstv %s2236
          %v2238 = vmul.f32 %v2237, %v2130
          %v2239 = vmul.f32 %v2237, %v2131
          %v2240 = vmul.f32 %v2237, %v2132
          %v2241 = vmul.f32 %v2237, %v2133
          %v2242 = vmul.f32 %v2237, %v2134
          %v2243 = vmul.f32 %v2237, %v2135
          %v2250 = vrot.slane %v2238, 3
          %v2251 = vrot.slane %v2240, 3
          %v2252 = vsel %vm432, %v2250, %v2251
          %v2253 = vrot.slane %v2239, 3
          %v2254 = vrot.slane %v2241, 3
          %v2255 = vsel %vm432, %v2253, %v2254
          %v2256 = vrot.slane %v2242, 3
          %v2257 = vsel %vm432, %v2251, %v2256
          %v2258 = vrot.slane %v2243, 3
          %v2259 = vsel %vm432, %v2254, %v2258
          %2260 = vrot.lane.b32.xlu0 %v2252, 127
          %v2261 = vpop.permute.xlu0 %2260
          %2262 = vrot.lane.b32.xlu0 %v2255, 127
          %v2263 = vpop.permute.xlu0 %2262
          %2264 = vrot.lane.b32.xlu0 %v2257, 127
          %v2265 = vpop.permute.xlu0 %2264
          %2266 = vrot.lane.b32.xlu0 %v2259, 127
          %v2267 = vpop.permute.xlu0 %2266
          %v2268 = vsel %vm519, %v2261, %v2263
          %v2269 = vsel %vm519, %v2265, %v2267
          %v2272 = vadd.f32 %v2234, %v2268
          %v2273 = vadd.f32 %v2235, %v2269
          %s2274 = sld [smem:[#allocation5 + $0x4e]]
          %v2275 = vstv %s2274
          %v2276 = vmul.f32 %v2275, %v2130
          %v2277 = vmul.f32 %v2275, %v2131
          %v2278 = vmul.f32 %v2275, %v2132
          %v2279 = vmul.f32 %v2275, %v2133
          %v2280 = vmul.f32 %v2275, %v2134
          %v2281 = vmul.f32 %v2275, %v2135
          %v2288 = vrot.slane %v2276, 4
          %v2289 = vrot.slane %v2278, 4
          %v2290 = vsel %vm450, %v2288, %v2289
          %v2291 = vrot.slane %v2277, 4
          %v2292 = vrot.slane %v2279, 4
          %v2293 = vsel %vm450, %v2291, %v2292
          %v2294 = vrot.slane %v2280, 4
          %v2295 = vsel %vm450, %v2289, %v2294
          %v2296 = vrot.slane %v2281, 4
          %v2297 = vsel %vm450, %v2292, %v2296
          %2298 = vrot.lane.b32.xlu0 %v2290, 127
          %v2299 = vpop.permute.xlu0 %2298
          %2300 = vrot.lane.b32.xlu0 %v2293, 127
          %v2301 = vpop.permute.xlu0 %2300
          %2302 = vrot.lane.b32.xlu0 %v2295, 127
          %v2303 = vpop.permute.xlu0 %2302
          %2304 = vrot.lane.b32.xlu0 %v2297, 127
          %v2305 = vpop.permute.xlu0 %2304
          %v2306 = vsel %vm519, %v2299, %v2301
          %v2307 = vsel %vm519, %v2303, %v2305
          %v2310 = vadd.f32 %v2272, %v2306
          %v2311 = vadd.f32 %v2273, %v2307
          %s2312 = sld [smem:[#allocation5 + $0x55]]
          %v2313 = vstv %s2312
          %v2314 = vmul.f32 %v2313, %v2130
          %v2315 = vmul.f32 %v2313, %v2131
          %v2316 = vmul.f32 %v2313, %v2132
          %v2317 = vmul.f32 %v2313, %v2133
          %v2318 = vmul.f32 %v2313, %v2134
          %v2319 = vmul.f32 %v2313, %v2135
          %v2326 = vrot.slane %v2314, 5
          %v2327 = vrot.slane %v2316, 5
          %v2328 = vsel %vm329, %v2326, %v2327
          %v2329 = vrot.slane %v2315, 5
          %v2330 = vrot.slane %v2317, 5
          %v2331 = vsel %vm329, %v2329, %v2330
          %v2332 = vrot.slane %v2318, 5
          %v2333 = vsel %vm329, %v2327, %v2332
          %v2334 = vrot.slane %v2319, 5
          %v2335 = vsel %vm329, %v2330, %v2334
          %2336 = vrot.lane.b32.xlu0 %v2328, 127
          %v2337 = vpop.permute.xlu0 %2336
          %2338 = vrot.lane.b32.xlu0 %v2331, 127
          %v2339 = vpop.permute.xlu0 %2338
          %2340 = vrot.lane.b32.xlu0 %v2333, 127
          %v2341 = vpop.permute.xlu0 %2340
          %2342 = vrot.lane.b32.xlu0 %v2335, 127
          %v2343 = vpop.permute.xlu0 %2342
          %v2344 = vsel %vm519, %v2337, %v2339
          %v2345 = vsel %vm519, %v2341, %v2343
          %v2348 = vadd.f32 %v2310, %v2344
          %v2349 = vadd.f32 %v2311, %v2345
          %s2350 = sld [smem:[#allocation5 + $0x5c]]
          %v2351 = vstv %s2350
          %v2352 = vmul.f32 %v2351, %v2130
          %v2353 = vmul.f32 %v2351, %v2131
          %v2354 = vmul.f32 %v2351, %v2132
          %v2355 = vmul.f32 %v2351, %v2133
          %v2356 = vmul.f32 %v2351, %v2134
          %v2357 = vmul.f32 %v2351, %v2135
          %v2364 = vrot.slane %v2352, 6
          %v2365 = vrot.slane %v2354, 6
          %v2366 = vsel %vm485, %v2364, %v2365
          %v2367 = vrot.slane %v2353, 6
          %v2368 = vrot.slane %v2355, 6
          %v2369 = vsel %vm485, %v2367, %v2368
          %v2370 = vrot.slane %v2356, 6
          %v2371 = vsel %vm485, %v2365, %v2370
          %v2372 = vrot.slane %v2357, 6
          %v2373 = vsel %vm485, %v2368, %v2372
          %2374 = vrot.lane.b32.xlu0 %v2366, 127
          %v2375 = vpop.permute.xlu0 %2374
          %2376 = vrot.lane.b32.xlu0 %v2369, 127
          %v2377 = vpop.permute.xlu0 %2376
          %2378 = vrot.lane.b32.xlu0 %v2371, 127
          %v2379 = vpop.permute.xlu0 %2378
          %2380 = vrot.lane.b32.xlu0 %v2373, 127
          %v2381 = vpop.permute.xlu0 %2380
          %v2382 = vsel %vm519, %v2375, %v2377
          %v2383 = vsel %vm519, %v2379, %v2381
          %v2386 = vadd.f32 %v2348, %v2382
          %v2387 = vadd.f32 %v2349, %v2383
          %s2388 = sld [smem:[#allocation5 + $0x33]]
          %v2389 = vstv %s2388
          %v2390 = vmul.f32 %v2389, %v2130
          %v2391 = vmul.f32 %v2389, %v2131
          %v2392 = vmul.f32 %v2389, %v2132
          %v2393 = vmul.f32 %v2389, %v2133
          %2398 = vrot.lane.b32.xlu0 %v2390, 126
          %v2399 = vpop.permute.xlu0 %2398
          %2400 = vrot.lane.b32.xlu0 %v2391, 126
          %v2401 = vpop.permute.xlu0 %2400
          %2402 = vrot.lane.b32.xlu0 %v2392, 126
          %v2403 = vpop.permute.xlu0 %2402
          %2404 = vrot.lane.b32.xlu0 %v2393, 126
          %v2405 = vpop.permute.xlu0 %2404
          %v2406 = vsel %vm772, %v2399, %v2401
          %v2407 = vsel %vm772, %v2403, %v2405
          %v2410 = vadd.f32 %v2386, %v2406
          %v2411 = vadd.f32 %v2387, %v2407
          %s2412 = sld [smem:[#allocation5 + $0x3a]]
          %v2413 = vstv %s2412
          %v2414 = vmul.f32 %v2413, %v2130
          %v2415 = vmul.f32 %v2413, %v2131
          %v2416 = vmul.f32 %v2413, %v2132
          %v2417 = vmul.f32 %v2413, %v2133
          %v2418 = vmul.f32 %v2413, %v2134
          %v2419 = vmul.f32 %v2413, %v2135
          %v2426 = vrot.slane %v2414, 1
          %v2427 = vrot.slane %v2416, 1
          %v2428 = vsel %vm396, %v2426, %v2427
          %v2429 = vrot.slane %v2415, 1
          %v2430 = vrot.slane %v2417, 1
          %v2431 = vsel %vm396, %v2429, %v2430
          %v2432 = vrot.slane %v2418, 1
          %v2433 = vsel %vm396, %v2427, %v2432
          %v2434 = vrot.slane %v2419, 1
          %v2435 = vsel %vm396, %v2430, %v2434
          %2436 = vrot.lane.b32.xlu0 %v2428, 126
          %v2437 = vpop.permute.xlu0 %2436
          %2438 = vrot.lane.b32.xlu0 %v2431, 126
          %v2439 = vpop.permute.xlu0 %2438
          %2440 = vrot.lane.b32.xlu0 %v2433, 126
          %v2441 = vpop.permute.xlu0 %2440
          %2442 = vrot.lane.b32.xlu0 %v2435, 126
          %v2443 = vpop.permute.xlu0 %2442
          %v2444 = vsel %vm772, %v2437, %v2439
          %v2445 = vsel %vm772, %v2441, %v2443
          %v2448 = vadd.f32 %v2410, %v2444
          %v2449 = vadd.f32 %v2411, %v2445
          %s2450 = sld [smem:[#allocation5 + $0x41]]
          %v2451 = vstv %s2450
          %v2452 = vmul.f32 %v2451, %v2130
          %v2453 = vmul.f32 %v2451, %v2131
          %v2454 = vmul.f32 %v2451, %v2132
          %v2455 = vmul.f32 %v2451, %v2133
          %v2456 = vmul.f32 %v2451, %v2134
          %v2457 = vmul.f32 %v2451, %v2135
          %v2464 = vrot.slane %v2452, 2
          %v2465 = vrot.slane %v2454, 2
          %v2466 = vsel %vm414, %v2464, %v2465
          %v2467 = vrot.slane %v2453, 2
          %v2468 = vrot.slane %v2455, 2
          %v2469 = vsel %vm414, %v2467, %v2468
          %v2470 = vrot.slane %v2456, 2
          %v2471 = vsel %vm414, %v2465, %v2470
          %v2472 = vrot.slane %v2457, 2
          %v2473 = vsel %vm414, %v2468, %v2472
          %2474 = vrot.lane.b32.xlu0 %v2466, 126
          %v2475 = vpop.permute.xlu0 %2474
          %2476 = vrot.lane.b32.xlu0 %v2469, 126
          %v2477 = vpop.permute.xlu0 %2476
          %2478 = vrot.lane.b32.xlu0 %v2471, 126
          %v2479 = vpop.permute.xlu0 %2478
          %2480 = vrot.lane.b32.xlu0 %v2473, 126
          %v2481 = vpop.permute.xlu0 %2480
          %v2482 = vsel %vm772, %v2475, %v2477
          %v2483 = vsel %vm772, %v2479, %v2481
          %v2486 = vadd.f32 %v2448, %v2482
          %v2487 = vadd.f32 %v2449, %v2483
          %s2488 = sld [smem:[#allocation5 + $0x48]]
          %v2489 = vstv %s2488
          %v2490 = vmul.f32 %v2489, %v2130
          %v2491 = vmul.f32 %v2489, %v2131
          %v2492 = vmul.f32 %v2489, %v2132
          %v2493 = vmul.f32 %v2489, %v2133
          %v2494 = vmul.f32 %v2489, %v2134
          %v2495 = vmul.f32 %v2489, %v2135
          %v2502 = vrot.slane %v2490, 3
          %v2503 = vrot.slane %v2492, 3
          %v2504 = vsel %vm432, %v2502, %v2503
          %v2505 = vrot.slane %v2491, 3
          %v2506 = vrot.slane %v2493, 3
          %v2507 = vsel %vm432, %v2505, %v2506
          %v2508 = vrot.slane %v2494, 3
          %v2509 = vsel %vm432, %v2503, %v2508
          %v2510 = vrot.slane %v2495, 3
          %v2511 = vsel %vm432, %v2506, %v2510
          %2512 = vrot.lane.b32.xlu0 %v2504, 126
          %v2513 = vpop.permute.xlu0 %2512
          %2514 = vrot.lane.b32.xlu0 %v2507, 126
          %v2515 = vpop.permute.xlu0 %2514
          %2516 = vrot.lane.b32.xlu0 %v2509, 126
          %v2517 = vpop.permute.xlu0 %2516
          %2518 = vrot.lane.b32.xlu0 %v2511, 126
          %v2519 = vpop.permute.xlu0 %2518
          %v2520 = vsel %vm772, %v2513, %v2515
          %v2521 = vsel %vm772, %v2517, %v2519
          %v2524 = vadd.f32 %v2486, %v2520
          %v2525 = vadd.f32 %v2487, %v2521
          %s2526 = sld [smem:[#allocation5 + $0x4f]]
          %v2527 = vstv %s2526
          %v2528 = vmul.f32 %v2527, %v2130
          %v2529 = vmul.f32 %v2527, %v2131
          %v2530 = vmul.f32 %v2527, %v2132
          %v2531 = vmul.f32 %v2527, %v2133
          %v2532 = vmul.f32 %v2527, %v2134
          %v2533 = vmul.f32 %v2527, %v2135
          %v2540 = vrot.slane %v2528, 4
          %v2541 = vrot.slane %v2530, 4
          %v2542 = vsel %vm450, %v2540, %v2541
          %v2543 = vrot.slane %v2529, 4
          %v2544 = vrot.slane %v2531, 4
          %v2545 = vsel %vm450, %v2543, %v2544
          %v2546 = vrot.slane %v2532, 4
          %v2547 = vsel %vm450, %v2541, %v2546
          %v2548 = vrot.slane %v2533, 4
          %v2549 = vsel %vm450, %v2544, %v2548
          %2550 = vrot.lane.b32.xlu0 %v2542, 126
          %v2551 = vpop.permute.xlu0 %2550
          %2552 = vrot.lane.b32.xlu0 %v2545, 126
          %v2553 = vpop.permute.xlu0 %2552
          %2554 = vrot.lane.b32.xlu0 %v2547, 126
          %v2555 = vpop.permute.xlu0 %2554
          %2556 = vrot.lane.b32.xlu0 %v2549, 126
          %v2557 = vpop.permute.xlu0 %2556
          %v2558 = vsel %vm772, %v2551, %v2553
          %v2559 = vsel %vm772, %v2555, %v2557
          %v2562 = vadd.f32 %v2524, %v2558
          %v2563 = vadd.f32 %v2525, %v2559
          %s2564 = sld [smem:[#allocation5 + $0x56]]
          %v2565 = vstv %s2564
          %v2566 = vmul.f32 %v2565, %v2130
          %v2567 = vmul.f32 %v2565, %v2131
          %v2568 = vmul.f32 %v2565, %v2132
          %v2569 = vmul.f32 %v2565, %v2133
          %v2570 = vmul.f32 %v2565, %v2134
          %v2571 = vmul.f32 %v2565, %v2135
          %v2578 = vrot.slane %v2566, 5
          %v2579 = vrot.slane %v2568, 5
          %v2580 = vsel %vm329, %v2578, %v2579
          %v2581 = vrot.slane %v2567, 5
          %v2582 = vrot.slane %v2569, 5
          %v2583 = vsel %vm329, %v2581, %v2582
          %v2584 = vrot.slane %v2570, 5
          %v2585 = vsel %vm329, %v2579, %v2584
          %v2586 = vrot.slane %v2571, 5
          %v2587 = vsel %vm329, %v2582, %v2586
          %2588 = vrot.lane.b32.xlu0 %v2580, 126
          %v2589 = vpop.permute.xlu0 %2588
          %2590 = vrot.lane.b32.xlu0 %v2583, 126
          %v2591 = vpop.permute.xlu0 %2590
          %2592 = vrot.lane.b32.xlu0 %v2585, 126
          %v2593 = vpop.permute.xlu0 %2592
          %2594 = vrot.lane.b32.xlu0 %v2587, 126
          %v2595 = vpop.permute.xlu0 %2594
          %v2596 = vsel %vm772, %v2589, %v2591
          %v2597 = vsel %vm772, %v2593, %v2595
          %v2600 = vadd.f32 %v2562, %v2596
          %v2601 = vadd.f32 %v2563, %v2597
          %s2602 = sld [smem:[#allocation5 + $0x5d]]
          %v2603 = vstv %s2602
          %v2604 = vmul.f32 %v2603, %v2130
          %v2605 = vmul.f32 %v2603, %v2131
          %v2606 = vmul.f32 %v2603, %v2132
          %v2607 = vmul.f32 %v2603, %v2133
          %v2608 = vmul.f32 %v2603, %v2134
          %v2609 = vmul.f32 %v2603, %v2135
          %v2616 = vrot.slane %v2604, 6
          %v2617 = vrot.slane %v2606, 6
          %v2618 = vsel %vm485, %v2616, %v2617
          %v2619 = vrot.slane %v2605, 6
          %v2620 = vrot.slane %v2607, 6
          %v2621 = vsel %vm485, %v2619, %v2620
          %v2622 = vrot.slane %v2608, 6
          %v2623 = vsel %vm485, %v2617, %v2622
          %v2624 = vrot.slane %v2609, 6
          %v2625 = vsel %vm485, %v2620, %v2624
          %2626 = vrot.lane.b32.xlu0 %v2618, 126
          %v2627 = vpop.permute.xlu0 %2626
          %2628 = vrot.lane.b32.xlu0 %v2621, 126
          %v2629 = vpop.permute.xlu0 %2628
          %2630 = vrot.lane.b32.xlu0 %v2623, 126
          %v2631 = vpop.permute.xlu0 %2630
          %2632 = vrot.lane.b32.xlu0 %v2625, 126
          %v2633 = vpop.permute.xlu0 %2632
          %v2634 = vsel %vm772, %v2627, %v2629
          %v2635 = vsel %vm772, %v2631, %v2633
          %v2638 = vadd.f32 %v2600, %v2634
          %v2639 = vadd.f32 %v2601, %v2635
          %s2640 = sld [smem:[#allocation5 + $0x34]]
          %v2641 = vstv %s2640
          %v2642 = vmul.f32 %v2641, %v2130
          %v2643 = vmul.f32 %v2641, %v2131
          %v2644 = vmul.f32 %v2641, %v2132
          %v2645 = vmul.f32 %v2641, %v2133
          %2650 = vrot.lane.b32.xlu0 %v2642, 125
          %v2651 = vpop.permute.xlu0 %2650
          %2652 = vrot.lane.b32.xlu0 %v2643, 125
          %v2653 = vpop.permute.xlu0 %2652
          %2654 = vrot.lane.b32.xlu0 %v2644, 125
          %v2655 = vpop.permute.xlu0 %2654
          %2656 = vrot.lane.b32.xlu0 %v2645, 125
          %v2657 = vpop.permute.xlu0 %2656
          %v2658 = vsel %vm1025, %v2651, %v2653
          %v2659 = vsel %vm1025, %v2655, %v2657
          %v2662 = vadd.f32 %v2638, %v2658
          %v2663 = vadd.f32 %v2639, %v2659
          %s2664 = sld [smem:[#allocation5 + $0x3b]]
          %v2665 = vstv %s2664
          %v2666 = vmul.f32 %v2665, %v2130
          %v2667 = vmul.f32 %v2665, %v2131
          %v2668 = vmul.f32 %v2665, %v2132
          %v2669 = vmul.f32 %v2665, %v2133
          %v2670 = vmul.f32 %v2665, %v2134
          %v2671 = vmul.f32 %v2665, %v2135
          %v2678 = vrot.slane %v2666, 1
          %v2679 = vrot.slane %v2668, 1
          %v2680 = vsel %vm396, %v2678, %v2679
          %v2681 = vrot.slane %v2667, 1
          %v2682 = vrot.slane %v2669, 1
          %v2683 = vsel %vm396, %v2681, %v2682
          %v2684 = vrot.slane %v2670, 1
          %v2685 = vsel %vm396, %v2679, %v2684
          %v2686 = vrot.slane %v2671, 1
          %v2687 = vsel %vm396, %v2682, %v2686
          %2688 = vrot.lane.b32.xlu0 %v2680, 125
          %v2689 = vpop.permute.xlu0 %2688
          %2690 = vrot.lane.b32.xlu0 %v2683, 125
          %v2691 = vpop.permute.xlu0 %2690
          %2692 = vrot.lane.b32.xlu0 %v2685, 125
          %v2693 = vpop.permute.xlu0 %2692
          %2694 = vrot.lane.b32.xlu0 %v2687, 125
          %v2695 = vpop.permute.xlu0 %2694
          %v2696 = vsel %vm1025, %v2689, %v2691
          %v2697 = vsel %vm1025, %v2693, %v2695
          %v2700 = vadd.f32 %v2662, %v2696
          %v2701 = vadd.f32 %v2663, %v2697
          %s2702 = sld [smem:[#allocation5 + $0x42]]
          %v2703 = vstv %s2702
          %v2704 = vmul.f32 %v2703, %v2130
          %v2705 = vmul.f32 %v2703, %v2131
          %v2706 = vmul.f32 %v2703, %v2132
          %v2707 = vmul.f32 %v2703, %v2133
          %v2708 = vmul.f32 %v2703, %v2134
          %v2709 = vmul.f32 %v2703, %v2135
          %v2716 = vrot.slane %v2704, 2
          %v2717 = vrot.slane %v2706, 2
          %v2718 = vsel %vm414, %v2716, %v2717
          %v2719 = vrot.slane %v2705, 2
          %v2720 = vrot.slane %v2707, 2
          %v2721 = vsel %vm414, %v2719, %v2720
          %v2722 = vrot.slane %v2708, 2
          %v2723 = vsel %vm414, %v2717, %v2722
          %v2724 = vrot.slane %v2709, 2
          %v2725 = vsel %vm414, %v2720, %v2724
          %2726 = vrot.lane.b32.xlu0 %v2718, 125
          %v2727 = vpop.permute.xlu0 %2726
          %2728 = vrot.lane.b32.xlu0 %v2721, 125
          %v2729 = vpop.permute.xlu0 %2728
          %2730 = vrot.lane.b32.xlu0 %v2723, 125
          %v2731 = vpop.permute.xlu0 %2730
          %2732 = vrot.lane.b32.xlu0 %v2725, 125
          %v2733 = vpop.permute.xlu0 %2732
          %v2734 = vsel %vm1025, %v2727, %v2729
          %v2735 = vsel %vm1025, %v2731, %v2733
          %v2738 = vadd.f32 %v2700, %v2734
          %v2739 = vadd.f32 %v2701, %v2735
          %s2740 = sld [smem:[#allocation5 + $0x49]]
          %v2741 = vstv %s2740
          %v2742 = vmul.f32 %v2741, %v2130
          %v2743 = vmul.f32 %v2741, %v2131
          %v2744 = vmul.f32 %v2741, %v2132
          %v2745 = vmul.f32 %v2741, %v2133
          %v2746 = vmul.f32 %v2741, %v2134
          %v2747 = vmul.f32 %v2741, %v2135
          %v2754 = vrot.slane %v2742, 3
          %v2755 = vrot.slane %v2744, 3
          %v2756 = vsel %vm432, %v2754, %v2755
          %v2757 = vrot.slane %v2743, 3
          %v2758 = vrot.slane %v2745, 3
          %v2759 = vsel %vm432, %v2757, %v2758
          %v2760 = vrot.slane %v2746, 3
          %v2761 = vsel %vm432, %v2755, %v2760
          %v2762 = vrot.slane %v2747, 3
          %v2763 = vsel %vm432, %v2758, %v2762
          %2764 = vrot.lane.b32.xlu0 %v2756, 125
          %v2765 = vpop.permute.xlu0 %2764
          %2766 = vrot.lane.b32.xlu0 %v2759, 125
          %v2767 = vpop.permute.xlu0 %2766
          %2768 = vrot.lane.b32.xlu0 %v2761, 125
          %v2769 = vpop.permute.xlu0 %2768
          %2770 = vrot.lane.b32.xlu0 %v2763, 125
          %v2771 = vpop.permute.xlu0 %2770
          %v2772 = vsel %vm1025, %v2765, %v2767
          %v2773 = vsel %vm1025, %v2769, %v2771
          %v2776 = vadd.f32 %v2738, %v2772
          %v2777 = vadd.f32 %v2739, %v2773
          %s2778 = sld [smem:[#allocation5 + $0x50]]
          %v2779 = vstv %s2778
          %v2780 = vmul.f32 %v2779, %v2130
          %v2781 = vmul.f32 %v2779, %v2131
          %v2782 = vmul.f32 %v2779, %v2132
          %v2783 = vmul.f32 %v2779, %v2133
          %v2784 = vmul.f32 %v2779, %v2134
          %v2785 = vmul.f32 %v2779, %v2135
          %v2792 = vrot.slane %v2780, 4
          %v2793 = vrot.slane %v2782, 4
          %v2794 = vsel %vm450, %v2792, %v2793
          %v2795 = vrot.slane %v2781, 4
          %v2796 = vrot.slane %v2783, 4
          %v2797 = vsel %vm450, %v2795, %v2796
          %v2798 = vrot.slane %v2784, 4
          %v2799 = vsel %vm450, %v2793, %v2798
          %v2800 = vrot.slane %v2785, 4
          %v2801 = vsel %vm450, %v2796, %v2800
          %2802 = vrot.lane.b32.xlu0 %v2794, 125
          %v2803 = vpop.permute.xlu0 %2802
          %2804 = vrot.lane.b32.xlu0 %v2797, 125
          %v2805 = vpop.permute.xlu0 %2804
          %2806 = vrot.lane.b32.xlu0 %v2799, 125
          %v2807 = vpop.permute.xlu0 %2806
          %2808 = vrot.lane.b32.xlu0 %v2801, 125
          %v2809 = vpop.permute.xlu0 %2808
          %v2810 = vsel %vm1025, %v2803, %v2805
          %v2811 = vsel %vm1025, %v2807, %v2809
          %v2814 = vadd.f32 %v2776, %v2810
          %v2815 = vadd.f32 %v2777, %v2811
          %s2816 = sld [smem:[#allocation5 + $0x57]]
          %v2817 = vstv %s2816
          %v2818 = vmul.f32 %v2817, %v2130
          %v2819 = vmul.f32 %v2817, %v2131
          %v2820 = vmul.f32 %v2817, %v2132
          %v2821 = vmul.f32 %v2817, %v2133
          %v2822 = vmul.f32 %v2817, %v2134
          %v2823 = vmul.f32 %v2817, %v2135
          %v2830 = vrot.slane %v2818, 5
          %v2831 = vrot.slane %v2820, 5
          %v2832 = vsel %vm329, %v2830, %v2831
          %v2833 = vrot.slane %v2819, 5
          %v2834 = vrot.slane %v2821, 5
          %v2835 = vsel %vm329, %v2833, %v2834
          %v2836 = vrot.slane %v2822, 5
          %v2837 = vsel %vm329, %v2831, %v2836
          %v2838 = vrot.slane %v2823, 5
          %v2839 = vsel %vm329, %v2834, %v2838
          %2840 = vrot.lane.b32.xlu0 %v2832, 125
          %v2841 = vpop.permute.xlu0 %2840
          %2842 = vrot.lane.b32.xlu0 %v2835, 125
          %v2843 = vpop.permute.xlu0 %2842
          %2844 = vrot.lane.b32.xlu0 %v2837, 125
          %v2845 = vpop.permute.xlu0 %2844
          %2846 = vrot.lane.b32.xlu0 %v2839, 125
          %v2847 = vpop.permute.xlu0 %2846
          %v2848 = vsel %vm1025, %v2841, %v2843
          %v2849 = vsel %vm1025, %v2845, %v2847
          %v2852 = vadd.f32 %v2814, %v2848
          %v2853 = vadd.f32 %v2815, %v2849
          %s2854 = sld [smem:[#allocation5 + $0x5e]]
          %v2855 = vstv %s2854
          %v2856 = vmul.f32 %v2855, %v2130
          %v2857 = vmul.f32 %v2855, %v2131
          %v2858 = vmul.f32 %v2855, %v2132
          %v2859 = vmul.f32 %v2855, %v2133
          %v2860 = vmul.f32 %v2855, %v2134
          %v2861 = vmul.f32 %v2855, %v2135
          %v2868 = vrot.slane %v2856, 6
          %v2869 = vrot.slane %v2858, 6
          %v2870 = vsel %vm485, %v2868, %v2869
          %v2871 = vrot.slane %v2857, 6
          %v2872 = vrot.slane %v2859, 6
          %v2873 = vsel %vm485, %v2871, %v2872
          %v2874 = vrot.slane %v2860, 6
          %v2875 = vsel %vm485, %v2869, %v2874
          %v2876 = vrot.slane %v2861, 6
          %v2877 = vsel %vm485, %v2872, %v2876
          %2878 = vrot.lane.b32.xlu0 %v2870, 125
          %v2879 = vpop.permute.xlu0 %2878
          %2880 = vrot.lane.b32.xlu0 %v2873, 125
          %v2881 = vpop.permute.xlu0 %2880
          %2882 = vrot.lane.b32.xlu0 %v2875, 125
          %v2883 = vpop.permute.xlu0 %2882
          %2884 = vrot.lane.b32.xlu0 %v2877, 125
          %v2885 = vpop.permute.xlu0 %2884
          %v2886 = vsel %vm1025, %v2879, %v2881
          %v2887 = vsel %vm1025, %v2883, %v2885
          %v2890 = vadd.f32 %v2852, %v2886
          %v2891 = vadd.f32 %v2853, %v2887
          %s2892 = sld [smem:[#allocation5 + $0x35]]
          %v2893 = vstv %s2892
          %v2894 = vmul.f32 %v2893, %v2130
          %v2895 = vmul.f32 %v2893, %v2131
          %v2896 = vmul.f32 %v2893, %v2132
          %v2897 = vmul.f32 %v2893, %v2133
          %2902 = vrot.lane.b32.xlu0 %v2894, 124
          %v2903 = vpop.permute.xlu0 %2902
          %2904 = vrot.lane.b32.xlu0 %v2895, 124
          %v2905 = vpop.permute.xlu0 %2904
          %2906 = vrot.lane.b32.xlu0 %v2896, 124
          %v2907 = vpop.permute.xlu0 %2906
          %2908 = vrot.lane.b32.xlu0 %v2897, 124
          %v2909 = vpop.permute.xlu0 %2908
          %v2910 = vsel %vm1278, %v2903, %v2905
          %v2911 = vsel %vm1278, %v2907, %v2909
          %v2914 = vadd.f32 %v2890, %v2910
          %v2915 = vadd.f32 %v2891, %v2911
          %s2916 = sld [smem:[#allocation5 + $0x3c]]
          %v2917 = vstv %s2916
          %v2918 = vmul.f32 %v2917, %v2130
          %v2919 = vmul.f32 %v2917, %v2131
          %v2920 = vmul.f32 %v2917, %v2132
          %v2921 = vmul.f32 %v2917, %v2133
          %v2922 = vmul.f32 %v2917, %v2134
          %v2923 = vmul.f32 %v2917, %v2135
          %v2930 = vrot.slane %v2918, 1
          %v2931 = vrot.slane %v2920, 1
          %v2932 = vsel %vm396, %v2930, %v2931
          %v2933 = vrot.slane %v2919, 1
          %v2934 = vrot.slane %v2921, 1
          %v2935 = vsel %vm396, %v2933, %v2934
          %v2936 = vrot.slane %v2922, 1
          %v2937 = vsel %vm396, %v2931, %v2936
          %v2938 = vrot.slane %v2923, 1
          %v2939 = vsel %vm396, %v2934, %v2938
          %2940 = vrot.lane.b32.xlu0 %v2932, 124
          %v2941 = vpop.permute.xlu0 %2940
          %2942 = vrot.lane.b32.xlu0 %v2935, 124
          %v2943 = vpop.permute.xlu0 %2942
          %2944 = vrot.lane.b32.xlu0 %v2937, 124
          %v2945 = vpop.permute.xlu0 %2944
          %2946 = vrot.lane.b32.xlu0 %v2939, 124
          %v2947 = vpop.permute.xlu0 %2946
          %v2948 = vsel %vm1278, %v2941, %v2943
          %v2949 = vsel %vm1278, %v2945, %v2947
          %v2952 = vadd.f32 %v2914, %v2948
          %v2953 = vadd.f32 %v2915, %v2949
          %s2954 = sld [smem:[#allocation5 + $0x43]]
          %v2955 = vstv %s2954
          %v2956 = vmul.f32 %v2955, %v2130
          %v2957 = vmul.f32 %v2955, %v2131
          %v2958 = vmul.f32 %v2955, %v2132
          %v2959 = vmul.f32 %v2955, %v2133
          %v2960 = vmul.f32 %v2955, %v2134
          %v2961 = vmul.f32 %v2955, %v2135
          %v2968 = vrot.slane %v2956, 2
          %v2969 = vrot.slane %v2958, 2
          %v2970 = vsel %vm414, %v2968, %v2969
          %v2971 = vrot.slane %v2957, 2
          %v2972 = vrot.slane %v2959, 2
          %v2973 = vsel %vm414, %v2971, %v2972
          %v2974 = vrot.slane %v2960, 2
          %v2975 = vsel %vm414, %v2969, %v2974
          %v2976 = vrot.slane %v2961, 2
          %v2977 = vsel %vm414, %v2972, %v2976
          %2978 = vrot.lane.b32.xlu0 %v2970, 124
          %v2979 = vpop.permute.xlu0 %2978
          %2980 = vrot.lane.b32.xlu0 %v2973, 124
          %v2981 = vpop.permute.xlu0 %2980
          %2982 = vrot.lane.b32.xlu0 %v2975, 124
          %v2983 = vpop.permute.xlu0 %2982
          %2984 = vrot.lane.b32.xlu0 %v2977, 124
          %v2985 = vpop.permute.xlu0 %2984
          %v2986 = vsel %vm1278, %v2979, %v2981
          %v2987 = vsel %vm1278, %v2983, %v2985
          %v2990 = vadd.f32 %v2952, %v2986
          %v2991 = vadd.f32 %v2953, %v2987
          %s2992 = sld [smem:[#allocation5 + $0x4a]]
          %v2993 = vstv %s2992
          %v2994 = vmul.f32 %v2993, %v2130
          %v2995 = vmul.f32 %v2993, %v2131
          %v2996 = vmul.f32 %v2993, %v2132
          %v2997 = vmul.f32 %v2993, %v2133
          %v2998 = vmul.f32 %v2993, %v2134
          %v2999 = vmul.f32 %v2993, %v2135
          %v3006 = vrot.slane %v2994, 3
          %v3007 = vrot.slane %v2996, 3
          %v3008 = vsel %vm432, %v3006, %v3007
          %v3009 = vrot.slane %v2995, 3
          %v3010 = vrot.slane %v2997, 3
          %v3011 = vsel %vm432, %v3009, %v3010
          %v3012 = vrot.slane %v2998, 3
          %v3013 = vsel %vm432, %v3007, %v3012
          %v3014 = vrot.slane %v2999, 3
          %v3015 = vsel %vm432, %v3010, %v3014
          %3016 = vrot.lane.b32.xlu0 %v3008, 124
          %v3017 = vpop.permute.xlu0 %3016
          %3018 = vrot.lane.b32.xlu0 %v3011, 124
          %v3019 = vpop.permute.xlu0 %3018
          %3020 = vrot.lane.b32.xlu0 %v3013, 124
          %v3021 = vpop.permute.xlu0 %3020
          %3022 = vrot.lane.b32.xlu0 %v3015, 124
          %v3023 = vpop.permute.xlu0 %3022
          %v3024 = vsel %vm1278, %v3017, %v3019
          %v3025 = vsel %vm1278, %v3021, %v3023
          %v3028 = vadd.f32 %v2990, %v3024
          %v3029 = vadd.f32 %v2991, %v3025
          %s3030 = sld [smem:[#allocation5 + $0x51]]
          %v3031 = vstv %s3030
          %v3032 = vmul.f32 %v3031, %v2130
          %v3033 = vmul.f32 %v3031, %v2131
          %v3034 = vmul.f32 %v3031, %v2132
          %v3035 = vmul.f32 %v3031, %v2133
          %v3036 = vmul.f32 %v3031, %v2134
          %v3037 = vmul.f32 %v3031, %v2135
          %v3044 = vrot.slane %v3032, 4
          %v3045 = vrot.slane %v3034, 4
          %v3046 = vsel %vm450, %v3044, %v3045
          %v3047 = vrot.slane %v3033, 4
          %v3048 = vrot.slane %v3035, 4
          %v3049 = vsel %vm450, %v3047, %v3048
          %v3050 = vrot.slane %v3036, 4
          %v3051 = vsel %vm450, %v3045, %v3050
          %v3052 = vrot.slane %v3037, 4
          %v3053 = vsel %vm450, %v3048, %v3052
          %3054 = vrot.lane.b32.xlu0 %v3046, 124
          %v3055 = vpop.permute.xlu0 %3054
          %3056 = vrot.lane.b32.xlu0 %v3049, 124
          %v3057 = vpop.permute.xlu0 %3056
          %3058 = vrot.lane.b32.xlu0 %v3051, 124
          %v3059 = vpop.permute.xlu0 %3058
          %3060 = vrot.lane.b32.xlu0 %v3053, 124
          %v3061 = vpop.permute.xlu0 %3060
          %v3062 = vsel %vm1278, %v3055, %v3057
          %v3063 = vsel %vm1278, %v3059, %v3061
          %v3066 = vadd.f32 %v3028, %v3062
          %v3067 = vadd.f32 %v3029, %v3063
          %s3068 = sld [smem:[#allocation5 + $0x58]]
          %v3069 = vstv %s3068
          %v3070 = vmul.f32 %v3069, %v2130
          %v3071 = vmul.f32 %v3069, %v2131
          %v3072 = vmul.f32 %v3069, %v2132
          %v3073 = vmul.f32 %v3069, %v2133
          %v3074 = vmul.f32 %v3069, %v2134
          %v3075 = vmul.f32 %v3069, %v2135
          %v3082 = vrot.slane %v3070, 5
          %v3083 = vrot.slane %v3072, 5
          %v3084 = vsel %vm329, %v3082, %v3083
          %v3085 = vrot.slane %v3071, 5
          %v3086 = vrot.slane %v3073, 5
          %v3087 = vsel %vm329, %v3085, %v3086
          %v3088 = vrot.slane %v3074, 5
          %v3089 = vsel %vm329, %v3083, %v3088
          %v3090 = vrot.slane %v3075, 5
          %v3091 = vsel %vm329, %v3086, %v3090
          %3092 = vrot.lane.b32.xlu0 %v3084, 124
          %v3093 = vpop.permute.xlu0 %3092
          %3094 = vrot.lane.b32.xlu0 %v3087, 124
          %v3095 = vpop.permute.xlu0 %3094
          %3096 = vrot.lane.b32.xlu0 %v3089, 124
          %v3097 = vpop.permute.xlu0 %3096
          %3098 = vrot.lane.b32.xlu0 %v3091, 124
          %v3099 = vpop.permute.xlu0 %3098
          %v3100 = vsel %vm1278, %v3093, %v3095
          %v3101 = vsel %vm1278, %v3097, %v3099
          %v3104 = vadd.f32 %v3066, %v3100
          %v3105 = vadd.f32 %v3067, %v3101
          %s3106 = sld [smem:[#allocation5 + $0x5f]]
          %v3107 = vstv %s3106
          %v3108 = vmul.f32 %v3107, %v2130
          %v3109 = vmul.f32 %v3107, %v2131
          %v3110 = vmul.f32 %v3107, %v2132
          %v3111 = vmul.f32 %v3107, %v2133
          %v3112 = vmul.f32 %v3107, %v2134
          %v3113 = vmul.f32 %v3107, %v2135
          %v3120 = vrot.slane %v3108, 6
          %v3121 = vrot.slane %v3110, 6
          %v3122 = vsel %vm485, %v3120, %v3121
          %v3123 = vrot.slane %v3109, 6
          %v3124 = vrot.slane %v3111, 6
          %v3125 = vsel %vm485, %v3123, %v3124
          %v3126 = vrot.slane %v3112, 6
          %v3127 = vsel %vm485, %v3121, %v3126
          %v3128 = vrot.slane %v3113, 6
          %v3129 = vsel %vm485, %v3124, %v3128
          %3130 = vrot.lane.b32.xlu0 %v3122, 124
          %v3131 = vpop.permute.xlu0 %3130
          %3132 = vrot.lane.b32.xlu0 %v3125, 124
          %v3133 = vpop.permute.xlu0 %3132
          %3134 = vrot.lane.b32.xlu0 %v3127, 124
          %v3135 = vpop.permute.xlu0 %3134
          %3136 = vrot.lane.b32.xlu0 %v3129, 124
          %v3137 = vpop.permute.xlu0 %3136
          %v3138 = vsel %vm1278, %v3131, %v3133
          %v3139 = vsel %vm1278, %v3135, %v3137
          %v3142 = vadd.f32 %v3104, %v3138
          %v3143 = vadd.f32 %v3105, %v3139
          %s3144 = sld [smem:[#allocation5 + $0x36]]
          %v3145 = vstv %s3144
          %v3146 = vmul.f32 %v3145, %v2130
          %v3147 = vmul.f32 %v3145, %v2131
          %v3148 = vmul.f32 %v3145, %v2132
          %v3149 = vmul.f32 %v3145, %v2133
          %3154 = vrot.lane.b32.xlu0 %v3146, 123
          %v3155 = vpop.permute.xlu0 %3154
          %3156 = vrot.lane.b32.xlu0 %v3147, 123
          %v3157 = vpop.permute.xlu0 %3156
          %3158 = vrot.lane.b32.xlu0 %v3148, 123
          %v3159 = vpop.permute.xlu0 %3158
          %3160 = vrot.lane.b32.xlu0 %v3149, 123
          %v3161 = vpop.permute.xlu0 %3160
          %v3162 = vsel %vm1531, %v3155, %v3157
          %v3163 = vsel %vm1531, %v3159, %v3161
          %v3166 = vadd.f32 %v3142, %v3162
          %v3167 = vadd.f32 %v3143, %v3163
          %s3168 = sld [smem:[#allocation5 + $0x3d]]
          %v3169 = vstv %s3168
          %v3170 = vmul.f32 %v3169, %v2130
          %v3171 = vmul.f32 %v3169, %v2131
          %v3172 = vmul.f32 %v3169, %v2132
          %v3173 = vmul.f32 %v3169, %v2133
          %v3174 = vmul.f32 %v3169, %v2134
          %v3175 = vmul.f32 %v3169, %v2135
          %v3182 = vrot.slane %v3170, 1
          %v3183 = vrot.slane %v3172, 1
          %v3184 = vsel %vm396, %v3182, %v3183
          %v3185 = vrot.slane %v3171, 1
          %v3186 = vrot.slane %v3173, 1
          %v3187 = vsel %vm396, %v3185, %v3186
          %v3188 = vrot.slane %v3174, 1
          %v3189 = vsel %vm396, %v3183, %v3188
          %v3190 = vrot.slane %v3175, 1
          %v3191 = vsel %vm396, %v3186, %v3190
          %3192 = vrot.lane.b32.xlu0 %v3184, 123
          %v3193 = vpop.permute.xlu0 %3192
          %3194 = vrot.lane.b32.xlu0 %v3187, 123
          %v3195 = vpop.permute.xlu0 %3194
          %3196 = vrot.lane.b32.xlu0 %v3189, 123
          %v3197 = vpop.permute.xlu0 %3196
          %3198 = vrot.lane.b32.xlu0 %v3191, 123
          %v3199 = vpop.permute.xlu0 %3198
          %v3200 = vsel %vm1531, %v3193, %v3195
          %v3201 = vsel %vm1531, %v3197, %v3199
          %v3204 = vadd.f32 %v3166, %v3200
          %v3205 = vadd.f32 %v3167, %v3201
          %s3206 = sld [smem:[#allocation5 + $0x44]]
          %v3207 = vstv %s3206
          %v3208 = vmul.f32 %v3207, %v2130
          %v3209 = vmul.f32 %v3207, %v2131
          %v3210 = vmul.f32 %v3207, %v2132
          %v3211 = vmul.f32 %v3207, %v2133
          %v3212 = vmul.f32 %v3207, %v2134
          %v3213 = vmul.f32 %v3207, %v2135
          %v3220 = vrot.slane %v3208, 2
          %v3221 = vrot.slane %v3210, 2
          %v3222 = vsel %vm414, %v3220, %v3221
          %v3223 = vrot.slane %v3209, 2
          %v3224 = vrot.slane %v3211, 2
          %v3225 = vsel %vm414, %v3223, %v3224
          %v3226 = vrot.slane %v3212, 2
          %v3227 = vsel %vm414, %v3221, %v3226
          %v3228 = vrot.slane %v3213, 2
          %v3229 = vsel %vm414, %v3224, %v3228
          %3230 = vrot.lane.b32.xlu0 %v3222, 123
          %v3231 = vpop.permute.xlu0 %3230
          %3232 = vrot.lane.b32.xlu0 %v3225, 123
          %v3233 = vpop.permute.xlu0 %3232
          %3234 = vrot.lane.b32.xlu0 %v3227, 123
          %v3235 = vpop.permute.xlu0 %3234
          %3236 = vrot.lane.b32.xlu0 %v3229, 123
          %v3237 = vpop.permute.xlu0 %3236
          %v3238 = vsel %vm1531, %v3231, %v3233
          %v3239 = vsel %vm1531, %v3235, %v3237
          %v3242 = vadd.f32 %v3204, %v3238
          %v3243 = vadd.f32 %v3205, %v3239
          %s3244 = sld [smem:[#allocation5 + $0x4b]]
          %v3245 = vstv %s3244
          %v3246 = vmul.f32 %v3245, %v2130
          %v3247 = vmul.f32 %v3245, %v2131
          %v3248 = vmul.f32 %v3245, %v2132
          %v3249 = vmul.f32 %v3245, %v2133
          %v3250 = vmul.f32 %v3245, %v2134
          %v3251 = vmul.f32 %v3245, %v2135
          %v3258 = vrot.slane %v3246, 3
          %v3259 = vrot.slane %v3248, 3
          %v3260 = vsel %vm432, %v3258, %v3259
          %v3261 = vrot.slane %v3247, 3
          %v3262 = vrot.slane %v3249, 3
          %v3263 = vsel %vm432, %v3261, %v3262
          %v3264 = vrot.slane %v3250, 3
          %v3265 = vsel %vm432, %v3259, %v3264
          %v3266 = vrot.slane %v3251, 3
          %v3267 = vsel %vm432, %v3262, %v3266
          %3268 = vrot.lane.b32.xlu0 %v3260, 123
          %v3269 = vpop.permute.xlu0 %3268
          %3270 = vrot.lane.b32.xlu0 %v3263, 123
          %v3271 = vpop.permute.xlu0 %3270
          %3272 = vrot.lane.b32.xlu0 %v3265, 123
          %v3273 = vpop.permute.xlu0 %3272
          %3274 = vrot.lane.b32.xlu0 %v3267, 123
          %v3275 = vpop.permute.xlu0 %3274
          %v3276 = vsel %vm1531, %v3269, %v3271
          %v3277 = vsel %vm1531, %v3273, %v3275
          %v3280 = vadd.f32 %v3242, %v3276
          %v3281 = vadd.f32 %v3243, %v3277
          %s3282 = sld [smem:[#allocation5 + $0x52]]
          %v3283 = vstv %s3282
          %v3284 = vmul.f32 %v3283, %v2130
          %v3285 = vmul.f32 %v3283, %v2131
          %v3286 = vmul.f32 %v3283, %v2132
          %v3287 = vmul.f32 %v3283, %v2133
          %v3288 = vmul.f32 %v3283, %v2134
          %v3289 = vmul.f32 %v3283, %v2135
          %v3296 = vrot.slane %v3284, 4
          %v3297 = vrot.slane %v3286, 4
          %v3298 = vsel %vm450, %v3296, %v3297
          %v3299 = vrot.slane %v3285, 4
          %v3300 = vrot.slane %v3287, 4
          %v3301 = vsel %vm450, %v3299, %v3300
          %v3302 = vrot.slane %v3288, 4
          %v3303 = vsel %vm450, %v3297, %v3302
          %v3304 = vrot.slane %v3289, 4
          %v3305 = vsel %vm450, %v3300, %v3304
          %3306 = vrot.lane.b32.xlu0 %v3298, 123
          %v3307 = vpop.permute.xlu0 %3306
          %3308 = vrot.lane.b32.xlu0 %v3301, 123
          %v3309 = vpop.permute.xlu0 %3308
          %3310 = vrot.lane.b32.xlu0 %v3303, 123
          %v3311 = vpop.permute.xlu0 %3310
          %3312 = vrot.lane.b32.xlu0 %v3305, 123
          %v3313 = vpop.permute.xlu0 %3312
          %v3314 = vsel %vm1531, %v3307, %v3309
          %v3315 = vsel %vm1531, %v3311, %v3313
          %v3318 = vadd.f32 %v3280, %v3314
          %v3319 = vadd.f32 %v3281, %v3315
          %s3320 = sld [smem:[#allocation5 + $0x59]]
          %v3321 = vstv %s3320
          %v3322 = vmul.f32 %v3321, %v2130
          %v3323 = vmul.f32 %v3321, %v2131
          %v3324 = vmul.f32 %v3321, %v2132
          %v3325 = vmul.f32 %v3321, %v2133
          %v3326 = vmul.f32 %v3321, %v2134
          %v3327 = vmul.f32 %v3321, %v2135
          %v3334 = vrot.slane %v3322, 5
          %v3335 = vrot.slane %v3324, 5
          %v3336 = vsel %vm329, %v3334, %v3335
          %v3337 = vrot.slane %v3323, 5
          %v3338 = vrot.slane %v3325, 5
          %v3339 = vsel %vm329, %v3337, %v3338
          %v3340 = vrot.slane %v3326, 5
          %v3341 = vsel %vm329, %v3335, %v3340
          %v3342 = vrot.slane %v3327, 5
          %v3343 = vsel %vm329, %v3338, %v3342
          %3344 = vrot.lane.b32.xlu0 %v3336, 123
          %v3345 = vpop.permute.xlu0 %3344
          %3346 = vrot.lane.b32.xlu0 %v3339, 123
          %v3347 = vpop.permute.xlu0 %3346
          %3348 = vrot.lane.b32.xlu0 %v3341, 123
          %v3349 = vpop.permute.xlu0 %3348
          %3350 = vrot.lane.b32.xlu0 %v3343, 123
          %v3351 = vpop.permute.xlu0 %3350
          %v3352 = vsel %vm1531, %v3345, %v3347
          %v3353 = vsel %vm1531, %v3349, %v3351
          %v3356 = vadd.f32 %v3318, %v3352
          %v3357 = vadd.f32 %v3319, %v3353
          %s3358 = sld [smem:[#allocation5 + $0x60]]
          %v3359 = vstv %s3358
          %v3360 = vmul.f32 %v3359, %v2130
          %v3361 = vmul.f32 %v3359, %v2131
          %v3362 = vmul.f32 %v3359, %v2132
          %v3363 = vmul.f32 %v3359, %v2133
          %v3364 = vmul.f32 %v3359, %v2134
          %v3365 = vmul.f32 %v3359, %v2135
          %v3372 = vrot.slane %v3360, 6
          %v3373 = vrot.slane %v3362, 6
          %v3374 = vsel %vm485, %v3372, %v3373
          %v3375 = vrot.slane %v3361, 6
          %v3376 = vrot.slane %v3363, 6
          %v3377 = vsel %vm485, %v3375, %v3376
          %v3378 = vrot.slane %v3364, 6
          %v3379 = vsel %vm485, %v3373, %v3378
          %v3380 = vrot.slane %v3365, 6
          %v3381 = vsel %vm485, %v3376, %v3380
          %3382 = vrot.lane.b32.xlu0 %v3374, 123
          %v3383 = vpop.permute.xlu0 %3382
          %3384 = vrot.lane.b32.xlu0 %v3377, 123
          %v3385 = vpop.permute.xlu0 %3384
          %3386 = vrot.lane.b32.xlu0 %v3379, 123
          %v3387 = vpop.permute.xlu0 %3386
          %3388 = vrot.lane.b32.xlu0 %v3381, 123
          %v3389 = vpop.permute.xlu0 %3388
          %v3390 = vsel %vm1531, %v3383, %v3385
          %v3391 = vsel %vm1531, %v3387, %v3389
          %v3394 = vadd.f32 %v3356, %v3390
          %v3395 = vadd.f32 %v3357, %v3391
          %s3396 = sld [smem:[#allocation5 + $0x37]]
          %v3397 = vstv %s3396
          %v3398 = vmul.f32 %v3397, %v2130
          %v3399 = vmul.f32 %v3397, %v2131
          %v3400 = vmul.f32 %v3397, %v2132
          %v3401 = vmul.f32 %v3397, %v2133
          %3406 = vrot.lane.b32.xlu0 %v3398, 122
          %v3407 = vpop.permute.xlu0 %3406
          %3408 = vrot.lane.b32.xlu0 %v3399, 122
          %v3409 = vpop.permute.xlu0 %3408
          %3410 = vrot.lane.b32.xlu0 %v3400, 122
          %v3411 = vpop.permute.xlu0 %3410
          %3412 = vrot.lane.b32.xlu0 %v3401, 122
          %v3413 = vpop.permute.xlu0 %3412
          %v3414 = vsel %vm1784, %v3407, %v3409
          %v3415 = vsel %vm1784, %v3411, %v3413
          %v3418 = vadd.f32 %v3394, %v3414
          %v3419 = vadd.f32 %v3395, %v3415
          %s3420 = sld [smem:[#allocation5 + $0x3e]]
          %v3421 = vstv %s3420
          %v3422 = vmul.f32 %v3421, %v2130
          %v3423 = vmul.f32 %v3421, %v2131
          %v3424 = vmul.f32 %v3421, %v2132
          %v3425 = vmul.f32 %v3421, %v2133
          %v3426 = vmul.f32 %v3421, %v2134
          %v3427 = vmul.f32 %v3421, %v2135
          %v3434 = vrot.slane %v3422, 1
          %v3435 = vrot.slane %v3424, 1
          %v3436 = vsel %vm396, %v3434, %v3435
          %v3437 = vrot.slane %v3423, 1
          %v3438 = vrot.slane %v3425, 1
          %v3439 = vsel %vm396, %v3437, %v3438
          %v3440 = vrot.slane %v3426, 1
          %v3441 = vsel %vm396, %v3435, %v3440
          %v3442 = vrot.slane %v3427, 1
          %v3443 = vsel %vm396, %v3438, %v3442
          %3444 = vrot.lane.b32.xlu0 %v3436, 122
          %v3445 = vpop.permute.xlu0 %3444
          %3446 = vrot.lane.b32.xlu0 %v3439, 122
          %v3447 = vpop.permute.xlu0 %3446
          %3448 = vrot.lane.b32.xlu0 %v3441, 122
          %v3449 = vpop.permute.xlu0 %3448
          %3450 = vrot.lane.b32.xlu0 %v3443, 122
          %v3451 = vpop.permute.xlu0 %3450
          %v3452 = vsel %vm1784, %v3445, %v3447
          %v3453 = vsel %vm1784, %v3449, %v3451
          %v3456 = vadd.f32 %v3418, %v3452
          %v3457 = vadd.f32 %v3419, %v3453
          %s3458 = sld [smem:[#allocation5 + $0x45]]
          %v3459 = vstv %s3458
          %v3460 = vmul.f32 %v3459, %v2130
          %v3461 = vmul.f32 %v3459, %v2131
          %v3462 = vmul.f32 %v3459, %v2132
          %v3463 = vmul.f32 %v3459, %v2133
          %v3464 = vmul.f32 %v3459, %v2134
          %v3465 = vmul.f32 %v3459, %v2135
          %v3472 = vrot.slane %v3460, 2
          %v3473 = vrot.slane %v3462, 2
          %v3474 = vsel %vm414, %v3472, %v3473
          %v3475 = vrot.slane %v3461, 2
          %v3476 = vrot.slane %v3463, 2
          %v3477 = vsel %vm414, %v3475, %v3476
          %v3478 = vrot.slane %v3464, 2
          %v3479 = vsel %vm414, %v3473, %v3478
          %v3480 = vrot.slane %v3465, 2
          %v3481 = vsel %vm414, %v3476, %v3480
          %3482 = vrot.lane.b32.xlu0 %v3474, 122
          %v3483 = vpop.permute.xlu0 %3482
          %3484 = vrot.lane.b32.xlu0 %v3477, 122
          %v3485 = vpop.permute.xlu0 %3484
          %3486 = vrot.lane.b32.xlu0 %v3479, 122
          %v3487 = vpop.permute.xlu0 %3486
          %3488 = vrot.lane.b32.xlu0 %v3481, 122
          %v3489 = vpop.permute.xlu0 %3488
          %v3490 = vsel %vm1784, %v3483, %v3485
          %v3491 = vsel %vm1784, %v3487, %v3489
          %v3494 = vadd.f32 %v3456, %v3490
          %v3495 = vadd.f32 %v3457, %v3491
          %s3496 = sld [smem:[#allocation5 + $0x4c]]
          %v3497 = vstv %s3496
          %v3498 = vmul.f32 %v3497, %v2130
          %v3499 = vmul.f32 %v3497, %v2131
          %v3500 = vmul.f32 %v3497, %v2132
          %v3501 = vmul.f32 %v3497, %v2133
          %v3502 = vmul.f32 %v3497, %v2134
          %v3503 = vmul.f32 %v3497, %v2135
          %v3510 = vrot.slane %v3498, 3
          %v3511 = vrot.slane %v3500, 3
          %v3512 = vsel %vm432, %v3510, %v3511
          %v3513 = vrot.slane %v3499, 3
          %v3514 = vrot.slane %v3501, 3
          %v3515 = vsel %vm432, %v3513, %v3514
          %v3516 = vrot.slane %v3502, 3
          %v3517 = vsel %vm432, %v3511, %v3516
          %v3518 = vrot.slane %v3503, 3
          %v3519 = vsel %vm432, %v3514, %v3518
          %3520 = vrot.lane.b32.xlu0 %v3512, 122
          %v3521 = vpop.permute.xlu0 %3520
          %3522 = vrot.lane.b32.xlu0 %v3515, 122
          %v3523 = vpop.permute.xlu0 %3522
          %3524 = vrot.lane.b32.xlu0 %v3517, 122
          %v3525 = vpop.permute.xlu0 %3524
          %3526 = vrot.lane.b32.xlu0 %v3519, 122
          %v3527 = vpop.permute.xlu0 %3526
          %v3528 = vsel %vm1784, %v3521, %v3523
          %v3529 = vsel %vm1784, %v3525, %v3527
          %v3532 = vadd.f32 %v3494, %v3528
          %v3533 = vadd.f32 %v3495, %v3529
          %s3534 = sld [smem:[#allocation5 + $0x53]]
          %v3535 = vstv %s3534
          %v3536 = vmul.f32 %v3535, %v2130
          %v3537 = vmul.f32 %v3535, %v2131
          %v3538 = vmul.f32 %v3535, %v2132
          %v3539 = vmul.f32 %v3535, %v2133
          %v3540 = vmul.f32 %v3535, %v2134
          %v3541 = vmul.f32 %v3535, %v2135
          %v3548 = vrot.slane %v3536, 4
          %v3549 = vrot.slane %v3538, 4
          %v3550 = vsel %vm450, %v3548, %v3549
          %v3551 = vrot.slane %v3537, 4
          %v3552 = vrot.slane %v3539, 4
          %v3553 = vsel %vm450, %v3551, %v3552
          %v3554 = vrot.slane %v3540, 4
          %v3555 = vsel %vm450, %v3549, %v3554
          %v3556 = vrot.slane %v3541, 4
          %v3557 = vsel %vm450, %v3552, %v3556
          %3558 = vrot.lane.b32.xlu0 %v3550, 122
          %v3559 = vpop.permute.xlu0 %3558
          %3560 = vrot.lane.b32.xlu0 %v3553, 122
          %v3561 = vpop.permute.xlu0 %3560
          %3562 = vrot.lane.b32.xlu0 %v3555, 122
          %v3563 = vpop.permute.xlu0 %3562
          %3564 = vrot.lane.b32.xlu0 %v3557, 122
          %v3565 = vpop.permute.xlu0 %3564
          %v3566 = vsel %vm1784, %v3559, %v3561
          %v3567 = vsel %vm1784, %v3563, %v3565
          %v3570 = vadd.f32 %v3532, %v3566
          %v3571 = vadd.f32 %v3533, %v3567
          %s3572 = sld [smem:[#allocation5 + $0x5a]]
          %v3573 = vstv %s3572
          %v3574 = vmul.f32 %v3573, %v2130
          %v3575 = vmul.f32 %v3573, %v2131
          %v3576 = vmul.f32 %v3573, %v2132
          %v3577 = vmul.f32 %v3573, %v2133
          %v3578 = vmul.f32 %v3573, %v2134
          %v3579 = vmul.f32 %v3573, %v2135
          %v3586 = vrot.slane %v3574, 5
          %v3587 = vrot.slane %v3576, 5
          %v3588 = vsel %vm329, %v3586, %v3587
          %v3589 = vrot.slane %v3575, 5
          %v3590 = vrot.slane %v3577, 5
          %v3591 = vsel %vm329, %v3589, %v3590
          %v3592 = vrot.slane %v3578, 5
          %v3593 = vsel %vm329, %v3587, %v3592
          %v3594 = vrot.slane %v3579, 5
          %v3595 = vsel %vm329, %v3590, %v3594
          %3596 = vrot.lane.b32.xlu0 %v3588, 122
          %v3597 = vpop.permute.xlu0 %3596
          %3598 = vrot.lane.b32.xlu0 %v3591, 122
          %v3599 = vpop.permute.xlu0 %3598
          %3600 = vrot.lane.b32.xlu0 %v3593, 122
          %v3601 = vpop.permute.xlu0 %3600
          %3602 = vrot.lane.b32.xlu0 %v3595, 122
          %v3603 = vpop.permute.xlu0 %3602
          %v3604 = vsel %vm1784, %v3597, %v3599
          %v3605 = vsel %vm1784, %v3601, %v3603
          %v3608 = vadd.f32 %v3570, %v3604
          %v3609 = vadd.f32 %v3571, %v3605
          %s3610 = sld [smem:[#allocation5 + $0x61]]
          %v3611 = vstv %s3610
          %v3612 = vmul.f32 %v3611, %v2130
          %v3613 = vmul.f32 %v3611, %v2131
          %v3614 = vmul.f32 %v3611, %v2132
          %v3615 = vmul.f32 %v3611, %v2133
          %v3616 = vmul.f32 %v3611, %v2134
          %v3617 = vmul.f32 %v3611, %v2135
          %v3624 = vrot.slane %v3612, 6
          %v3625 = vrot.slane %v3614, 6
          %v3626 = vsel %vm485, %v3624, %v3625
          %v3627 = vrot.slane %v3613, 6
          %v3628 = vrot.slane %v3615, 6
          %v3629 = vsel %vm485, %v3627, %v3628
          %v3630 = vrot.slane %v3616, 6
          %v3631 = vsel %vm485, %v3625, %v3630
          %v3632 = vrot.slane %v3617, 6
          %v3633 = vsel %vm485, %v3628, %v3632
          %3634 = vrot.lane.b32.xlu0 %v3626, 122
          %v3635 = vpop.permute.xlu0 %3634
          %3636 = vrot.lane.b32.xlu0 %v3629, 122
          %v3637 = vpop.permute.xlu0 %3636
          %3638 = vrot.lane.b32.xlu0 %v3631, 122
          %v3639 = vpop.permute.xlu0 %3638
          %3640 = vrot.lane.b32.xlu0 %v3633, 122
          %v3641 = vpop.permute.xlu0 %3640
          %v3642 = vsel %vm1784, %v3635, %v3637
          %v3643 = vsel %vm1784, %v3639, %v3641
          %v3646 = vadd.f32 %v3608, %v3642
          %v3647 = vadd.f32 %v3609, %v3643
          %v3648 = vxor.u32 %v3646, 2147483648
          %v3649 = vxor.u32 %v3647, 2147483648
          %v3650 = vmul.f32 %v3648, 1.442695
          %v3651 = vpow.pop %v3650
          %v3652 = vmul.f32 %v3649, 1.442695
          %v3653 = vpow.pop %v3652
          %v3654 = vadd.f32 %v3651, 1.0
          %v3655 = vadd.f32 %v3653, 1.0
          %v3656 = vrcp.pop %v3654
          %v3657 = vmul.f32 %v3654, %v3656
          %v3658 = vsub.f32 1.0, %v3657
          %v3659 = vmul.f32 %v3656, %v3658
          %v3660 = vadd.f32 %v3656, %v3659
          %vm3661 = vweird.f32 %v3654
          %vm3662 = vweird.f32 %v3656
          %vm3663 = vmor %vm3661, %vm3662
          %v3664 = vsel %vm3663, %v3656, %v3660
          %v3665 = vand.u32 2147483647, %v3654
          %vm3666 = vcmp.eq.f32.partialorder %v3665, 8.507059e+37
          %v3667 = vand.u32 %v3654, 2147483648
          %v3668 = vor.u32 1.1754944e-38, %v3667
          %v3669 = vsel %vm3666, %v3668, %v3664
          %v3670 = vmul.f32 1.0, %v3669
          %v3671 = vrcp.pop %v3655
          %v3672 = vmul.f32 %v3655, %v3671
          %v3673 = vsub.f32 1.0, %v3672
          %v3674 = vmul.f32 %v3671, %v3673
          %v3675 = vadd.f32 %v3671, %v3674
          %vm3676 = vweird.f32 %v3655
          %vm3677 = vweird.f32 %v3671
          %vm3678 = vmor %vm3676, %vm3677
          %v3679 = vsel %vm3678, %v3671, %v3675
          %v3680 = vand.u32 2147483647, %v3655
          %vm3681 = vcmp.eq.f32.partialorder %v3680, 8.507059e+37
          %v3682 = vand.u32 %v3655, 2147483648
          %v3683 = vor.u32 1.1754944e-38, %v3682
          %v3684 = vsel %vm3681, %v3683, %v3679
          %v3685 = vmul.f32 1.0, %v3684
          %3686 = vst [vmem:[%s194] sm:$0xff] %v3670
          %3687 = vst [vmem:[%s194 + $0x8] sm:$0xff] %v3685
        $region44: #{spatial_attention.1} parent=27 // pred_fallthru
          _
        %s3688 = sand.u32 %s89, 1
        %s3689 = scalar_lea.sflag [#allocation7], %s3688
        %s3690 = sand.u32 %s89, 1
        %s3691 = smul.addr %s3690, 16
        %s3692 = scalar_lea.vmem [#allocation10], %s3691
        // Predicated region
        $region45: #{spatial_attention.1} parent=27 // pred_check
          %p3693 = pneg %p99
        $region46: #{spatial_attention.1} parent=27 // pred_check_branch
          %3695 = sbr.rel (%p3693) target = $region48
        $region47: #{spatial_attention.1} parent=27 // pred_region
          %3697 = vsyncadd %s3689, 0
          %s3698 = smul.addr %s24, 2
          %s3699 = smul.addr %s3698, 8
          %s3700 = scalar_lea.hbm %s2, %s3699
          %s3701 = sshll.u32 %s3692, 4
          %s3702 = int_to_ptr.vmem [resolvable:$true] %s3701
          %s3703 = sshll.u32 %s3700, 4
          %s3704 = int_to_ptr.hbm [resolvable:$true] %s3703
          %3709 = dma.vmem_to_hbm [thread:$0]  %s3702, 256, %s3704, %s3689, 128, 128, 8
        $region48: #{spatial_attention.1} parent=27 // pred_fallthru
          _
      $region28: #{spatial_attention.1} parent=5 // pred_fallthru
        _
      %p3710 = scmp.le.s32.totalorder 2, %s15
      // Predicated region
      $region49: #{spatial_attention.1} parent=5 // pred_check
        %p3711 = pneg %p3710
      $region50: #{spatial_attention.1} parent=5 // pred_check_branch
        %3713 = sbr.rel (%p3711) target = $region52
      $region51: #{spatial_attention.1} parent=5 // pred_region
        %s3714 = ssub.s32 %s15, 2
        // Predicated region
        $region53: #{spatial_attention.1} parent=51 // pred_check
          %p3715 = pneg %p105
        $region54: #{spatial_attention.1} parent=51 // pred_check_branch
          %3717 = sbr.rel (%p3715) target = $region56
        $region55: #{spatial_attention.1} parent=51 // pred_region
          %s3718 = sand.u32 %s90, 1
          %s3719 = scalar_lea.sflag [#allocation7], %s3718
          %s3720 = sand.u32 %s90, 1
          %s3721 = smul.addr %s3720, 16
          %s3722 = scalar_lea.vmem [#allocation10], %s3721
          %3724 = dma.done %s3719, 256
        $region56: #{spatial_attention.1} parent=51 // pred_fallthru
          _
      $region52: #{spatial_attention.1} parent=5 // pred_fallthru
        _
    $region6: #{spatial_attention.1} parent=1 // loop_footer
      %s19 = sadd.s32 1, %s15
    $region7: #{spatial_attention.1} parent=1 // loop_footer_branch
      %14 = sbr.rel target = $region3
    $region8: #{spatial_attention.1} parent=1 // loop_exit
      _
    %3725 = vsyncpa [#allocation6], 1
    %s3726 = scalar_lea.sflag [#allocation6], 1
    %3727 = vsyncpa %s3726, 1
    %3728 = vsyncpa [#allocation7], 1
    %s3729 = scalar_lea.sflag [#allocation7], 1
    %3730 = vsyncpa %s3729, 1
    %3731 = vsyncpa [#allocation8], 1
    %s3732 = scalar_lea.sflag [#allocation8], 1
    %3733 = vsyncpa %s3732, 1

</llo_original>
